<compile_context>
chip_gen: v6e
topology: v6e:2x2x1
jax: 0.10.0
libtpu: 0.0.40
codegen_flags: <defaults>
</compile_context>

<pallas_src>
import math

import jax
import jax.numpy as jnp
from jax.experimental import pallas as pl
from jax.experimental.pallas import tpu as pltpu


# ----------------------------------------------------------------------------
# Shared helpers (usable inside kernels and in the pure-JAX reference)
# ----------------------------------------------------------------------------
def _ln(x, gamma, beta, eps=1e-5):
    mu = jnp.mean(x, axis=-1, keepdims=True)
    var = jnp.mean((x - mu) ** 2, axis=-1, keepdims=True)
    return (x - mu) * jax.lax.rsqrt(var + eps) * gamma + beta


def _gelu_exact(x):
    # F.gelu default (erf-based, approximate='none')
    return 0.5 * x * (1.0 + jax.lax.erf(x * (1.0 / math.sqrt(2.0))))


def sinusoidal_pe(seq_len, d_model):
    pos = jnp.arange(seq_len, dtype=jnp.float32)[:, None]
    div = jnp.exp(jnp.arange(0, d_model, 2, dtype=jnp.float32)
                  * (-math.log(10000.0) / d_model))
    pe = jnp.zeros((seq_len, d_model), jnp.float32)
    pe = pe.at[:, 0::2].set(jnp.sin(pos * div))
    pe = pe.at[:, 1::2].set(jnp.cos(pos * div))
    return pe


# ----------------------------------------------------------------------------
# Fused Pallas kernel: in-proj+PE, n_layers encoder layers, out-proj+LayerNorm
# ----------------------------------------------------------------------------
def _make_fused_kernel(batch_block, seq_len, n_heads, d_out_true):
    bB, T, H = batch_block, seq_len, n_heads
    M = bB * T
    inv_dout = 1.0 / float(d_out_true)

    def kernel(mel_ref, w_in_ref, pe_ref,
               wqkv_ref, bqkv_ref, wo_ref, w1_ref, w2_ref, vec_ref,
               w_out_ref, ovec_ref,
               o_ref, x_sc):
        l = pl.program_id(1)
        n_l = pl.num_programs(1)
        bf16 = jnp.bfloat16
        f32 = jnp.float32

        E = x_sc.shape[1]
        d = E // H
        Dff = w1_ref.shape[2]

        # -- phase 0 (first layer step only): input projection + positional --
        # mel arrives in its native (bB, Din, T) layout; the transpose happens
        # per batch element in VMEM (2-D transpose), so the wrapper runs no
        # separate HBM transpose pass.
        @pl.when(l == 0)
        def _():
            w_in = w_in_ref[...]                       # (Din, E) bf16
            pe = pe_ref[...]                           # (T, E) f32, b_in folded
            for b in range(bB):                        # static; l == 0 only
                m_b = mel_ref[b].astype(bf16)          # (Din, T)
                y_b = jnp.dot(m_b.T, w_in, preferred_element_type=f32)
                x_sc[b * T:(b + 1) * T, :] = y_b + pe  # (T, E) f32

        # x_sc is fully overwritten above (all M rows) before this read.
        x = x_sc[...]                                  # (M, E) f32
        xb = x.astype(bf16)

        # -- self-attention ---------------------------------------------------
        bqkv = bqkv_ref[0]                             # (3H, d) f32 bias slab
        scale = 1.0 / math.sqrt(d)
        ctx_parts = []
        for h in range(H):
            q = (jnp.dot(xb, wqkv_ref[0, h],
                         preferred_element_type=f32) + bqkv[h:h + 1, :])
            k = (jnp.dot(xb, wqkv_ref[0, H + h],
                         preferred_element_type=f32) + bqkv[H + h:H + h + 1, :])
            v = (jnp.dot(xb, wqkv_ref[0, 2 * H + h],
                         preferred_element_type=f32) + bqkv[2 * H + h:2 * H + h + 1, :])
            q3 = (q * scale).astype(bf16).reshape(bB, T, d)
            k3 = k.astype(bf16).reshape(bB, T, d)
            v3 = v.astype(bf16).reshape(bB, T, d)
            s = jnp.einsum("bqd,bkd->bqk", q3, k3,
                           preferred_element_type=f32)           # (bB, T, T)
            s = s - jnp.max(s, axis=-1, keepdims=True)
            p = jnp.exp(s)
            # approx reciprocal (EUP slot): rows sum to 1 +/- ~1e-3 relative.
            p = p * pl.reciprocal(jnp.sum(p, axis=-1, keepdims=True),
                                  approx=True)
            ctx = jnp.einsum("bqk,bkd->bqd", p.astype(bf16), v3,
                             preferred_element_type=f32)         # (bB, T, d)
            ctx_parts.append(ctx.reshape(M, d))

        # head-major lane concat -> (M, E); single full-depth out-projection.
        ctx_all = jnp.concatenate(ctx_parts, axis=-1).astype(bf16)

        vec = vec_ref[0]                               # (7, C) f32 slab
        b1 = vec[0:1, :Dff]
        bo = vec[1:2, :E]
        g1 = vec[2:3, :E]
        be1 = vec[3:4, :E]
        b2 = vec[4:5, :E]
        g2 = vec[5:6, :E]
        be2 = vec[6:7, :E]

        attn = jnp.dot(ctx_all, wo_ref[0], preferred_element_type=f32) + bo

        # post-norm (PyTorch TransformerEncoderLayer default norm_first=False)
        h1 = _ln(x + attn, g1, be1)

        # feed-forward (bf16 matmuls, f32 accumulate, exact erf GELU)
        f = jnp.dot(h1.astype(bf16), w1_ref[0], preferred_element_type=f32) + b1
        f = _gelu_exact(f)
        f = jnp.dot(f.astype(bf16), w2_ref[0], preferred_element_type=f32) + b2

        h2 = _ln(h1 + f, g2, be2)
        x_sc[...] = h2

        # -- final phase (last layer step only): out-proj + masked LayerNorm --
        @pl.when(l == n_l - 1)
        def _():
            ovec = ovec_ref[...]                       # (4, Dp) f32 slab
            b_out, g_out, be_out, mask = (ovec[0:1], ovec[1:2],
                                          ovec[2:3], ovec[3:4])
            y = (jnp.dot(h2.astype(bf16), w_out_ref[...],
                         preferred_element_type=f32) + b_out)    # (M, Dp)
            # padded columns of y are exactly 0 (w_out/b_out zero-padded), so
            # the unmasked sum equals the true-column sum.
            mu = jnp.sum(y, axis=-1, keepdims=True) * inv_dout
            diff = (y - mu) * mask
            var = jnp.sum(diff * diff, axis=-1, keepdims=True) * inv_dout
            o = diff * jax.lax.rsqrt(var + 1e-5) * g_out + be_out
            o_ref[...] = o.reshape(bB, T, o_ref.shape[2]).astype(o_ref.dtype)

    return kernel


# ----------------------------------------------------------------------------
# pallas_call wrapper
# ----------------------------------------------------------------------------
def _pick_batch_block(batch, seq_len, target_rows=256):
    """Largest divisor of `batch` whose flattened row count bB*T is near
    target_rows (MXU wants >=128 rows on v5e, >=256 on v6e/v7x)."""
    bb = min(batch, max(1, -(-target_rows // seq_len)))
    while batch % bb:
        bb -= 1
    return bb


def conditioning_encoder_forward(mel, kp, n_heads):
    mel = mel.astype(jnp.float32)                     # (B, input_dim, T), native
    B, Din, T = mel.shape
    E = kp["w_in"].shape[1]
    Dff = kp["w1"].shape[2]
    L = kp["wqkv"].shape[0]
    Dp = kp["w_out"].shape[1]
    Dout = kp["d_out"]
    C = kp["vec"].shape[2]
    H = n_heads
    assert E % H == 0
    d = E // H

    bB = _pick_batch_block(B, T)
    M = bB * T
    pe_b = sinusoidal_pe(T, E) + kp["b_in"]           # PE with input bias folded

    def rep(shape):                                   # replicated across grid
        z = (0,) * len(shape)
        return pl.BlockSpec(shape, lambda b, l, _z=z: _z)

    def lyr(shape):                                   # stacked per layer
        z = (0,) * len(shape)
        return pl.BlockSpec((1,) + shape, lambda b, l, _z=z: (l,) + _z)

    in_specs = [
        pl.BlockSpec((bB, Din, T), lambda b, l: (b, 0, 0)),   # mel (native layout)
        rep((Din, E)), rep((T, E)),                           # w_in, pe+b_in
        lyr((3 * H, E, d)), lyr((3 * H, d)),                  # per-head qkv W, b
        lyr((E, E)),                                          # wo
        lyr((E, Dff)), lyr((Dff, E)),                         # w1, w2
        lyr((7, C)),                                          # per-layer vec slab
        rep((E, Dp)), rep((4, Dp)),                           # w_out, out vec slab
    ]

    # VMEM budget: double-buffered blocks + activation scratch + working set.
    def nb(shape, bytes_per=4):
        return math.prod(shape) * bytes_per

    block_bytes = (nb((bB, Din, T)) + nb((Din, E), 2) + nb((T, E))
                   + nb((3 * H, E, d), 2) + nb((3 * H, d))
                   + nb((E, E), 2) + nb((E, Dff), 2) + nb((Dff, E), 2)
                   + nb((7, C)) + nb((E, Dp), 2) + nb((4, Dp))
                   + nb((bB, T, Dp)))
    work_bytes = nb((M, Dff)) + 8 * nb((M, E)) + 4 * nb((bB, T, T)) + nb((M, Dp))
    vmem_need = 2 * block_bytes + nb((M, E)) + work_bytes + (8 << 20)
    vmem_limit = int(min(64 << 20, max(32 << 20, vmem_need)))  # safe v5e..v7x

    out = pl.pallas_call(
        _make_fused_kernel(bB, T, H, Dout),
        out_shape=jax.ShapeDtypeStruct((B, T, Dp), jnp.float32),
        grid=(B // bB, L),
        in_specs=in_specs,
        out_specs=pl.BlockSpec((bB, T, Dp), lambda b, l: (b, 0, 0)),
        scratch_shapes=[pltpu.VMEM((M, E), jnp.float32)],
        compiler_params=pltpu.CompilerParams(
            dimension_semantics=("parallel", "arbitrary"),
            vmem_limit_bytes=vmem_limit),
    )(mel, kp["w_in"], pe_b,
      kp["wqkv"], kp["bqkv"], kp["wo"], kp["w1"], kp["w2"], kp["vec"],
      kp["w_out"], kp["ovec"])

    return out[:, :, :Dout]                           # strip lane padding


# ----------------------------------------------------------------------------
# Parameters (deterministic synthetic init; shapes follow the nn.Module)
# ----------------------------------------------------------------------------
def init_params(seed, input_dim, embed_dim, output_dim, n_layers):
    ffn_dim = embed_dim * 4
    key = jax.random.PRNGKey(seed)

    def nxt():
        nonlocal key
        key, sub = jax.random.split(key)
        return sub

    def w(shape, scale=0.05):
        return (scale * jax.random.normal(nxt(), shape)).astype(jnp.float32)

    params = {
        "w_in": w((input_dim, embed_dim)), "b_in": w((1, embed_dim)),
        "w_out": w((embed_dim, output_dim)), "b_out": w((1, output_dim)),
        "g_out": jnp.ones((1, output_dim), jnp.float32),
        "be_out": jnp.zeros((1, output_dim), jnp.float32),
        "layers": [],
    }
    for _ in range(n_layers):
        params["layers"].append({
            "wq": w((embed_dim, embed_dim)), "wk": w((embed_dim, embed_dim)),
            "wv": w((embed_dim, embed_dim)),
            "bq": w((1, embed_dim)), "bk": w((1, embed_dim)), "bv": w((1, embed_dim)),
            "wo": w((embed_dim, embed_dim)), "bo": w((1, embed_dim)),
            "g1": jnp.ones((1, embed_dim), jnp.float32),
            "be1": jnp.zeros((1, embed_dim), jnp.float32),
            "w1": w((embed_dim, ffn_dim)), "b1": w((1, ffn_dim)),
            "w2": w((ffn_dim, embed_dim)), "b2": w((1, embed_dim)),
            "g2": jnp.ones((1, embed_dim), jnp.float32),
            "be2": jnp.zeros((1, embed_dim), jnp.float32),
        })
    return params


def pack_params(p, n_heads, lane=128):
    """Repack f32 per-layer params into the fused-kernel layout:
    layer-stacked, per-head QKV weights/biases, merged f32 vector slabs,
    bf16 matmul weights, lane-padded (zero-padded) output projection."""
    E = p["w_in"].shape[1]
    H = n_heads
    d = E // H
    Dout = p["w_out"].shape[1]
    Dff = p["layers"][0]["w1"].shape[1]
    Dp = -(-Dout // lane) * lane
    C = max(E, Dff)
    bf = jnp.bfloat16

    def head_w(wm):   # (E, E) -> (H, E, d); head h uses cols [h*d:(h+1)*d]
        return jnp.transpose(wm.reshape(E, H, d), (1, 0, 2))

    def head_b(bv):   # (1, E) -> (H, d)
        return bv.reshape(H, d)

    wqkv = jnp.stack([
        jnp.concatenate([head_w(lp["wq"]), head_w(lp["wk"]), head_w(lp["wv"])],
                        axis=0)
        for lp in p["layers"]], axis=0)                # (L, 3H, E, d)
    bqkv = jnp.stack([
        jnp.concatenate([head_b(lp["bq"]), head_b(lp["bk"]), head_b(lp["bv"])],
                        axis=0)
        for lp in p["layers"]], axis=0)                # (L, 3H, d)

    def row(v):                                        # (1, n) -> (1, C)
        return jnp.pad(v, ((0, 0), (0, C - v.shape[1])))

    vec = jnp.stack([
        jnp.concatenate([row(lp["b1"]), row(lp["bo"]), row(lp["g1"]),
                         row(lp["be1"]), row(lp["b2"]), row(lp["g2"]),
                         row(lp["be2"])], axis=0)
        for lp in p["layers"]], axis=0)                # (L, 7, C)

    def pad_out(a):
        return jnp.pad(a, ((0, 0), (0, Dp - Dout)))

    w_out_p = pad_out(p["w_out"])
    ovec = jnp.concatenate([pad_out(p["b_out"]), pad_out(p["g_out"]),
                            pad_out(p["be_out"]),
                            pad_out(jnp.ones((1, Dout), jnp.float32))],
                           axis=0)                     # (4, Dp): b,g,beta,mask

    # Invariant required by the masked final LayerNorm: padded columns must be
    # exactly zero (mean over Dp then equals mean over Dout after masking).
    if Dp > Dout:
        assert float(jnp.max(jnp.abs(w_out_p[:, Dout:]))) == 0.0
        assert float(jnp.max(jnp.abs(ovec[:, Dout:]))) == 0.0

    return {
        "w_in": p["w_in"].astype(bf), "b_in": p["b_in"],
        "wqkv": wqkv.astype(bf), "bqkv": bqkv,
        "wo": jnp.stack([lp["wo"] for lp in p["layers"]], axis=0).astype(bf),
        "w1": jnp.stack([lp["w1"] for lp in p["layers"]], axis=0).astype(bf),
        "w2": jnp.stack([lp["w2"] for lp in p["layers"]], axis=0).astype(bf),
        "vec": vec,
        "w_out": w_out_p.astype(bf), "ovec": ovec,
        "d_out": Dout,
    }


# ----------------------------------------------------------------------------
# Pure-JAX f32 reference (for correctness check only)
# ----------------------------------------------------------------------------
def reference_forward(mel, params, n_heads):
    x = jnp.transpose(mel, (0, 2, 1)).astype(jnp.float32)
    B, T, _ = x.shape
    E = params["w_in"].shape[1]
    x = x @ params["w_in"] + params["b_in"] + sinusoidal_pe(T, E)
    d = E // n_heads
    for lp in params["layers"]:
        q = (x @ lp["wq"] + lp["bq"]).reshape(B, T, n_heads, d).transpose(0, 2, 1, 3)
        k = (x @ lp["wk"] + lp["bk"]).reshape(B, T, n_heads, d).transpose(0, 2, 1, 3)
        v = (x @ lp["wv"] + lp["bv"]).reshape(B, T, n_heads, d).transpose(0, 2, 1, 3)
        s = jnp.einsum("bhtd,bhsd->bhts", q, k) / math.sqrt(d)
        p = jax.nn.softmax(s, axis=-1)
        a = jnp.einsum("bhts,bhsd->bhtd", p, v).transpose(0, 2, 1, 3).reshape(B, T, E)
        a = a @ lp["wo"] + lp["bo"]
        x = _ln(x + a, lp["g1"], lp["be1"])
        f = _gelu_exact(x @ lp["w1"] + lp["b1"]) @ lp["w2"] + lp["b2"]
        x = _ln(x + f, lp["g2"], lp["be2"])
    y = x @ params["w_out"] + params["b_out"]
    return _ln(y, params["g_out"], params["be_out"])


# ----------------------------------------------------------------------------
if __name__ == "__main__":
    B, INPUT_DIM, T = 2, 16, 8
    EMBED_DIM, OUTPUT_DIM, N_LAYERS, N_HEADS = 32, 24, 2, 4

    key = jax.random.PRNGKey(0)
    mel = jax.random.normal(key, (B, INPUT_DIM, T), dtype=jnp.float32)

    params = init_params(seed=0, input_dim=INPUT_DIM, embed_dim=EMBED_DIM,
                         output_dim=OUTPUT_DIM, n_layers=N_LAYERS)
    kparams = pack_params(params, N_HEADS)

    out = conditioning_encoder_forward(mel, kparams, N_HEADS)
    out = jax.block_until_ready(out)

    ref = jax.block_until_ready(reference_forward(mel, params, N_HEADS))
    assert out.shape == (B, T, OUTPUT_DIM), out.shape
    # Tolerance loosened vs. a pure-f32 kernel: matmul operands are bf16
    # (f32 accumulation) and the softmax uses an approximate reciprocal.
    assert jnp.allclose(out, ref, atol=3e-2, rtol=3e-2), \
        f"max abs err {jnp.max(jnp.abs(out - ref))}"

    print("KERNEL_OK")
</pallas_src>

<mosaic_0001>
module attributes {stable_mosaic.version = 11 : i64} {
  func.func @kernel(%arg0: i32, %arg1: i32, %arg2: memref<2x16x8xf32, #tpu.memory_space<vmem>>, %arg3: memref<16x32xbf16, #tpu.memory_space<vmem>>, %arg4: memref<8x32xf32, #tpu.memory_space<vmem>>, %arg5: memref<1x12x32x8xbf16, #tpu.memory_space<vmem>>, %arg6: memref<1x12x8xf32, #tpu.memory_space<vmem>>, %arg7: memref<1x32x32xbf16, #tpu.memory_space<vmem>>, %arg8: memref<1x32x128xbf16, #tpu.memory_space<vmem>>, %arg9: memref<1x128x32xbf16, #tpu.memory_space<vmem>>, %arg10: memref<1x7x128xf32, #tpu.memory_space<vmem>>, %arg11: memref<32x128xbf16, #tpu.memory_space<vmem>>, %arg12: memref<4x128xf32, #tpu.memory_space<vmem>>, %arg13: memref<2x8x128xf32, #tpu.memory_space<vmem>>, %arg14: memref<16x32xf32, #tpu.memory_space<vmem>>) attributes {dimension_semantics = [#tpu.dimension_semantics<parallel>, #tpu.dimension_semantics<arbitrary>], iteration_bounds = array<i64: 1, 2>, scalar_prefetch = 0 : i64, scratch_operands = 1 : i64, tpu.core_type = #tpu.core_type<tc>, window_params = [{transform_indices = @transform_0, window_bounds = array<i64: 2, 16, 8>}, {pipeline_mode = #tpu.pipeline_mode<synchronous>, transform_indices = @transform_1, window_bounds = array<i64: 16, 32>}, {pipeline_mode = #tpu.pipeline_mode<synchronous>, transform_indices = @transform_2, window_bounds = array<i64: 8, 32>}, {transform_indices = @transform_3, window_bounds = array<i64: 1, 12, 32, 8>}, {transform_indices = @transform_4, window_bounds = array<i64: 1, 12, 8>}, {transform_indices = @transform_5, window_bounds = array<i64: 1, 32, 32>}, {transform_indices = @transform_6, window_bounds = array<i64: 1, 32, 128>}, {transform_indices = @transform_7, window_bounds = array<i64: 1, 128, 32>}, {transform_indices = @transform_8, window_bounds = array<i64: 1, 7, 128>}, {pipeline_mode = #tpu.pipeline_mode<synchronous>, transform_indices = @transform_9, window_bounds = array<i64: 32, 128>}, {pipeline_mode = #tpu.pipeline_mode<synchronous>, transform_indices = @transform_10, window_bounds = array<i64: 4, 128>}, {transform_indices = @transform_11, window_bounds = array<i64: 2, 8, 128>}]} {
    %c0_i32 = arith.constant 0 : i32
    %0 = arith.cmpi eq, %arg1, %c0_i32 : i32
    %1 = arith.extui %0 : i1 to i32
    %c0_i32_0 = arith.constant 0 : i32
    %2 = arith.cmpi ne, %1, %c0_i32_0 : i32
    scf.if %2 {
      %c0_104 = arith.constant 0 : index
      %c0_105 = arith.constant 0 : index
      %253 = vector.load %arg3[%c0_104, %c0_105] : memref<16x32xbf16, #tpu.memory_space<vmem>>, vector<16x32xbf16>
      %c0_106 = arith.constant 0 : index
      %c0_107 = arith.constant 0 : index
      %254 = vector.load %arg4[%c0_106, %c0_107] : memref<8x32xf32, #tpu.memory_space<vmem>>, vector<8x32xf32>
      %c0_108 = arith.constant 0 : index
      %c0_109 = arith.constant 0 : index
      %c0_110 = arith.constant 0 : index
      %255 = vector.load %arg2[%c0_108, %c0_109, %c0_110] : memref<2x16x8xf32, #tpu.memory_space<vmem>>, vector<1x16x8xf32>
      %256 = vector.shape_cast %255 : vector<1x16x8xf32> to vector<16x8xf32>
      %257 = arith.truncf %256 : vector<16x8xf32> to vector<16x8xbf16>
      %258 = tpu.transpose %257, [1, 0] : vector<16x8xbf16> -> vector<8x16xbf16>
      %cst_111 = arith.constant dense<0.000000e+00> : vector<8x32xf32>
      %259 = tpu.matmul %258, %253, %cst_111 {dimension_numbers = #tpu.dot_dimension_numbers<[1], [0], [0], [1], [0, 0, 1, 1], [], []>} : vector<8x16xbf16>, vector<16x32xbf16>, vector<8x32xf32> -> vector<8x32xf32>
      %260 = arith.addf %259, %254 : vector<8x32xf32>
      %c0_112 = arith.constant 0 : index
      %c0_113 = arith.constant 0 : index
      %261 = vector.load %arg14[%c0_112, %c0_113] : memref<16x32xf32, #tpu.memory_space<vmem>>, vector<8x32xf32>
      tpu.vector_store %arg14[%c0_112, %c0_113], %260 {strides = array<i32>} : memref<16x32xf32, #tpu.memory_space<vmem>>, vector<8x32xf32>,
      %c1_114 = arith.constant 1 : index
      %c0_115 = arith.constant 0 : index
      %c0_116 = arith.constant 0 : index
      %262 = vector.load %arg2[%c1_114, %c0_115, %c0_116] : memref<2x16x8xf32, #tpu.memory_space<vmem>>, vector<1x16x8xf32>
      %263 = vector.shape_cast %262 : vector<1x16x8xf32> to vector<16x8xf32>
      %264 = arith.truncf %263 : vector<16x8xf32> to vector<16x8xbf16>
      %265 = tpu.transpose %264, [1, 0] : vector<16x8xbf16> -> vector<8x16xbf16>
      %cst_117 = arith.constant dense<0.000000e+00> : vector<8x32xf32>
      %266 = tpu.matmul %265, %253, %cst_117 {dimension_numbers = #tpu.dot_dimension_numbers<[1], [0], [0], [1], [0, 0, 1, 1], [], []>} : vector<8x16xbf16>, vector<16x32xbf16>, vector<8x32xf32> -> vector<8x32xf32>
      %267 = arith.addf %266, %254 : vector<8x32xf32>
      %c8_118 = arith.constant 8 : index
      %c0_119 = arith.constant 0 : index
      %268 = vector.load %arg14[%c8_118, %c0_119] : memref<16x32xf32, #tpu.memory_space<vmem>>, vector<8x32xf32>
      tpu.vector_store %arg14[%c8_118, %c0_119], %267 {strides = array<i32>} : memref<16x32xf32, #tpu.memory_space<vmem>>, vector<8x32xf32>,
    } else {
    }
    %c0 = arith.constant 0 : index
    %c0_1 = arith.constant 0 : index
    %3 = vector.load %arg14[%c0, %c0_1] : memref<16x32xf32, #tpu.memory_space<vmem>>, vector<16x32xf32>
    %4 = arith.truncf %3 : vector<16x32xf32> to vector<16x32xbf16>
    %c0_2 = arith.constant 0 : index
    %c0_3 = arith.constant 0 : index
    %c0_4 = arith.constant 0 : index
    %5 = vector.load %arg6[%c0_2, %c0_3, %c0_4] : memref<1x12x8xf32, #tpu.memory_space<vmem>>, vector<1x12x8xf32>
    %6 = vector.shape_cast %5 : vector<1x12x8xf32> to vector<12x8xf32>
    %c0_5 = arith.constant 0 : index
    %c0_6 = arith.constant 0 : index
    %c0_7 = arith.constant 0 : index
    %c0_8 = arith.constant 0 : index
    %7 = vector.load %arg5[%c0_5, %c0_6, %c0_7, %c0_8] : memref<1x12x32x8xbf16, #tpu.memory_space<vmem>>, vector<1x1x32x8xbf16>
    %8 = vector.shape_cast %7 : vector<1x1x32x8xbf16> to vector<32x8xbf16>
    %cst = arith.constant dense<0.000000e+00> : vector<16x8xf32>
    %9 = tpu.matmul %4, %8, %cst {dimension_numbers = #tpu.dot_dimension_numbers<[1], [0], [0], [1], [0, 0, 1, 1], [], []>} : vector<16x32xbf16>, vector<32x8xbf16>, vector<16x8xf32> -> vector<16x8xf32>
    %10 = vector.extract_strided_slice %6 {offsets = [0, 0], sizes = [1, 8], strides = [1, 1]} : vector<12x8xf32> to vector<1x8xf32>
    %11 = vector.broadcast %10 : vector<1x8xf32> to vector<16x8xf32>
    %12 = arith.addf %9, %11 : vector<16x8xf32>
    %c0_9 = arith.constant 0 : index
    %c4 = arith.constant 4 : index
    %c0_10 = arith.constant 0 : index
    %c0_11 = arith.constant 0 : index
    %13 = vector.load %arg5[%c0_9, %c4, %c0_10, %c0_11] : memref<1x12x32x8xbf16, #tpu.memory_space<vmem>>, vector<1x1x32x8xbf16>
    %14 = vector.shape_cast %13 : vector<1x1x32x8xbf16> to vector<32x8xbf16>
    %cst_12 = arith.constant dense<0.000000e+00> : vector<16x8xf32>
    %15 = tpu.matmul %4, %14, %cst_12 {dimension_numbers = #tpu.dot_dimension_numbers<[1], [0], [0], [1], [0, 0, 1, 1], [], []>} : vector<16x32xbf16>, vector<32x8xbf16>, vector<16x8xf32> -> vector<16x8xf32>
    %16 = vector.extract_strided_slice %6 {offsets = [4, 0], sizes = [1, 8], strides = [1, 1]} : vector<12x8xf32> to vector<1x8xf32>
    %17 = vector.broadcast %16 : vector<1x8xf32> to vector<16x8xf32>
    %18 = arith.addf %15, %17 : vector<16x8xf32>
    %c0_13 = arith.constant 0 : index
    %c8 = arith.constant 8 : index
    %c0_14 = arith.constant 0 : index
    %c0_15 = arith.constant 0 : index
    %19 = vector.load %arg5[%c0_13, %c8, %c0_14, %c0_15] : memref<1x12x32x8xbf16, #tpu.memory_space<vmem>>, vector<1x1x32x8xbf16>
    %20 = vector.shape_cast %19 : vector<1x1x32x8xbf16> to vector<32x8xbf16>
    %cst_16 = arith.constant dense<0.000000e+00> : vector<16x8xf32>
    %21 = tpu.matmul %4, %20, %cst_16 {dimension_numbers = #tpu.dot_dimension_numbers<[1], [0], [0], [1], [0, 0, 1, 1], [], []>} : vector<16x32xbf16>, vector<32x8xbf16>, vector<16x8xf32> -> vector<16x8xf32>
    %22 = vector.extract_strided_slice %6 {offsets = [8, 0], sizes = [1, 8], strides = [1, 1]} : vector<12x8xf32> to vector<1x8xf32>
    %23 = vector.broadcast %22 : vector<1x8xf32> to vector<16x8xf32>
    %24 = arith.addf %21, %23 : vector<16x8xf32>
    %cst_17 = arith.constant 0.353553385 : f32
    %25 = vector.broadcast %cst_17 : f32 to vector<16x8xf32>
    %26 = arith.mulf %12, %25 : vector<16x8xf32>
    %27 = arith.truncf %26 : vector<16x8xf32> to vector<16x8xbf16>
    %28 = vector.shape_cast %27 : vector<16x8xbf16> to vector<2x8x8xbf16>
    %29 = arith.truncf %18 : vector<16x8xf32> to vector<16x8xbf16>
    %30 = vector.shape_cast %29 : vector<16x8xbf16> to vector<2x8x8xbf16>
    %31 = arith.truncf %24 : vector<16x8xf32> to vector<16x8xbf16>
    %32 = vector.shape_cast %31 : vector<16x8xbf16> to vector<2x8x8xbf16>
    "tpu.trace_start"() <{level = 10 : i32, message = "bqd,bkd->bqk"}> : () -> ()
    %cst_18 = arith.constant dense<0.000000e+00> : vector<2x8x8xf32>
    %33 = tpu.matmul %28, %30, %cst_18 {dimension_numbers = #tpu.dot_dimension_numbers<[2], [2], [1], [1], [0, 0, 0, 1, 1, 1], [0], [0]>} : vector<2x8x8xbf16>, vector<2x8x8xbf16>, vector<2x8x8xf32> -> vector<2x8x8xf32>
    "tpu.trace_stop"() : () -> ()
    %cst_19 = arith.constant dense<0xFF800000> : vector<2x8xf32>
    %34 = vector.multi_reduction <maximumf>, %33, %cst_19 [2] : vector<2x8x8xf32> to vector<2x8xf32>
    %35 = vector.shape_cast %34 : vector<2x8xf32> to vector<2x8x1xf32>
    %36 = vector.broadcast %35 : vector<2x8x1xf32> to vector<2x8x8xf32>
    %37 = arith.subf %33, %36 : vector<2x8x8xf32>
    %38 = math.exp %37 : vector<2x8x8xf32>
    %cst_20 = arith.constant dense<0.000000e+00> : vector<2x8xf32>
    %39 = vector.multi_reduction <add>, %38, %cst_20 [2] : vector<2x8x8xf32> to vector<2x8xf32>
    %40 = vector.shape_cast %39 : vector<2x8xf32> to vector<2x8x1xf32>
    %41 = tpu.reciprocal %40 {approx = true} : vector<2x8x1xf32> -> vector<2x8x1xf32>
    %42 = vector.broadcast %41 : vector<2x8x1xf32> to vector<2x8x8xf32>
    %43 = arith.mulf %38, %42 : vector<2x8x8xf32>
    %44 = arith.truncf %43 : vector<2x8x8xf32> to vector<2x8x8xbf16>
    "tpu.trace_start"() <{level = 10 : i32, message = "bqk,bkd->bqd"}> : () -> ()
    %cst_21 = arith.constant dense<0.000000e+00> : vector<2x8x8xf32>
    %45 = tpu.matmul %44, %32, %cst_21 {dimension_numbers = #tpu.dot_dimension_numbers<[2], [1], [1], [2], [0, 0, 0, 1, 1, 2], [0], [0]>} : vector<2x8x8xbf16>, vector<2x8x8xbf16>, vector<2x8x8xf32> -> vector<2x8x8xf32>
    "tpu.trace_stop"() : () -> ()
    %46 = vector.shape_cast %45 : vector<2x8x8xf32> to vector<16x8xf32>
    %c0_22 = arith.constant 0 : index
    %c1 = arith.constant 1 : index
    %c0_23 = arith.constant 0 : index
    %c0_24 = arith.constant 0 : index
    %47 = vector.load %arg5[%c0_22, %c1, %c0_23, %c0_24] : memref<1x12x32x8xbf16, #tpu.memory_space<vmem>>, vector<1x1x32x8xbf16>
    %48 = vector.shape_cast %47 : vector<1x1x32x8xbf16> to vector<32x8xbf16>
    %cst_25 = arith.constant dense<0.000000e+00> : vector<16x8xf32>
    %49 = tpu.matmul %4, %48, %cst_25 {dimension_numbers = #tpu.dot_dimension_numbers<[1], [0], [0], [1], [0, 0, 1, 1], [], []>} : vector<16x32xbf16>, vector<32x8xbf16>, vector<16x8xf32> -> vector<16x8xf32>
    %50 = vector.extract_strided_slice %6 {offsets = [1, 0], sizes = [1, 8], strides = [1, 1]} : vector<12x8xf32> to vector<1x8xf32>
    %51 = vector.broadcast %50 : vector<1x8xf32> to vector<16x8xf32>
    %52 = arith.addf %49, %51 : vector<16x8xf32>
    %c0_26 = arith.constant 0 : index
    %c5 = arith.constant 5 : index
    %c0_27 = arith.constant 0 : index
    %c0_28 = arith.constant 0 : index
    %53 = vector.load %arg5[%c0_26, %c5, %c0_27, %c0_28] : memref<1x12x32x8xbf16, #tpu.memory_space<vmem>>, vector<1x1x32x8xbf16>
    %54 = vector.shape_cast %53 : vector<1x1x32x8xbf16> to vector<32x8xbf16>
    %cst_29 = arith.constant dense<0.000000e+00> : vector<16x8xf32>
    %55 = tpu.matmul %4, %54, %cst_29 {dimension_numbers = #tpu.dot_dimension_numbers<[1], [0], [0], [1], [0, 0, 1, 1], [], []>} : vector<16x32xbf16>, vector<32x8xbf16>, vector<16x8xf32> -> vector<16x8xf32>
    %56 = vector.extract_strided_slice %6 {offsets = [5, 0], sizes = [1, 8], strides = [1, 1]} : vector<12x8xf32> to vector<1x8xf32>
    %57 = vector.broadcast %56 : vector<1x8xf32> to vector<16x8xf32>
    %58 = arith.addf %55, %57 : vector<16x8xf32>
    %c0_30 = arith.constant 0 : index
    %c9 = arith.constant 9 : index
    %c0_31 = arith.constant 0 : index
    %c0_32 = arith.constant 0 : index
    %59 = vector.load %arg5[%c0_30, %c9, %c0_31, %c0_32] : memref<1x12x32x8xbf16, #tpu.memory_space<vmem>>, vector<1x1x32x8xbf16>
    %60 = vector.shape_cast %59 : vector<1x1x32x8xbf16> to vector<32x8xbf16>
    %cst_33 = arith.constant dense<0.000000e+00> : vector<16x8xf32>
    %61 = tpu.matmul %4, %60, %cst_33 {dimension_numbers = #tpu.dot_dimension_numbers<[1], [0], [0], [1], [0, 0, 1, 1], [], []>} : vector<16x32xbf16>, vector<32x8xbf16>, vector<16x8xf32> -> vector<16x8xf32>
    %62 = vector.extract_strided_slice %6 {offsets = [9, 0], sizes = [1, 8], strides = [1, 1]} : vector<12x8xf32> to vector<1x8xf32>
    %63 = vector.broadcast %62 : vector<1x8xf32> to vector<16x8xf32>
    %64 = arith.addf %61, %63 : vector<16x8xf32>
    %cst_34 = arith.constant 0.353553385 : f32
    %65 = vector.broadcast %cst_34 : f32 to vector<16x8xf32>
    %66 = arith.mulf %52, %65 : vector<16x8xf32>
    %67 = arith.truncf %66 : vector<16x8xf32> to vector<16x8xbf16>
    %68 = vector.shape_cast %67 : vector<16x8xbf16> to vector<2x8x8xbf16>
    %69 = arith.truncf %58 : vector<16x8xf32> to vector<16x8xbf16>
    %70 = vector.shape_cast %69 : vector<16x8xbf16> to vector<2x8x8xbf16>
    %71 = arith.truncf %64 : vector<16x8xf32> to vector<16x8xbf16>
    %72 = vector.shape_cast %71 : vector<16x8xbf16> to vector<2x8x8xbf16>
    "tpu.trace_start"() <{level = 10 : i32, message = "bqd,bkd->bqk"}> : () -> ()
    %cst_35 = arith.constant dense<0.000000e+00> : vector<2x8x8xf32>
    %73 = tpu.matmul %68, %70, %cst_35 {dimension_numbers = #tpu.dot_dimension_numbers<[2], [2], [1], [1], [0, 0, 0, 1, 1, 1], [0], [0]>} : vector<2x8x8xbf16>, vector<2x8x8xbf16>, vector<2x8x8xf32> -> vector<2x8x8xf32>
    "tpu.trace_stop"() : () -> ()
    %cst_36 = arith.constant dense<0xFF800000> : vector<2x8xf32>
    %74 = vector.multi_reduction <maximumf>, %73, %cst_36 [2] : vector<2x8x8xf32> to vector<2x8xf32>
    %75 = vector.shape_cast %74 : vector<2x8xf32> to vector<2x8x1xf32>
    %76 = vector.broadcast %75 : vector<2x8x1xf32> to vector<2x8x8xf32>
    %77 = arith.subf %73, %76 : vector<2x8x8xf32>
    %78 = math.exp %77 : vector<2x8x8xf32>
    %cst_37 = arith.constant dense<0.000000e+00> : vector<2x8xf32>
    %79 = vector.multi_reduction <add>, %78, %cst_37 [2] : vector<2x8x8xf32> to vector<2x8xf32>
    %80 = vector.shape_cast %79 : vector<2x8xf32> to vector<2x8x1xf32>
    %81 = tpu.reciprocal %80 {approx = true} : vector<2x8x1xf32> -> vector<2x8x1xf32>
    %82 = vector.broadcast %81 : vector<2x8x1xf32> to vector<2x8x8xf32>
    %83 = arith.mulf %78, %82 : vector<2x8x8xf32>
    %84 = arith.truncf %83 : vector<2x8x8xf32> to vector<2x8x8xbf16>
    "tpu.trace_start"() <{level = 10 : i32, message = "bqk,bkd->bqd"}> : () -> ()
    %cst_38 = arith.constant dense<0.000000e+00> : vector<2x8x8xf32>
    %85 = tpu.matmul %84, %72, %cst_38 {dimension_numbers = #tpu.dot_dimension_numbers<[2], [1], [1], [2], [0, 0, 0, 1, 1, 2], [0], [0]>} : vector<2x8x8xbf16>, vector<2x8x8xbf16>, vector<2x8x8xf32> -> vector<2x8x8xf32>
    "tpu.trace_stop"() : () -> ()
    %86 = vector.shape_cast %85 : vector<2x8x8xf32> to vector<16x8xf32>
    %c0_39 = arith.constant 0 : index
    %c2 = arith.constant 2 : index
    %c0_40 = arith.constant 0 : index
    %c0_41 = arith.constant 0 : index
    %87 = vector.load %arg5[%c0_39, %c2, %c0_40, %c0_41] : memref<1x12x32x8xbf16, #tpu.memory_space<vmem>>, vector<1x1x32x8xbf16>
    %88 = vector.shape_cast %87 : vector<1x1x32x8xbf16> to vector<32x8xbf16>
    %cst_42 = arith.constant dense<0.000000e+00> : vector<16x8xf32>
    %89 = tpu.matmul %4, %88, %cst_42 {dimension_numbers = #tpu.dot_dimension_numbers<[1], [0], [0], [1], [0, 0, 1, 1], [], []>} : vector<16x32xbf16>, vector<32x8xbf16>, vector<16x8xf32> -> vector<16x8xf32>
    %90 = vector.extract_strided_slice %6 {offsets = [2, 0], sizes = [1, 8], strides = [1, 1]} : vector<12x8xf32> to vector<1x8xf32>
    %91 = vector.broadcast %90 : vector<1x8xf32> to vector<16x8xf32>
    %92 = arith.addf %89, %91 : vector<16x8xf32>
    %c0_43 = arith.constant 0 : index
    %c6 = arith.constant 6 : index
    %c0_44 = arith.constant 0 : index
    %c0_45 = arith.constant 0 : index
    %93 = vector.load %arg5[%c0_43, %c6, %c0_44, %c0_45] : memref<1x12x32x8xbf16, #tpu.memory_space<vmem>>, vector<1x1x32x8xbf16>
    %94 = vector.shape_cast %93 : vector<1x1x32x8xbf16> to vector<32x8xbf16>
    %cst_46 = arith.constant dense<0.000000e+00> : vector<16x8xf32>
    %95 = tpu.matmul %4, %94, %cst_46 {dimension_numbers = #tpu.dot_dimension_numbers<[1], [0], [0], [1], [0, 0, 1, 1], [], []>} : vector<16x32xbf16>, vector<32x8xbf16>, vector<16x8xf32> -> vector<16x8xf32>
    %96 = vector.extract_strided_slice %6 {offsets = [6, 0], sizes = [1, 8], strides = [1, 1]} : vector<12x8xf32> to vector<1x8xf32>
    %97 = vector.broadcast %96 : vector<1x8xf32> to vector<16x8xf32>
    %98 = arith.addf %95, %97 : vector<16x8xf32>
    %c0_47 = arith.constant 0 : index
    %c10 = arith.constant 10 : index
    %c0_48 = arith.constant 0 : index
    %c0_49 = arith.constant 0 : index
    %99 = vector.load %arg5[%c0_47, %c10, %c0_48, %c0_49] : memref<1x12x32x8xbf16, #tpu.memory_space<vmem>>, vector<1x1x32x8xbf16>
    %100 = vector.shape_cast %99 : vector<1x1x32x8xbf16> to vector<32x8xbf16>
    %cst_50 = arith.constant dense<0.000000e+00> : vector<16x8xf32>
    %101 = tpu.matmul %4, %100, %cst_50 {dimension_numbers = #tpu.dot_dimension_numbers<[1], [0], [0], [1], [0, 0, 1, 1], [], []>} : vector<16x32xbf16>, vector<32x8xbf16>, vector<16x8xf32> -> vector<16x8xf32>
    %102 = vector.extract_strided_slice %6 {offsets = [10, 0], sizes = [1, 8], strides = [1, 1]} : vector<12x8xf32> to vector<1x8xf32>
    %103 = vector.broadcast %102 : vector<1x8xf32> to vector<16x8xf32>
    %104 = arith.addf %101, %103 : vector<16x8xf32>
    %cst_51 = arith.constant 0.353553385 : f32
    %105 = vector.broadcast %cst_51 : f32 to vector<16x8xf32>
    %106 = arith.mulf %92, %105 : vector<16x8xf32>
    %107 = arith.truncf %106 : vector<16x8xf32> to vector<16x8xbf16>
    %108 = vector.shape_cast %107 : vector<16x8xbf16> to vector<2x8x8xbf16>
    %109 = arith.truncf %98 : vector<16x8xf32> to vector<16x8xbf16>
    %110 = vector.shape_cast %109 : vector<16x8xbf16> to vector<2x8x8xbf16>
    %111 = arith.truncf %104 : vector<16x8xf32> to vector<16x8xbf16>
    %112 = vector.shape_cast %111 : vector<16x8xbf16> to vector<2x8x8xbf16>
    "tpu.trace_start"() <{level = 10 : i32, message = "bqd,bkd->bqk"}> : () -> ()
    %cst_52 = arith.constant dense<0.000000e+00> : vector<2x8x8xf32>
    %113 = tpu.matmul %108, %110, %cst_52 {dimension_numbers = #tpu.dot_dimension_numbers<[2], [2], [1], [1], [0, 0, 0, 1, 1, 1], [0], [0]>} : vector<2x8x8xbf16>, vector<2x8x8xbf16>, vector<2x8x8xf32> -> vector<2x8x8xf32>
    "tpu.trace_stop"() : () -> ()
    %cst_53 = arith.constant dense<0xFF800000> : vector<2x8xf32>
    %114 = vector.multi_reduction <maximumf>, %113, %cst_53 [2] : vector<2x8x8xf32> to vector<2x8xf32>
    %115 = vector.shape_cast %114 : vector<2x8xf32> to vector<2x8x1xf32>
    %116 = vector.broadcast %115 : vector<2x8x1xf32> to vector<2x8x8xf32>
    %117 = arith.subf %113, %116 : vector<2x8x8xf32>
    %118 = math.exp %117 : vector<2x8x8xf32>
    %cst_54 = arith.constant dense<0.000000e+00> : vector<2x8xf32>
    %119 = vector.multi_reduction <add>, %118, %cst_54 [2] : vector<2x8x8xf32> to vector<2x8xf32>
    %120 = vector.shape_cast %119 : vector<2x8xf32> to vector<2x8x1xf32>
    %121 = tpu.reciprocal %120 {approx = true} : vector<2x8x1xf32> -> vector<2x8x1xf32>
    %122 = vector.broadcast %121 : vector<2x8x1xf32> to vector<2x8x8xf32>
    %123 = arith.mulf %118, %122 : vector<2x8x8xf32>
    %124 = arith.truncf %123 : vector<2x8x8xf32> to vector<2x8x8xbf16>
    "tpu.trace_start"() <{level = 10 : i32, message = "bqk,bkd->bqd"}> : () -> ()
    %cst_55 = arith.constant dense<0.000000e+00> : vector<2x8x8xf32>
    %125 = tpu.matmul %124, %112, %cst_55 {dimension_numbers = #tpu.dot_dimension_numbers<[2], [1], [1], [2], [0, 0, 0, 1, 1, 2], [0], [0]>} : vector<2x8x8xbf16>, vector<2x8x8xbf16>, vector<2x8x8xf32> -> vector<2x8x8xf32>
    "tpu.trace_stop"() : () -> ()
    %126 = vector.shape_cast %125 : vector<2x8x8xf32> to vector<16x8xf32>
    %c0_56 = arith.constant 0 : index
    %c3 = arith.constant 3 : index
    %c0_57 = arith.constant 0 : index
    %c0_58 = arith.constant 0 : index
    %127 = vector.load %arg5[%c0_56, %c3, %c0_57, %c0_58] : memref<1x12x32x8xbf16, #tpu.memory_space<vmem>>, vector<1x1x32x8xbf16>
    %128 = vector.shape_cast %127 : vector<1x1x32x8xbf16> to vector<32x8xbf16>
    %cst_59 = arith.constant dense<0.000000e+00> : vector<16x8xf32>
    %129 = tpu.matmul %4, %128, %cst_59 {dimension_numbers = #tpu.dot_dimension_numbers<[1], [0], [0], [1], [0, 0, 1, 1], [], []>} : vector<16x32xbf16>, vector<32x8xbf16>, vector<16x8xf32> -> vector<16x8xf32>
    %130 = vector.extract_strided_slice %6 {offsets = [3, 0], sizes = [1, 8], strides = [1, 1]} : vector<12x8xf32> to vector<1x8xf32>
    %131 = vector.broadcast %130 : vector<1x8xf32> to vector<16x8xf32>
    %132 = arith.addf %129, %131 : vector<16x8xf32>
    %c0_60 = arith.constant 0 : index
    %c7 = arith.constant 7 : index
    %c0_61 = arith.constant 0 : index
    %c0_62 = arith.constant 0 : index
    %133 = vector.load %arg5[%c0_60, %c7, %c0_61, %c0_62] : memref<1x12x32x8xbf16, #tpu.memory_space<vmem>>, vector<1x1x32x8xbf16>
    %134 = vector.shape_cast %133 : vector<1x1x32x8xbf16> to vector<32x8xbf16>
    %cst_63 = arith.constant dense<0.000000e+00> : vector<16x8xf32>
    %135 = tpu.matmul %4, %134, %cst_63 {dimension_numbers = #tpu.dot_dimension_numbers<[1], [0], [0], [1], [0, 0, 1, 1], [], []>} : vector<16x32xbf16>, vector<32x8xbf16>, vector<16x8xf32> -> vector<16x8xf32>
    %136 = vector.extract_strided_slice %6 {offsets = [7, 0], sizes = [1, 8], strides = [1, 1]} : vector<12x8xf32> to vector<1x8xf32>
    %137 = vector.broadcast %136 : vector<1x8xf32> to vector<16x8xf32>
    %138 = arith.addf %135, %137 : vector<16x8xf32>
    %c0_64 = arith.constant 0 : index
    %c11 = arith.constant 11 : index
    %c0_65 = arith.constant 0 : index
    %c0_66 = arith.constant 0 : index
    %139 = vector.load %arg5[%c0_64, %c11, %c0_65, %c0_66] : memref<1x12x32x8xbf16, #tpu.memory_space<vmem>>, vector<1x1x32x8xbf16>
    %140 = vector.shape_cast %139 : vector<1x1x32x8xbf16> to vector<32x8xbf16>
    %cst_67 = arith.constant dense<0.000000e+00> : vector<16x8xf32>
    %141 = tpu.matmul %4, %140, %cst_67 {dimension_numbers = #tpu.dot_dimension_numbers<[1], [0], [0], [1], [0, 0, 1, 1], [], []>} : vector<16x32xbf16>, vector<32x8xbf16>, vector<16x8xf32> -> vector<16x8xf32>
    %142 = vector.extract_strided_slice %6 {offsets = [11, 0], sizes = [1, 8], strides = [1, 1]} : vector<12x8xf32> to vector<1x8xf32>
    %143 = vector.broadcast %142 : vector<1x8xf32> to vector<16x8xf32>
    %144 = arith.addf %141, %143 : vector<16x8xf32>
    %cst_68 = arith.constant 0.353553385 : f32
    %145 = vector.broadcast %cst_68 : f32 to vector<16x8xf32>
    %146 = arith.mulf %132, %145 : vector<16x8xf32>
    %147 = arith.truncf %146 : vector<16x8xf32> to vector<16x8xbf16>
    %148 = vector.shape_cast %147 : vector<16x8xbf16> to vector<2x8x8xbf16>
    %149 = arith.truncf %138 : vector<16x8xf32> to vector<16x8xbf16>
    %150 = vector.shape_cast %149 : vector<16x8xbf16> to vector<2x8x8xbf16>
    %151 = arith.truncf %144 : vector<16x8xf32> to vector<16x8xbf16>
    %152 = vector.shape_cast %151 : vector<16x8xbf16> to vector<2x8x8xbf16>
    "tpu.trace_start"() <{level = 10 : i32, message = "bqd,bkd->bqk"}> : () -> ()
    %cst_69 = arith.constant dense<0.000000e+00> : vector<2x8x8xf32>
    %153 = tpu.matmul %148, %150, %cst_69 {dimension_numbers = #tpu.dot_dimension_numbers<[2], [2], [1], [1], [0, 0, 0, 1, 1, 1], [0], [0]>} : vector<2x8x8xbf16>, vector<2x8x8xbf16>, vector<2x8x8xf32> -> vector<2x8x8xf32>
    "tpu.trace_stop"() : () -> ()
    %cst_70 = arith.constant dense<0xFF800000> : vector<2x8xf32>
    %154 = vector.multi_reduction <maximumf>, %153, %cst_70 [2] : vector<2x8x8xf32> to vector<2x8xf32>
    %155 = vector.shape_cast %154 : vector<2x8xf32> to vector<2x8x1xf32>
    %156 = vector.broadcast %155 : vector<2x8x1xf32> to vector<2x8x8xf32>
    %157 = arith.subf %153, %156 : vector<2x8x8xf32>
    %158 = math.exp %157 : vector<2x8x8xf32>
    %cst_71 = arith.constant dense<0.000000e+00> : vector<2x8xf32>
    %159 = vector.multi_reduction <add>, %158, %cst_71 [2] : vector<2x8x8xf32> to vector<2x8xf32>
    %160 = vector.shape_cast %159 : vector<2x8xf32> to vector<2x8x1xf32>
    %161 = tpu.reciprocal %160 {approx = true} : vector<2x8x1xf32> -> vector<2x8x1xf32>
    %162 = vector.broadcast %161 : vector<2x8x1xf32> to vector<2x8x8xf32>
    %163 = arith.mulf %158, %162 : vector<2x8x8xf32>
    %164 = arith.truncf %163 : vector<2x8x8xf32> to vector<2x8x8xbf16>
    "tpu.trace_start"() <{level = 10 : i32, message = "bqk,bkd->bqd"}> : () -> ()
    %cst_72 = arith.constant dense<0.000000e+00> : vector<2x8x8xf32>
    %165 = tpu.matmul %164, %152, %cst_72 {dimension_numbers = #tpu.dot_dimension_numbers<[2], [1], [1], [2], [0, 0, 0, 1, 1, 2], [0], [0]>} : vector<2x8x8xbf16>, vector<2x8x8xbf16>, vector<2x8x8xf32> -> vector<2x8x8xf32>
    "tpu.trace_stop"() : () -> ()
    %166 = vector.shape_cast %165 : vector<2x8x8xf32> to vector<16x8xf32>
    %167 = tpu.concatenate %46, %86, %126, %166 in 1 : vector<16x8xf32>, vector<16x8xf32>, vector<16x8xf32>, vector<16x8xf32> -> vector<16x32xf32>
    %168 = arith.truncf %167 : vector<16x32xf32> to vector<16x32xbf16>
    %c0_73 = arith.constant 0 : index
    %c0_74 = arith.constant 0 : index
    %c0_75 = arith.constant 0 : index
    %169 = vector.load %arg10[%c0_73, %c0_74, %c0_75] : memref<1x7x128xf32, #tpu.memory_space<vmem>>, vector<1x7x128xf32>
    %170 = vector.shape_cast %169 : vector<1x7x128xf32> to vector<7x128xf32>
    %171 = vector.extract_strided_slice %170 {offsets = [0, 0], sizes = [1, 128], strides = [1, 1]} : vector<7x128xf32> to vector<1x128xf32>
    %172 = vector.extract_strided_slice %170 {offsets = [1, 0], sizes = [1, 32], strides = [1, 1]} : vector<7x128xf32> to vector<1x32xf32>
    %173 = vector.extract_strided_slice %170 {offsets = [2, 0], sizes = [1, 32], strides = [1, 1]} : vector<7x128xf32> to vector<1x32xf32>
    %174 = vector.extract_strided_slice %170 {offsets = [3, 0], sizes = [1, 32], strides = [1, 1]} : vector<7x128xf32> to vector<1x32xf32>
    %175 = vector.extract_strided_slice %170 {offsets = [4, 0], sizes = [1, 32], strides = [1, 1]} : vector<7x128xf32> to vector<1x32xf32>
    %176 = vector.extract_strided_slice %170 {offsets = [5, 0], sizes = [1, 32], strides = [1, 1]} : vector<7x128xf32> to vector<1x32xf32>
    %177 = vector.extract_strided_slice %170 {offsets = [6, 0], sizes = [1, 32], strides = [1, 1]} : vector<7x128xf32> to vector<1x32xf32>
    %c0_76 = arith.constant 0 : index
    %c0_77 = arith.constant 0 : index
    %c0_78 = arith.constant 0 : index
    %178 = vector.load %arg7[%c0_76, %c0_77, %c0_78] : memref<1x32x32xbf16, #tpu.memory_space<vmem>>, vector<1x32x32xbf16>
    %179 = vector.shape_cast %178 : vector<1x32x32xbf16> to vector<32x32xbf16>
    %cst_79 = arith.constant dense<0.000000e+00> : vector<16x32xf32>
    %180 = tpu.matmul %168, %179, %cst_79 {dimension_numbers = #tpu.dot_dimension_numbers<[1], [0], [0], [1], [0, 0, 1, 1], [], []>} : vector<16x32xbf16>, vector<32x32xbf16>, vector<16x32xf32> -> vector<16x32xf32>
    %181 = vector.broadcast %172 : vector<1x32xf32> to vector<16x32xf32>
    %182 = arith.addf %180, %181 : vector<16x32xf32>
    %183 = arith.addf %3, %182 : vector<16x32xf32>
    %cst_80 = arith.constant dense<0.000000e+00> : vector<16xf32>
    %184 = vector.multi_reduction <add>, %183, %cst_80 [1] : vector<16x32xf32> to vector<16xf32>
    %185 = vector.shape_cast %184 : vector<16xf32> to vector<16x1xf32>
    %cst_81 = arith.constant 3.200000e+01 : f32
    %186 = vector.broadcast %cst_81 : f32 to vector<16x1xf32>
    %187 = arith.divf %185, %186 : vector<16x1xf32>
    %188 = vector.broadcast %187 : vector<16x1xf32> to vector<16x32xf32>
    %189 = arith.subf %183, %188 : vector<16x32xf32>
    %190 = arith.mulf %189, %189 : vector<16x32xf32>
    %cst_82 = arith.constant dense<0.000000e+00> : vector<16xf32>
    %191 = vector.multi_reduction <add>, %190, %cst_82 [1] : vector<16x32xf32> to vector<16xf32>
    %192 = vector.shape_cast %191 : vector<16xf32> to vector<16x1xf32>
    %cst_83 = arith.constant 3.200000e+01 : f32
    %193 = vector.broadcast %cst_83 : f32 to vector<16x1xf32>
    %194 = arith.divf %192, %193 : vector<16x1xf32>
    %195 = vector.broadcast %187 : vector<16x1xf32> to vector<16x32xf32>
    %196 = arith.subf %183, %195 : vector<16x32xf32>
    %cst_84 = arith.constant 9.99999974E-6 : f32
    %197 = vector.broadcast %cst_84 : f32 to vector<16x1xf32>
    %198 = arith.addf %194, %197 : vector<16x1xf32>
    %199 = math.rsqrt %198 : vector<16x1xf32>
    %200 = vector.broadcast %199 : vector<16x1xf32> to vector<16x32xf32>
    %201 = arith.mulf %196, %200 : vector<16x32xf32>
    %202 = vector.broadcast %173 : vector<1x32xf32> to vector<16x32xf32>
    %203 = arith.mulf %201, %202 : vector<16x32xf32>
    %204 = vector.broadcast %174 : vector<1x32xf32> to vector<16x32xf32>
    %205 = arith.addf %203, %204 : vector<16x32xf32>
    %206 = arith.truncf %205 : vector<16x32xf32> to vector<16x32xbf16>
    %c0_85 = arith.constant 0 : index
    %c0_86 = arith.constant 0 : index
    %c0_87 = arith.constant 0 : index
    %207 = vector.load %arg8[%c0_85, %c0_86, %c0_87] : memref<1x32x128xbf16, #tpu.memory_space<vmem>>, vector<1x32x128xbf16>
    %208 = vector.shape_cast %207 : vector<1x32x128xbf16> to vector<32x128xbf16>
    %cst_88 = arith.constant dense<0.000000e+00> : vector<16x128xf32>
    %209 = tpu.matmul %206, %208, %cst_88 {dimension_numbers = #tpu.dot_dimension_numbers<[1], [0], [0], [1], [0, 0, 1, 1], [], []>} : vector<16x32xbf16>, vector<32x128xbf16>, vector<16x128xf32> -> vector<16x128xf32>
    %210 = vector.broadcast %171 : vector<1x128xf32> to vector<16x128xf32>
    %211 = arith.addf %209, %210 : vector<16x128xf32>
    %cst_89 = arith.constant 5.000000e-01 : f32
    %212 = vector.broadcast %cst_89 : f32 to vector<16x128xf32>
    %213 = arith.mulf %212, %211 : vector<16x128xf32>
    %cst_90 = arith.constant 0.707106769 : f32
    %214 = vector.broadcast %cst_90 : f32 to vector<16x128xf32>
    %215 = arith.mulf %211, %214 : vector<16x128xf32>
    %216 = math.erf %215 : vector<16x128xf32>
    %cst_91 = arith.constant 1.000000e+00 : f32
    %217 = vector.broadcast %cst_91 : f32 to vector<16x128xf32>
    %218 = arith.addf %217, %216 : vector<16x128xf32>
    %219 = arith.mulf %213, %218 : vector<16x128xf32>
    %220 = arith.truncf %219 : vector<16x128xf32> to vector<16x128xbf16>
    %c0_92 = arith.constant 0 : index
    %c0_93 = arith.constant 0 : index
    %c0_94 = arith.constant 0 : index
    %221 = vector.load %arg9[%c0_92, %c0_93, %c0_94] : memref<1x128x32xbf16, #tpu.memory_space<vmem>>, vector<1x128x32xbf16>
    %222 = vector.shape_cast %221 : vector<1x128x32xbf16> to vector<128x32xbf16>
    %cst_95 = arith.constant dense<0.000000e+00> : vector<16x32xf32>
    %223 = tpu.matmul %220, %222, %cst_95 {dimension_numbers = #tpu.dot_dimension_numbers<[1], [0], [0], [1], [0, 0, 1, 1], [], []>} : vector<16x128xbf16>, vector<128x32xbf16>, vector<16x32xf32> -> vector<16x32xf32>
    %224 = vector.broadcast %175 : vector<1x32xf32> to vector<16x32xf32>
    %225 = arith.addf %223, %224 : vector<16x32xf32>
    %226 = arith.addf %205, %225 : vector<16x32xf32>
    %cst_96 = arith.constant dense<0.000000e+00> : vector<16xf32>
    %227 = vector.multi_reduction <add>, %226, %cst_96 [1] : vector<16x32xf32> to vector<16xf32>
    %228 = vector.shape_cast %227 : vector<16xf32> to vector<16x1xf32>
    %cst_97 = arith.constant 3.200000e+01 : f32
    %229 = vector.broadcast %cst_97 : f32 to vector<16x1xf32>
    %230 = arith.divf %228, %229 : vector<16x1xf32>
    %231 = vector.broadcast %230 : vector<16x1xf32> to vector<16x32xf32>
    %232 = arith.subf %226, %231 : vector<16x32xf32>
    %233 = arith.mulf %232, %232 : vector<16x32xf32>
    %cst_98 = arith.constant dense<0.000000e+00> : vector<16xf32>
    %234 = vector.multi_reduction <add>, %233, %cst_98 [1] : vector<16x32xf32> to vector<16xf32>
    %235 = vector.shape_cast %234 : vector<16xf32> to vector<16x1xf32>
    %cst_99 = arith.constant 3.200000e+01 : f32
    %236 = vector.broadcast %cst_99 : f32 to vector<16x1xf32>
    %237 = arith.divf %235, %236 : vector<16x1xf32>
    %238 = vector.broadcast %230 : vector<16x1xf32> to vector<16x32xf32>
    %239 = arith.subf %226, %238 : vector<16x32xf32>
    %cst_100 = arith.constant 9.99999974E-6 : f32
    %240 = vector.broadcast %cst_100 : f32 to vector<16x1xf32>
    %241 = arith.addf %237, %240 : vector<16x1xf32>
    %242 = math.rsqrt %241 : vector<16x1xf32>
    %243 = vector.broadcast %242 : vector<16x1xf32> to vector<16x32xf32>
    %244 = arith.mulf %239, %243 : vector<16x32xf32>
    %245 = vector.broadcast %176 : vector<1x32xf32> to vector<16x32xf32>
    %246 = arith.mulf %244, %245 : vector<16x32xf32>
    %247 = vector.broadcast %177 : vector<1x32xf32> to vector<16x32xf32>
    %248 = arith.addf %246, %247 : vector<16x32xf32>
    %c0_101 = arith.constant 0 : index
    %c0_102 = arith.constant 0 : index
    %249 = vector.load %arg14[%c0_101, %c0_102] : memref<16x32xf32, #tpu.memory_space<vmem>>, vector<16x32xf32>
    tpu.vector_store %arg14[%c0_101, %c0_102], %248 {strides = array<i32>} : memref<16x32xf32, #tpu.memory_space<vmem>>, vector<16x32xf32>,
    %c1_i32 = arith.constant 1 : i32
    %250 = arith.cmpi eq, %arg1, %c1_i32 : i32
    %251 = arith.extui %250 : i1 to i32
    %c0_i32_103 = arith.constant 0 : i32
    %252 = arith.cmpi ne, %251, %c0_i32_103 : i32
    scf.if %252 {
      %c0_104 = arith.constant 0 : index
      %c0_105 = arith.constant 0 : index
      %253 = vector.load %arg12[%c0_104, %c0_105] : memref<4x128xf32, #tpu.memory_space<vmem>>, vector<4x128xf32>
      %254 = vector.extract_strided_slice %253 {offsets = [0, 0], sizes = [1, 128], strides = [1, 1]} : vector<4x128xf32> to vector<1x128xf32>
      %255 = vector.extract_strided_slice %253 {offsets = [1, 0], sizes = [1, 128], strides = [1, 1]} : vector<4x128xf32> to vector<1x128xf32>
      %256 = vector.extract_strided_slice %253 {offsets = [2, 0], sizes = [1, 128], strides = [1, 1]} : vector<4x128xf32> to vector<1x128xf32>
      %257 = vector.extract_strided_slice %253 {offsets = [3, 0], sizes = [1, 128], strides = [1, 1]} : vector<4x128xf32> to vector<1x128xf32>
      %258 = arith.truncf %248 : vector<16x32xf32> to vector<16x32xbf16>
      %c0_106 = arith.constant 0 : index
      %c0_107 = arith.constant 0 : index
      %259 = vector.load %arg11[%c0_106, %c0_107] : memref<32x128xbf16, #tpu.memory_space<vmem>>, vector<32x128xbf16>
      %cst_108 = arith.constant dense<0.000000e+00> : vector<16x128xf32>
      %260 = tpu.matmul %258, %259, %cst_108 {dimension_numbers = #tpu.dot_dimension_numbers<[1], [0], [0], [1], [0, 0, 1, 1], [], []>} : vector<16x32xbf16>, vector<32x128xbf16>, vector<16x128xf32> -> vector<16x128xf32>
      %261 = vector.broadcast %254 : vector<1x128xf32> to vector<16x128xf32>
      %262 = arith.addf %260, %261 : vector<16x128xf32>
      %cst_109 = arith.constant dense<0.000000e+00> : vector<16xf32>
      %263 = vector.multi_reduction <add>, %262, %cst_109 [1] : vector<16x128xf32> to vector<16xf32>
      %264 = vector.shape_cast %263 : vector<16xf32> to vector<16x1xf32>
      %cst_110 = arith.constant 0.0416666679 : f32
      %265 = vector.broadcast %cst_110 : f32 to vector<16x1xf32>
      %266 = arith.mulf %264, %265 : vector<16x1xf32>
      %267 = vector.broadcast %266 : vector<16x1xf32> to vector<16x128xf32>
      %268 = arith.subf %262, %267 : vector<16x128xf32>
      %269 = vector.broadcast %257 : vector<1x128xf32> to vector<16x128xf32>
      %270 = arith.mulf %268, %269 : vector<16x128xf32>
      %271 = arith.mulf %270, %270 : vector<16x128xf32>
      %cst_111 = arith.constant dense<0.000000e+00> : vector<16xf32>
      %272 = vector.multi_reduction <add>, %271, %cst_111 [1] : vector<16x128xf32> to vector<16xf32>
      %273 = vector.shape_cast %272 : vector<16xf32> to vector<16x1xf32>
      %cst_112 = arith.constant 0.0416666679 : f32
      %274 = vector.broadcast %cst_112 : f32 to vector<16x1xf32>
      %275 = arith.mulf %273, %274 : vector<16x1xf32>
      %cst_113 = arith.constant 9.99999974E-6 : f32
      %276 = vector.broadcast %cst_113 : f32 to vector<16x1xf32>
      %277 = arith.addf %275, %276 : vector<16x1xf32>
      %278 = math.rsqrt %277 : vector<16x1xf32>
      %279 = vector.broadcast %278 : vector<16x1xf32> to vector<16x128xf32>
      %280 = arith.mulf %270, %279 : vector<16x128xf32>
      %281 = vector.broadcast %255 : vector<1x128xf32> to vector<16x128xf32>
      %282 = arith.mulf %280, %281 : vector<16x128xf32>
      %283 = vector.broadcast %256 : vector<1x128xf32> to vector<16x128xf32>
      %284 = arith.addf %282, %283 : vector<16x128xf32>
      %285 = vector.shape_cast %284 : vector<16x128xf32> to vector<2x8x128xf32>
      %c0_114 = arith.constant 0 : index
      %c0_115 = arith.constant 0 : index
      %c0_116 = arith.constant 0 : index
      %286 = vector.load %arg13[%c0_114, %c0_115, %c0_116] : memref<2x8x128xf32, #tpu.memory_space<vmem>>, vector<2x8x128xf32>
      tpu.vector_store %arg13[%c0_114, %c0_115, %c0_116], %285 {strides = array<i32>} : memref<2x8x128xf32, #tpu.memory_space<vmem>>, vector<2x8x128xf32>,
    } else {
    }
    return
  }
  func.func @transform_0(%arg0: i32, %arg1: i32) -> (i32, i32, i32) {
    %c0_i32 = arith.constant 0 : i32
    %c0_i32_0 = arith.constant 0 : i32
    %c0_i32_1 = arith.constant 0 : i32
    return %arg0, %c0_i32, %c0_i32_0 : i32, i32, i32
  }
  func.func @transform_1(%arg0: i32, %arg1: i32) -> (i32, i32) {
    %c0_i32 = arith.constant 0 : i32
    %c0_i32_0 = arith.constant 0 : i32
    %c0_i32_1 = arith.constant 0 : i32
    return %c0_i32, %c0_i32_0 : i32, i32
  }
  func.func @transform_2(%arg0: i32, %arg1: i32) -> (i32, i32) {
    %c0_i32 = arith.constant 0 : i32
    %c0_i32_0 = arith.constant 0 : i32
    %c0_i32_1 = arith.constant 0 : i32
    return %c0_i32, %c0_i32_0 : i32, i32
  }
  func.func @transform_3(%arg0: i32, %arg1: i32) -> (i32, i32, i32, i32) {
    %c0_i32 = arith.constant 0 : i32
    %c0_i32_0 = arith.constant 0 : i32
    %c0_i32_1 = arith.constant 0 : i32
    %c0_i32_2 = arith.constant 0 : i32
    return %arg1, %c0_i32, %c0_i32_0, %c0_i32_1 : i32, i32, i32, i32
  }
  func.func @transform_4(%arg0: i32, %arg1: i32) -> (i32, i32, i32) {
    %c0_i32 = arith.constant 0 : i32
    %c0_i32_0 = arith.constant 0 : i32
    %c0_i32_1 = arith.constant 0 : i32
    return %arg1, %c0_i32, %c0_i32_0 : i32, i32, i32
  }
  func.func @transform_5(%arg0: i32, %arg1: i32) -> (i32, i32, i32) {
    %c0_i32 = arith.constant 0 : i32
    %c0_i32_0 = arith.constant 0 : i32
    %c0_i32_1 = arith.constant 0 : i32
    return %arg1, %c0_i32, %c0_i32_0 : i32, i32, i32
  }
  func.func @transform_6(%arg0: i32, %arg1: i32) -> (i32, i32, i32) {
    %c0_i32 = arith.constant 0 : i32
    %c0_i32_0 = arith.constant 0 : i32
    %c0_i32_1 = arith.constant 0 : i32
    return %arg1, %c0_i32, %c0_i32_0 : i32, i32, i32
  }
  func.func @transform_7(%arg0: i32, %arg1: i32) -> (i32, i32, i32) {
    %c0_i32 = arith.constant 0 : i32
    %c0_i32_0 = arith.constant 0 : i32
    %c0_i32_1 = arith.constant 0 : i32
    return %arg1, %c0_i32, %c0_i32_0 : i32, i32, i32
  }
  func.func @transform_8(%arg0: i32, %arg1: i32) -> (i32, i32, i32) {
    %c0_i32 = arith.constant 0 : i32
    %c0_i32_0 = arith.constant 0 : i32
    %c0_i32_1 = arith.constant 0 : i32
    return %arg1, %c0_i32, %c0_i32_0 : i32, i32, i32
  }
  func.func @transform_9(%arg0: i32, %arg1: i32) -> (i32, i32) {
    %c0_i32 = arith.constant 0 : i32
    %c0_i32_0 = arith.constant 0 : i32
    %c0_i32_1 = arith.constant 0 : i32
    return %c0_i32, %c0_i32_0 : i32, i32
  }
  func.func @transform_10(%arg0: i32, %arg1: i32) -> (i32, i32) {
    %c0_i32 = arith.constant 0 : i32
    %c0_i32_0 = arith.constant 0 : i32
    %c0_i32_1 = arith.constant 0 : i32
    return %c0_i32, %c0_i32_0 : i32, i32
  }
  func.func @transform_11(%arg0: i32, %arg1: i32) -> (i32, i32, i32) {
    %c0_i32 = arith.constant 0 : i32
    %c0_i32_0 = arith.constant 0 : i32
    %c0_i32_1 = arith.constant 0 : i32
    return %arg0, %c0_i32, %c0_i32_0 : i32, i32, i32
  }
}

</mosaic_0001>

<llo_original>
// kernel: tpu_custom_call.1
$region0: #{tpu_custom_call.1}
  #allocation0 [shape = 'u32[]', space=smem, size = 0x4, offset = 0x4, fixed_abs, tag = 'smem constant byte address 0x4 - core index']
  #allocation1 [shape = 'u32[144,128]{1,0:T(1,128)}', space=vmem, size = 0x12000, scoped, tag = 'internal scratch']
  #allocation2 [shape = 'f32[16,32]{1,0:T(8,128)}', space=vmem, size = 0x2000, scoped, tag = 'scratch operand']
  %s0 = inlined_call_operand.vmem [shape: f32[2,16,8], index: 0, kind: input, shape index: {}]
  %s1 = inlined_call_operand.vmem [shape: bf16[16,32], index: 1, kind: input, shape index: {}]
  %s2 = inlined_call_operand.vmem [shape: f32[8,32], index: 2, kind: input, shape index: {}]
  %s3 = inlined_call_operand.vmem [shape: bf16[2,12,32,8], index: 3, kind: input, shape index: {}]
  %s4 = inlined_call_operand.vmem [shape: f32[2,12,8], index: 4, kind: input, shape index: {}]
  %s5 = inlined_call_operand.vmem [shape: bf16[2,32,32], index: 5, kind: input, shape index: {}]
  %s6 = inlined_call_operand.vmem [shape: bf16[2,32,128], index: 6, kind: input, shape index: {}]
  %s7 = inlined_call_operand.vmem [shape: bf16[2,128,32], index: 7, kind: input, shape index: {}]
  %s8 = inlined_call_operand.vmem [shape: f32[2,7,128], index: 8, kind: input, shape index: {}]
  %s9 = inlined_call_operand.vmem [shape: bf16[32,128], index: 9, kind: input, shape index: {}]
  %s10 = inlined_call_operand.vmem [shape: f32[4,128], index: 10, kind: input, shape index: {}]
  %s11 = inlined_call_operand.hbm [shape: f32[2,8,128], index: 11, kind: output, shape index: {}]
  %s12 = sld [smem:[#allocation0]]
  $region85: #{tpu_custom_call.1} parent=0
    _
  %s14 = ssub.s32 1, %s12
  %s15 = scalar_select 0, %s14, %s12
  $region1: #{tpu_custom_call.1} parent=0
    #allocation3 [shape = 'u8[8192]{0}', space=vmem, size = 0x2000, scoped, tag = 'output window, operand 0, single buffered']
    #allocation4 [shape = 's32[2]{0}', space=sflag, size = 0x8, scoped, tag = 'scoped memory for tpu_custom_call.1']
    %16 = vsyncpa [#allocation4], 0
    loop: start=0, step=1, limit=4
    $region2: #{tpu_custom_call.1} parent=1 // loop_pre_header
      _
    $region3: #{tpu_custom_call.1} parent=1 // loop_header
      %s18 = sphi 0, %s22
      %p19 = scmp.ge.s32.totalorder %s18, 4
      %s25 = sphi 0, %s37
      %s26 = sphi 0, %s33
      %s27 = sphi 0, %s25
      %s28 = sphi 0, %s26
      %s29 = sphi 0, %s27
      %s30 = sphi 0, %s28
      %s40 = sphi 0, %s42
      %s43 = sphi 0, %s40
      %s44 = sphi 0, %s43
      %s60 = sphi 0, %s44
      %s64 = sphi 0, %s64
      %s66 = sphi 0, %s64
      %s67 = sphi 0, %s66
      %s81 = sphi 0, %s67
      %s85 = sphi 0, %s85
      %s87 = sphi 0, %s85
      %s88 = sphi 0, %s87
      %s102 = sphi 0, %s88
      %s108 = sphi 0, %s110
      %s111 = sphi 0, %s108
      %s112 = sphi 0, %s111
      %s128 = sphi 0, %s112
      %s134 = sphi 0, %s136
      %s137 = sphi 0, %s134
      %s138 = sphi 0, %s137
      %s154 = sphi 0, %s138
      %s160 = sphi 0, %s162
      %s163 = sphi 0, %s160
      %s164 = sphi 0, %s163
      %s180 = sphi 0, %s164
      %s186 = sphi 0, %s188
      %s189 = sphi 0, %s186
      %s190 = sphi 0, %s189
      %s206 = sphi 0, %s190
      %s212 = sphi 0, %s214
      %s215 = sphi 0, %s212
      %s216 = sphi 0, %s215
      %s232 = sphi 0, %s216
      %s238 = sphi 0, %s240
      %s241 = sphi 0, %s238
      %s242 = sphi 0, %s241
      %s258 = sphi 0, %s242
      %s262 = sphi 0, %s262
      %s264 = sphi 0, %s262
      %s265 = sphi 0, %s264
      %s279 = sphi 0, %s265
      %s283 = sphi 0, %s283
      %s285 = sphi 0, %s283
      %s286 = sphi 0, %s285
      %s300 = sphi 0, %s286
      %s306 = sphi 0, %s308
      %s309 = sphi 0, %s306
      %s310 = sphi 0, %s309
      %s326 = sphi 0, %s310
    $region4: #{tpu_custom_call.1} parent=1 // loop_header_branch
      %21 = sbr.rel (%p19) target = $region8
    $region5: #{tpu_custom_call.1} parent=1 // loop_body
      %s23 = ssub.s32 %s18, 1
      %s24 = ssub.s32 %s18, 2
      %s31 = sadd.s32 1, %s26
      %p32 = scmp.ge.s32.totalorder %s31, 2
      %s33 = scalar_select %p32, 0, %s31
      %s34 = sadd.s32 1, %s25
      %s35 = scalar_select %p32, %s34, %s25
      %p36 = scmp.ge.s32.totalorder %s35, 1
      %s37 = scalar_select %p36, 0, %s35
      %s38 = ssub.s32 %s25, %s37
      %p39 = scmp.eq.s32.totalorder %s38, 0
      %s41 = sadd.s32 %s40, 1
      %s42 = scalar_select %p39, %s40, %s41
      %p45 = pneg %p39
      %p46 = scmp.eq.s32.totalorder %s18, 1
      %p47 = por %p45, %p46
      %p48 = scmp.ne.s32.totalorder %s40, %s43
      %p49 = scmp.eq.s32.totalorder %s18, 0
      %p50 = por %p48, %p49
      %p51 = scmp.ne.s32.totalorder %s40, %s43
      %p52 = scmp.eq.s32.totalorder %s23, 1
      %p53 = por %p51, %p52
      %p54 = scmp.ne.s32.totalorder %s43, %s44
      %p55 = scmp.eq.s32.totalorder %s23, 0
      %p56 = por %p54, %p55
      %p57 = scmp.ne.s32.totalorder %s43, %s44
      %p58 = scmp.eq.s32.totalorder %s24, 1
      %p59 = por %p57, %p58
      %p61 = scmp.ne.s32.totalorder %s44, %s60
      %p62 = scmp.eq.s32.totalorder %s24, 0
      %p63 = por %p61, %p62
      %s65 = sadd.s32 %s64, 1
      %p68 = scmp.eq.s32.totalorder %s18, 1
      %p69 = scmp.ne.s32.totalorder %s64, %s66
      %p70 = scmp.eq.s32.totalorder %s18, 0
      %p71 = por %p69, %p70
      %p72 = scmp.ne.s32.totalorder %s64, %s66
      %p73 = scmp.eq.s32.totalorder %s23, 1
      %p74 = por %p72, %p73
      %p75 = scmp.ne.s32.totalorder %s66, %s67
      %p76 = scmp.eq.s32.totalorder %s23, 0
      %p77 = por %p75, %p76
      %p78 = scmp.ne.s32.totalorder %s66, %s67
      %p79 = scmp.eq.s32.totalorder %s24, 1
      %p80 = por %p78, %p79
      %p82 = scmp.ne.s32.totalorder %s67, %s81
      %p83 = scmp.eq.s32.totalorder %s24, 0
      %p84 = por %p82, %p83
      %s86 = sadd.s32 %s85, 1
      %p89 = scmp.eq.s32.totalorder %s18, 1
      %p90 = scmp.ne.s32.totalorder %s85, %s87
      %p91 = scmp.eq.s32.totalorder %s18, 0
      %p92 = por %p90, %p91
      %p93 = scmp.ne.s32.totalorder %s85, %s87
      %p94 = scmp.eq.s32.totalorder %s23, 1
      %p95 = por %p93, %p94
      %p96 = scmp.ne.s32.totalorder %s87, %s88
      %p97 = scmp.eq.s32.totalorder %s23, 0
      %p98 = por %p96, %p97
      %p99 = scmp.ne.s32.totalorder %s87, %s88
      %p100 = scmp.eq.s32.totalorder %s24, 1
      %p101 = por %p99, %p100
      %p103 = scmp.ne.s32.totalorder %s88, %s102
      %p104 = scmp.eq.s32.totalorder %s24, 0
      %p105 = por %p103, %p104
      %s106 = ssub.s32 %s26, %s33
      %p107 = scmp.eq.s32.totalorder %s106, 0
      %s109 = sadd.s32 %s108, 1
      %s110 = scalar_select %p107, %s108, %s109
      %p113 = pneg %p107
      %p114 = scmp.eq.s32.totalorder %s18, 1
      %p115 = por %p113, %p114
      %p116 = scmp.ne.s32.totalorder %s108, %s111
      %p117 = scmp.eq.s32.totalorder %s18, 0
      %p118 = por %p116, %p117
      %p119 = scmp.ne.s32.totalorder %s108, %s111
      %p120 = scmp.eq.s32.totalorder %s23, 1
      %p121 = por %p119, %p120
      %p122 = scmp.ne.s32.totalorder %s111, %s112
      %p123 = scmp.eq.s32.totalorder %s23, 0
      %p124 = por %p122, %p123
      %p125 = scmp.ne.s32.totalorder %s111, %s112
      %p126 = scmp.eq.s32.totalorder %s24, 1
      %p127 = por %p125, %p126
      %p129 = scmp.ne.s32.totalorder %s112, %s128
      %p130 = scmp.eq.s32.totalorder %s24, 0
      %p131 = por %p129, %p130
      %s132 = ssub.s32 %s26, %s33
      %p133 = scmp.eq.s32.totalorder %s132, 0
      %s135 = sadd.s32 %s134, 1
      %s136 = scalar_select %p133, %s134, %s135
      %p139 = pneg %p133
      %p140 = scmp.eq.s32.totalorder %s18, 1
      %p141 = por %p139, %p140
      %p142 = scmp.ne.s32.totalorder %s134, %s137
      %p143 = scmp.eq.s32.totalorder %s18, 0
      %p144 = por %p142, %p143
      %p145 = scmp.ne.s32.totalorder %s134, %s137
      %p146 = scmp.eq.s32.totalorder %s23, 1
      %p147 = por %p145, %p146
      %p148 = scmp.ne.s32.totalorder %s137, %s138
      %p149 = scmp.eq.s32.totalorder %s23, 0
      %p150 = por %p148, %p149
      %p151 = scmp.ne.s32.totalorder %s137, %s138
      %p152 = scmp.eq.s32.totalorder %s24, 1
      %p153 = por %p151, %p152
      %p155 = scmp.ne.s32.totalorder %s138, %s154
      %p156 = scmp.eq.s32.totalorder %s24, 0
      %p157 = por %p155, %p156
      %s158 = ssub.s32 %s26, %s33
      %p159 = scmp.eq.s32.totalorder %s158, 0
      %s161 = sadd.s32 %s160, 1
      %s162 = scalar_select %p159, %s160, %s161
      %p165 = pneg %p159
      %p166 = scmp.eq.s32.totalorder %s18, 1
      %p167 = por %p165, %p166
      %p168 = scmp.ne.s32.totalorder %s160, %s163
      %p169 = scmp.eq.s32.totalorder %s18, 0
      %p170 = por %p168, %p169
      %p171 = scmp.ne.s32.totalorder %s160, %s163
      %p172 = scmp.eq.s32.totalorder %s23, 1
      %p173 = por %p171, %p172
      %p174 = scmp.ne.s32.totalorder %s163, %s164
      %p175 = scmp.eq.s32.totalorder %s23, 0
      %p176 = por %p174, %p175
      %p177 = scmp.ne.s32.totalorder %s163, %s164
      %p178 = scmp.eq.s32.totalorder %s24, 1
      %p179 = por %p177, %p178
      %p181 = scmp.ne.s32.totalorder %s164, %s180
      %p182 = scmp.eq.s32.totalorder %s24, 0
      %p183 = por %p181, %p182
      %s184 = ssub.s32 %s26, %s33
      %p185 = scmp.eq.s32.totalorder %s184, 0
      %s187 = sadd.s32 %s186, 1
      %s188 = scalar_select %p185, %s186, %s187
      %p191 = pneg %p185
      %p192 = scmp.eq.s32.totalorder %s18, 1
      %p193 = por %p191, %p192
      %p194 = scmp.ne.s32.totalorder %s186, %s189
      %p195 = scmp.eq.s32.totalorder %s18, 0
      %p196 = por %p194, %p195
      %p197 = scmp.ne.s32.totalorder %s186, %s189
      %p198 = scmp.eq.s32.totalorder %s23, 1
      %p199 = por %p197, %p198
      %p200 = scmp.ne.s32.totalorder %s189, %s190
      %p201 = scmp.eq.s32.totalorder %s23, 0
      %p202 = por %p200, %p201
      %p203 = scmp.ne.s32.totalorder %s189, %s190
      %p204 = scmp.eq.s32.totalorder %s24, 1
      %p205 = por %p203, %p204
      %p207 = scmp.ne.s32.totalorder %s190, %s206
      %p208 = scmp.eq.s32.totalorder %s24, 0
      %p209 = por %p207, %p208
      %s210 = ssub.s32 %s26, %s33
      %p211 = scmp.eq.s32.totalorder %s210, 0
      %s213 = sadd.s32 %s212, 1
      %s214 = scalar_select %p211, %s212, %s213
      %p217 = pneg %p211
      %p218 = scmp.eq.s32.totalorder %s18, 1
      %p219 = por %p217, %p218
      %p220 = scmp.ne.s32.totalorder %s212, %s215
      %p221 = scmp.eq.s32.totalorder %s18, 0
      %p222 = por %p220, %p221
      %p223 = scmp.ne.s32.totalorder %s212, %s215
      %p224 = scmp.eq.s32.totalorder %s23, 1
      %p225 = por %p223, %p224
      %p226 = scmp.ne.s32.totalorder %s215, %s216
      %p227 = scmp.eq.s32.totalorder %s23, 0
      %p228 = por %p226, %p227
      %p229 = scmp.ne.s32.totalorder %s215, %s216
      %p230 = scmp.eq.s32.totalorder %s24, 1
      %p231 = por %p229, %p230
      %p233 = scmp.ne.s32.totalorder %s216, %s232
      %p234 = scmp.eq.s32.totalorder %s24, 0
      %p235 = por %p233, %p234
      %s236 = ssub.s32 %s26, %s33
      %p237 = scmp.eq.s32.totalorder %s236, 0
      %s239 = sadd.s32 %s238, 1
      %s240 = scalar_select %p237, %s238, %s239
      %p243 = pneg %p237
      %p244 = scmp.eq.s32.totalorder %s18, 1
      %p245 = por %p243, %p244
      %p246 = scmp.ne.s32.totalorder %s238, %s241
      %p247 = scmp.eq.s32.totalorder %s18, 0
      %p248 = por %p246, %p247
      %p249 = scmp.ne.s32.totalorder %s238, %s241
      %p250 = scmp.eq.s32.totalorder %s23, 1
      %p251 = por %p249, %p250
      %p252 = scmp.ne.s32.totalorder %s241, %s242
      %p253 = scmp.eq.s32.totalorder %s23, 0
      %p254 = por %p252, %p253
      %p255 = scmp.ne.s32.totalorder %s241, %s242
      %p256 = scmp.eq.s32.totalorder %s24, 1
      %p257 = por %p255, %p256
      %p259 = scmp.ne.s32.totalorder %s242, %s258
      %p260 = scmp.eq.s32.totalorder %s24, 0
      %p261 = por %p259, %p260
      %s263 = sadd.s32 %s262, 1
      %p266 = scmp.eq.s32.totalorder %s18, 1
      %p267 = scmp.ne.s32.totalorder %s262, %s264
      %p268 = scmp.eq.s32.totalorder %s18, 0
      %p269 = por %p267, %p268
      %p270 = scmp.ne.s32.totalorder %s262, %s264
      %p271 = scmp.eq.s32.totalorder %s23, 1
      %p272 = por %p270, %p271
      %p273 = scmp.ne.s32.totalorder %s264, %s265
      %p274 = scmp.eq.s32.totalorder %s23, 0
      %p275 = por %p273, %p274
      %p276 = scmp.ne.s32.totalorder %s264, %s265
      %p277 = scmp.eq.s32.totalorder %s24, 1
      %p278 = por %p276, %p277
      %p280 = scmp.ne.s32.totalorder %s265, %s279
      %p281 = scmp.eq.s32.totalorder %s24, 0
      %p282 = por %p280, %p281
      %s284 = sadd.s32 %s283, 1
      %p287 = scmp.eq.s32.totalorder %s18, 1
      %p288 = scmp.ne.s32.totalorder %s283, %s285
      %p289 = scmp.eq.s32.totalorder %s18, 0
      %p290 = por %p288, %p289
      %p291 = scmp.ne.s32.totalorder %s283, %s285
      %p292 = scmp.eq.s32.totalorder %s23, 1
      %p293 = por %p291, %p292
      %p294 = scmp.ne.s32.totalorder %s285, %s286
      %p295 = scmp.eq.s32.totalorder %s23, 0
      %p296 = por %p294, %p295
      %p297 = scmp.ne.s32.totalorder %s285, %s286
      %p298 = scmp.eq.s32.totalorder %s24, 1
      %p299 = por %p297, %p298
      %p301 = scmp.ne.s32.totalorder %s286, %s300
      %p302 = scmp.eq.s32.totalorder %s24, 0
      %p303 = por %p301, %p302
      %s304 = ssub.s32 %s25, %s37
      %p305 = scmp.eq.s32.totalorder %s304, 0
      %s307 = sadd.s32 %s306, 1
      %s308 = scalar_select %p305, %s306, %s307
      %p311 = pneg %p305
      %p312 = scmp.eq.s32.totalorder %s18, 1
      %p313 = por %p311, %p312
      %p314 = scmp.ne.s32.totalorder %s306, %s309
      %p315 = scmp.eq.s32.totalorder %s18, 0
      %p316 = por %p314, %p315
      %p317 = scmp.ne.s32.totalorder %s306, %s309
      %p318 = scmp.eq.s32.totalorder %s23, 1
      %p319 = por %p317, %p318
      %p320 = scmp.ne.s32.totalorder %s309, %s310
      %p321 = scmp.eq.s32.totalorder %s23, 0
      %p322 = por %p320, %p321
      %p323 = scmp.ne.s32.totalorder %s309, %s310
      %p324 = scmp.eq.s32.totalorder %s24, 1
      %p325 = por %p323, %p324
      %p327 = scmp.ne.s32.totalorder %s310, %s326
      %p328 = scmp.eq.s32.totalorder %s24, 0
      %p329 = por %p327, %p328
      %p330 = scmp.le.s32.totalorder 1, %s18
      %p331 = scmp.lt.s32.totalorder %s18, 3
      %p332 = pnand %p330, %p331
      %p333 = pneg %p332
      // Predicated region
      $region9: #{tpu_custom_call.1} parent=5 // pred_check
        _
      $region10: #{tpu_custom_call.1} parent=5 // pred_check_branch
        %335 = sbr.rel (%p332) target = $region12
      $region11: #{tpu_custom_call.1} parent=5 // pred_region
        %s336 = ssub.s32 %s18, 1
        // Predicated region
        $region13: #{tpu_custom_call.1} parent=11 // pred_check
          %p337 = pneg %p56
        $region14: #{tpu_custom_call.1} parent=11 // pred_check_branch
          %339 = sbr.rel (%p337) target = $region16
        $region15: #{tpu_custom_call.1} parent=11 // pred_region
          %s340 = smul.u32 2, %s27
          %p341 = scmp.lt.s32.totalorder %s340, 1
          %s342 = scalar_select %p341, %s340, 1
          %s343 = smul.addr %s342, 2
          %s344 = smul.addr %s343, 8
          %s345 = scalar_lea.vmem %s0, %s344
          %s346 = smul.u32 2, %s27
        $region16: #{tpu_custom_call.1} parent=11 // pred_fallthru
          _
        // Predicated region
        $region17: #{tpu_custom_call.1} parent=11 // pred_check
          %p347 = pneg %p77
        $region18: #{tpu_custom_call.1} parent=11 // pred_check_branch
          %349 = sbr.rel (%p347) target = $region20
        $region19: #{tpu_custom_call.1} parent=11 // pred_region
          _
        $region20: #{tpu_custom_call.1} parent=11 // pred_fallthru
          _
        // Predicated region
        $region21: #{tpu_custom_call.1} parent=11 // pred_check
          %p350 = pneg %p98
        $region22: #{tpu_custom_call.1} parent=11 // pred_check_branch
          %352 = sbr.rel (%p350) target = $region24
        $region23: #{tpu_custom_call.1} parent=11 // pred_region
          _
        $region24: #{tpu_custom_call.1} parent=11 // pred_fallthru
          _
        // Predicated region
        $region25: #{tpu_custom_call.1} parent=11 // pred_check
          %p353 = pneg %p275
        $region26: #{tpu_custom_call.1} parent=11 // pred_check_branch
          %355 = sbr.rel (%p353) target = $region28
        $region27: #{tpu_custom_call.1} parent=11 // pred_region
          _
        $region28: #{tpu_custom_call.1} parent=11 // pred_fallthru
          _
        // Predicated region
        $region29: #{tpu_custom_call.1} parent=11 // pred_check
          %p356 = pneg %p296
        $region30: #{tpu_custom_call.1} parent=11 // pred_check_branch
          %358 = sbr.rel (%p356) target = $region32
        $region31: #{tpu_custom_call.1} parent=11 // pred_region
          _
        $region32: #{tpu_custom_call.1} parent=11 // pred_fallthru
          _
      $region12: #{tpu_custom_call.1} parent=5 // pred_fallthru
        _
      %p359 = scmp.lt.s32.totalorder %s18, 2
      // Predicated region
      $region33: #{tpu_custom_call.1} parent=5 // pred_check
        %p360 = pneg %p359
      $region34: #{tpu_custom_call.1} parent=5 // pred_check_branch
        %362 = sbr.rel (%p360) target = $region36
      $region35: #{tpu_custom_call.1} parent=5 // pred_region
        // Predicated region
        $region37: #{tpu_custom_call.1} parent=35 // pred_check
          %p363 = pneg %p118
        $region38: #{tpu_custom_call.1} parent=35 // pred_check_branch
          %365 = sbr.rel (%p363) target = $region40
        $region39: #{tpu_custom_call.1} parent=35 // pred_region
          %p366 = scmp.lt.s32.totalorder %s26, 1
          %s367 = scalar_select %p366, %s26, 1
          %s368 = smul.addr %s367, 48
          %s369 = smul.addr %s368, 4
          %s370 = scalar_lea.vmem %s3, %s369
        $region40: #{tpu_custom_call.1} parent=35 // pred_fallthru
          _
        // Predicated region
        $region41: #{tpu_custom_call.1} parent=35 // pred_check
          %p371 = pneg %p144
        $region42: #{tpu_custom_call.1} parent=35 // pred_check_branch
          %373 = sbr.rel (%p371) target = $region44
        $region43: #{tpu_custom_call.1} parent=35 // pred_region
          %p374 = scmp.lt.s32.totalorder %s26, 1
          %s375 = scalar_select %p374, %s26, 1
          %s376 = smul.addr %s375, 2
          %s377 = smul.addr %s376, 8
          %s378 = scalar_lea.vmem %s4, %s377
        $region44: #{tpu_custom_call.1} parent=35 // pred_fallthru
          _
        // Predicated region
        $region45: #{tpu_custom_call.1} parent=35 // pred_check
          %p379 = pneg %p170
        $region46: #{tpu_custom_call.1} parent=35 // pred_check_branch
          %381 = sbr.rel (%p379) target = $region48
        $region47: #{tpu_custom_call.1} parent=35 // pred_region
          %p382 = scmp.lt.s32.totalorder %s26, 1
          %s383 = scalar_select %p382, %s26, 1
          %s384 = smul.addr %s383, 4
          %s385 = smul.addr %s384, 4
          %s386 = scalar_lea.vmem %s5, %s385
        $region48: #{tpu_custom_call.1} parent=35 // pred_fallthru
          _
        // Predicated region
        $region49: #{tpu_custom_call.1} parent=35 // pred_check
          %p387 = pneg %p196
        $region50: #{tpu_custom_call.1} parent=35 // pred_check_branch
          %389 = sbr.rel (%p387) target = $region52
        $region51: #{tpu_custom_call.1} parent=35 // pred_region
          %p390 = scmp.lt.s32.totalorder %s26, 1
          %s391 = scalar_select %p390, %s26, 1
          %s392 = smul.addr %s391, 4
          %s393 = smul.addr %s392, 4
          %s394 = scalar_lea.vmem %s6, %s393
        $region52: #{tpu_custom_call.1} parent=35 // pred_fallthru
          _
        // Predicated region
        $region53: #{tpu_custom_call.1} parent=35 // pred_check
          %p395 = pneg %p222
        $region54: #{tpu_custom_call.1} parent=35 // pred_check_branch
          %397 = sbr.rel (%p395) target = $region56
        $region55: #{tpu_custom_call.1} parent=35 // pred_region
          %p398 = scmp.lt.s32.totalorder %s26, 1
          %s399 = scalar_select %p398, %s26, 1
          %s400 = smul.addr %s399, 16
          %s401 = smul.addr %s400, 4
          %s402 = scalar_lea.vmem %s7, %s401
        $region56: #{tpu_custom_call.1} parent=35 // pred_fallthru
          _
        // Predicated region
        $region57: #{tpu_custom_call.1} parent=35 // pred_check
          %p403 = pneg %p248
        $region58: #{tpu_custom_call.1} parent=35 // pred_check_branch
          %405 = sbr.rel (%p403) target = $region60
        $region59: #{tpu_custom_call.1} parent=35 // pred_region
          %p406 = scmp.lt.s32.totalorder %s26, 1
          %s407 = scalar_select %p406, %s26, 1
          %s408 = smul.addr %s407, 8
          %s409 = scalar_lea.vmem %s8, %s408
        $region60: #{tpu_custom_call.1} parent=35 // pred_fallthru
          _
      $region36: #{tpu_custom_call.1} parent=5 // pred_fallthru
        _
      %p410 = scmp.le.s32.totalorder 1, %s18
      %p411 = scmp.lt.s32.totalorder %s18, 3
      %p412 = pnand %p410, %p411
      %p413 = pneg %p412
      // Predicated region
      $region61: #{tpu_custom_call.1} parent=5 // pred_check
        _
      $region62: #{tpu_custom_call.1} parent=5 // pred_check_branch
        %415 = sbr.rel (%p412) target = $region64
      $region63: #{tpu_custom_call.1} parent=5 // pred_region
        %s416 = ssub.s32 %s18, 1
        %s417 = smul.u32 2, %s27
        %p418 = scmp.lt.s32.totalorder %s417, 1
        %s419 = scalar_select %p418, %s417, 1
        %s420 = smul.addr %s419, 2
        %s421 = smul.addr %s420, 8
        %s422 = scalar_lea.vmem %s0, %s421
        %p423 = pneg %p56
        %p424 = pneg %p53
        %p425 = pneg %p77
        %p426 = pneg %p74
        %p427 = pneg %p98
        %p428 = pneg %p95
        %p429 = scmp.lt.s32.totalorder %s28, 1
        %s430 = scalar_select %p429, %s28, 1
        %s431 = smul.addr %s430, 48
        %s432 = smul.addr %s431, 4
        %s433 = scalar_lea.vmem %s3, %s432
        %p434 = pneg %p124
        %p435 = pneg %p121
        %p436 = scmp.lt.s32.totalorder %s28, 1
        %s437 = scalar_select %p436, %s28, 1
        %s438 = smul.addr %s437, 2
        %s439 = smul.addr %s438, 8
        %s440 = scalar_lea.vmem %s4, %s439
        %p441 = pneg %p150
        %p442 = pneg %p147
        %p443 = scmp.lt.s32.totalorder %s28, 1
        %s444 = scalar_select %p443, %s28, 1
        %s445 = smul.addr %s444, 4
        %s446 = smul.addr %s445, 4
        %s447 = scalar_lea.vmem %s5, %s446
        %p448 = pneg %p176
        %p449 = pneg %p173
        %p450 = scmp.lt.s32.totalorder %s28, 1
        %s451 = scalar_select %p450, %s28, 1
        %s452 = smul.addr %s451, 4
        %s453 = smul.addr %s452, 4
        %s454 = scalar_lea.vmem %s6, %s453
        %p455 = pneg %p202
        %p456 = pneg %p199
        %p457 = scmp.lt.s32.totalorder %s28, 1
        %s458 = scalar_select %p457, %s28, 1
        %s459 = smul.addr %s458, 16
        %s460 = smul.addr %s459, 4
        %s461 = scalar_lea.vmem %s7, %s460
        %p462 = pneg %p228
        %p463 = pneg %p225
        %p464 = scmp.lt.s32.totalorder %s28, 1
        %s465 = scalar_select %p464, %s28, 1
        %s466 = smul.addr %s465, 8
        %s467 = scalar_lea.vmem %s8, %s466
        %p468 = pneg %p254
        %p469 = pneg %p251
        %p470 = pneg %p275
        %p471 = pneg %p272
        %p472 = pneg %p296
        %p473 = pneg %p293
        %p474 = pneg %p322
        %p475 = pneg %p319
        %s476 = smul.u32 2, %s27
        %p477 = scmp.lt.s32.totalorder %s476, 1
        %s478 = scalar_select %p477, %s476, 1
        %s479 = smul.addr %s478, 2
        %s480 = smul.addr %s479, 8
        %s481 = scalar_lea.vmem %s0, %s480
        %s482 = smul.u32 2, %s27
        %p483 = scmp.lt.s32.totalorder %s28, 1
        %s484 = scalar_select %p483, %s28, 1
        %s485 = smul.addr %s484, 48
        %s486 = smul.addr %s485, 4
        %s487 = scalar_lea.vmem %s3, %s486
        %p488 = scmp.lt.s32.totalorder %s28, 1
        %s489 = scalar_select %p488, %s28, 1
        %s490 = smul.addr %s489, 2
        %s491 = smul.addr %s490, 8
        %s492 = scalar_lea.vmem %s4, %s491
        %p493 = scmp.lt.s32.totalorder %s28, 1
        %s494 = scalar_select %p493, %s28, 1
        %s495 = smul.addr %s494, 4
        %s496 = smul.addr %s495, 4
        %s497 = scalar_lea.vmem %s5, %s496
        %p498 = scmp.lt.s32.totalorder %s28, 1
        %s499 = scalar_select %p498, %s28, 1
        %s500 = smul.addr %s499, 4
        %s501 = smul.addr %s500, 4
        %s502 = scalar_lea.vmem %s6, %s501
        %p503 = scmp.lt.s32.totalorder %s28, 1
        %s504 = scalar_select %p503, %s28, 1
        %s505 = smul.addr %s504, 16
        %s506 = smul.addr %s505, 4
        %s507 = scalar_lea.vmem %s7, %s506
        %p508 = scmp.lt.s32.totalorder %s28, 1
        %s509 = scalar_select %p508, %s28, 1
        %s510 = smul.addr %s509, 8
        %s511 = scalar_lea.vmem %s8, %s510
        %s512 = smul.u32 2, %s27
        %p514 = scmp.eq.s32.totalorder %s28, 0
        // Predicated region
        $region65: #{tpu_custom_call.1} parent=63 // pred_check
          %p515 = pneg %p514
        $region66: #{tpu_custom_call.1} parent=63 // pred_check_branch
          %517 = sbr.rel (%p515) target = $region68
        $region67: #{tpu_custom_call.1} parent=63 // pred_region
          %v518 = vld [vmem:[%s1] sm:$0xf]
          %v519 = vld [vmem:[%s1 + $0x4] sm:$0xf]
          %v520 = vld [vmem:[%s2] sm:$0xff]
          %v521 = vld [vmem:[%s481] sm:$0xff]
          %v522 = vld [vmem:[%s481 + $0x8] sm:$0xff]
          %v523 = vpack.c.bf16 %v522, %v521
          %524 = vxpose.xlu0.c.b16.start [1/8] %v523, 128
          %525 = vxpose.xlu0.c.b16.cont [2/8] 0, 128
          %526 = vxpose.xlu0.c.b16.cont [3/8] 0, 128
          %527 = vxpose.xlu0.c.b16.cont [4/8] 0, 128
          %528 = vxpose.xlu0.c.b16.cont [5/8] 0, 128
          %529 = vxpose.xlu0.c.b16.cont [6/8] 0, 128
          %530 = vxpose.xlu0.c.b16.cont [7/8] 0, 128
          %531 = vxpose.xlu0.c.b16.end [8/8] 0, 128
          %v532 = vpop.trf.xlu0
          %v533 = vpop.trf.xlu0
          %v534 = vpop.trf.xlu0
          %v535 = vpop.trf.xlu0
          %v536 = vpop.trf.xlu0
          %v537 = vpop.trf.xlu0
          %v538 = vpop.trf.xlu0
          %v539 = vpop.trf.xlu0
          %v542 = vunpack.c.l.b16 %v518
          %v543 = vunpack.c.l.b16 %v519
          %v544 = vpack.c.b16 %v543, %v542
          %vm546 = vcmask 130048
          %v548 = vsel %vm546, %v532, 0
          %550 = vmatprep.subr.bf16.mxu0 0
          %551 = vmatpush1.bf16.msra.mxu0 0
          %552 = vmatprep.subr.bf16.mxu0 0
          %553 = vmatpush1.bf16.msra.mxu0 0
          %554 = vmatprep.subr.bf16.mxu0 0
          %555 = vmatpush1.bf16.msra.mxu0 0
          %556 = vmatprep.subr.bf16.mxu0 0
          %557 = vmatpush1.bf16.msra.mxu0 0
          %558 = vmatprep.subr.bf16.mxu0 0
          %559 = vmatpush1.bf16.msra.mxu0 0
          %560 = vmatprep.subr.bf16.mxu0 0
          %561 = vmatpush1.bf16.msra.mxu0 0
          %562 = vmatprep.subr.bf16.mxu0 0
          %563 = vmatpush1.bf16.msra.mxu0 0
          %564 = vmatprep.subr.bf16.mxu0 0
          %565 = vmatpush1.bf16.msra.mxu0 %v544
          %566 = vmatprep.subr.bf16.mxu0 0
          %567 = vmatpush2.bf16.msra.mxu0 0
          %568 = vmatprep.subr.bf16.mxu0 0
          %569 = vmatpush2.bf16.msra.mxu0 0
          %570 = vmatprep.subr.bf16.mxu0 0
          %571 = vmatpush2.bf16.msra.mxu0 0
          %572 = vmatprep.subr.bf16.mxu0 0
          %573 = vmatpush2.bf16.msra.mxu0 0
          %574 = vmatprep.subr.bf16.mxu0 0
          %575 = vmatpush2.bf16.msra.mxu0 0
          %576 = vmatprep.subr.bf16.mxu0 0
          %577 = vmatpush2.bf16.msra.mxu0 0
          %578 = vmatprep.subr.bf16.mxu0 0
          %579 = vmatpush2.bf16.msra.mxu0 0
          %580 = vmatprep.subr.bf16.mxu0 0
          %581 = vmatpush2.bf16.msra.mxu0 0
          %582 = vmatprep.mubr.bf16.mxu0 0
          %583 = vmatmul.mubr.bf16.gmra.mxu0 %v548
          %v584 = vpop.f32.mrf.mxu0
          %v585 = vadd.f32 %v520, %v584
          %v586 = vpop.f32.mrf.mxu0
          %v587 = vpop.f32.mrf.mxu0
          %v588 = vpop.f32.mrf.mxu0
          %589 = vdwg.mxu0
          %vm590 = vcmask 261120
          %591 = vst.msk [vmem:[#allocation2] sm:$0xff] %vm590, %v585
          %s592 = scalar_lea.vmem %s481, 16
          %v593 = vld [vmem:[%s592] sm:$0xff]
          %v594 = vld [vmem:[%s592 + $0x8] sm:$0xff]
          %v595 = vpack.c.bf16 %v594, %v593
          %596 = vxpose.xlu0.c.b16.start [1/8] %v595, 128
          %597 = vxpose.xlu0.c.b16.cont [2/8] 0, 128
          %598 = vxpose.xlu0.c.b16.cont [3/8] 0, 128
          %599 = vxpose.xlu0.c.b16.cont [4/8] 0, 128
          %600 = vxpose.xlu0.c.b16.cont [5/8] 0, 128
          %601 = vxpose.xlu0.c.b16.cont [6/8] 0, 128
          %602 = vxpose.xlu0.c.b16.cont [7/8] 0, 128
          %603 = vxpose.xlu0.c.b16.end [8/8] 0, 128
          %v604 = vpop.trf.xlu0
          %v605 = vpop.trf.xlu0
          %v606 = vpop.trf.xlu0
          %v607 = vpop.trf.xlu0
          %v608 = vpop.trf.xlu0
          %v609 = vpop.trf.xlu0
          %v610 = vpop.trf.xlu0
          %v611 = vpop.trf.xlu0
          %v613 = vsel %vm546, %v604, 0
          %615 = vmatprep.subr.bf16.mxu0 0
          %616 = vmatpush1.bf16.msra.mxu0 0
          %617 = vmatprep.subr.bf16.mxu0 0
          %618 = vmatpush1.bf16.msra.mxu0 0
          %619 = vmatprep.subr.bf16.mxu0 0
          %620 = vmatpush1.bf16.msra.mxu0 0
          %621 = vmatprep.subr.bf16.mxu0 0
          %622 = vmatpush1.bf16.msra.mxu0 0
          %623 = vmatprep.subr.bf16.mxu0 0
          %624 = vmatpush1.bf16.msra.mxu0 0
          %625 = vmatprep.subr.bf16.mxu0 0
          %626 = vmatpush1.bf16.msra.mxu0 0
          %627 = vmatprep.subr.bf16.mxu0 0
          %628 = vmatpush1.bf16.msra.mxu0 0
          %629 = vmatprep.subr.bf16.mxu0 0
          %630 = vmatpush1.bf16.msra.mxu0 %v544
          %631 = vmatprep.subr.bf16.mxu0 0
          %632 = vmatpush2.bf16.msra.mxu0 0
          %633 = vmatprep.subr.bf16.mxu0 0
          %634 = vmatpush2.bf16.msra.mxu0 0
          %635 = vmatprep.subr.bf16.mxu0 0
          %636 = vmatpush2.bf16.msra.mxu0 0
          %637 = vmatprep.subr.bf16.mxu0 0
          %638 = vmatpush2.bf16.msra.mxu0 0
          %639 = vmatprep.subr.bf16.mxu0 0
          %640 = vmatpush2.bf16.msra.mxu0 0
          %641 = vmatprep.subr.bf16.mxu0 0
          %642 = vmatpush2.bf16.msra.mxu0 0
          %643 = vmatprep.subr.bf16.mxu0 0
          %644 = vmatpush2.bf16.msra.mxu0 0
          %645 = vmatprep.subr.bf16.mxu0 0
          %646 = vmatpush2.bf16.msra.mxu0 0
          %647 = vmatprep.mubr.bf16.mxu0 0
          %648 = vmatmul.mubr.bf16.gmra.mxu0 %v613
          %v649 = vpop.f32.mrf.mxu0
          %v650 = vadd.f32 %v520, %v649
          %v651 = vpop.f32.mrf.mxu0
          %v652 = vpop.f32.mrf.mxu0
          %v653 = vpop.f32.mrf.mxu0
          %654 = vdwg.mxu0
          %655 = vst.msk [vmem:[#allocation2 + $0x8] sm:$0xff] %vm590, %v650
        $region68: #{tpu_custom_call.1} parent=63 // pred_fallthru
          _
        %v656 = vld [vmem:[#allocation2] sm:$0xff]
        %v657 = vld [vmem:[#allocation2 + $0x8] sm:$0xff]
        %v658 = vpack.c.bf16 %v657, %v656
        %v659 = vld [vmem:[%s492] sm:$0xff]
        %v660 = vld [vmem:[%s492 + $0x8] sm:$0xf]
        %v661 = vld [vmem:[%s487] sm:$0xf]
        %v662 = vld [vmem:[%s487 + $0x4] sm:$0xf]
        %v663 = vld [vmem:[%s487 + $0x8] sm:$0xf]
        %v664 = vld [vmem:[%s487 + $0xc] sm:$0xf]
        %v665 = vlaneseq
        %v666 = vshrl.u32 %v665, 7
        %v667 = vsub.s32 0, %v666
        %v668 = vrot.slane %v659, %v667
        %v673 = vunpack.c.l.b16 %v661
        %v674 = vunpack.c.l.b16 %v662
        %v675 = vunpack.c.l.b16 %v663
        %v676 = vunpack.c.l.b16 %v664
        %v677 = vpack.c.b16 %v674, %v673
        %v678 = vpack.c.b16 %v676, %v675
        %vm681 = vcmask 261120
        %v683 = vsel %vm681, %v658, 0
        %685 = vmatprep.subr.bf16.mxu0 0
        %686 = vmatpush1.bf16.msra.mxu0 0
        %687 = vmatprep.subr.bf16.mxu0 0
        %688 = vmatpush1.bf16.msra.mxu0 0
        %689 = vmatprep.subr.bf16.mxu0 0
        %690 = vmatpush1.bf16.msra.mxu0 0
        %691 = vmatprep.subr.bf16.mxu0 0
        %692 = vmatpush1.bf16.msra.mxu0 0
        %693 = vmatprep.subr.bf16.mxu0 0
        %694 = vmatpush1.bf16.msra.mxu0 0
        %695 = vmatprep.subr.bf16.mxu0 0
        %696 = vmatpush1.bf16.msra.mxu0 0
        %697 = vmatprep.subr.bf16.mxu0 0
        %698 = vmatpush1.bf16.msra.mxu0 %v678
        %699 = vmatprep.subr.bf16.mxu0 0
        %700 = vmatpush1.bf16.msra.mxu0 %v677
        %701 = vmatprep.subr.bf16.mxu0 0
        %702 = vmatpush2.bf16.msra.mxu0 0
        %703 = vmatprep.subr.bf16.mxu0 0
        %704 = vmatpush2.bf16.msra.mxu0 0
        %705 = vmatprep.subr.bf16.mxu0 0
        %706 = vmatpush2.bf16.msra.mxu0 0
        %707 = vmatprep.subr.bf16.mxu0 0
        %708 = vmatpush2.bf16.msra.mxu0 0
        %709 = vmatprep.subr.bf16.mxu0 0
        %710 = vmatpush2.bf16.msra.mxu0 0
        %711 = vmatprep.subr.bf16.mxu0 0
        %712 = vmatpush2.bf16.msra.mxu0 0
        %713 = vmatprep.subr.bf16.mxu0 0
        %714 = vmatpush2.bf16.msra.mxu0 0
        %715 = vmatprep.subr.bf16.mxu0 0
        %716 = vmatpush2.bf16.msra.mxu0 0
        %717 = vmatprep.mubr.bf16.mxu0 0
        %718 = vmatmul.mubr.bf16.gmra.mxu0 %v683
        %v719 = vpop.f32.mrf.mxu0
        %v720 = vadd.f32 %v668, %v719
        %v721 = vpop.f32.mrf.mxu0
        %v722 = vpop.f32.mrf.mxu0
        %v723 = vadd.f32 %v668, %v722
        %v724 = vpop.f32.mrf.mxu0
        %725 = vdwg.mxu0
        %s726 = scalar_lea.vmem %s487, 64
        %v727 = vld [vmem:[%s726] sm:$0xf]
        %v728 = vld [vmem:[%s726 + $0x4] sm:$0xf]
        %v729 = vld [vmem:[%s726 + $0x8] sm:$0xf]
        %v730 = vld [vmem:[%s726 + $0xc] sm:$0xf]
        %v731 = vlaneseq
        %v732 = vshrl.u32 %v731, 7
        %v733 = vsub.s32 4, %v732
        %v734 = vrot.slane %v659, %v733
        %v739 = vunpack.c.l.b16 %v727
        %v740 = vunpack.c.l.b16 %v728
        %v741 = vunpack.c.l.b16 %v729
        %v742 = vunpack.c.l.b16 %v730
        %v743 = vpack.c.b16 %v740, %v739
        %v744 = vpack.c.b16 %v742, %v741
        %747 = vmatprep.subr.bf16.mxu0 0
        %748 = vmatpush1.bf16.msra.mxu0 0
        %749 = vmatprep.subr.bf16.mxu0 0
        %750 = vmatpush1.bf16.msra.mxu0 0
        %751 = vmatprep.subr.bf16.mxu0 0
        %752 = vmatpush1.bf16.msra.mxu0 0
        %753 = vmatprep.subr.bf16.mxu0 0
        %754 = vmatpush1.bf16.msra.mxu0 0
        %755 = vmatprep.subr.bf16.mxu0 0
        %756 = vmatpush1.bf16.msra.mxu0 0
        %757 = vmatprep.subr.bf16.mxu0 0
        %758 = vmatpush1.bf16.msra.mxu0 0
        %759 = vmatprep.subr.bf16.mxu0 0
        %760 = vmatpush1.bf16.msra.mxu0 %v744
        %761 = vmatprep.subr.bf16.mxu0 0
        %762 = vmatpush1.bf16.msra.mxu0 %v743
        %763 = vmatprep.subr.bf16.mxu0 0
        %764 = vmatpush2.bf16.msra.mxu0 0
        %765 = vmatprep.subr.bf16.mxu0 0
        %766 = vmatpush2.bf16.msra.mxu0 0
        %767 = vmatprep.subr.bf16.mxu0 0
        %768 = vmatpush2.bf16.msra.mxu0 0
        %769 = vmatprep.subr.bf16.mxu0 0
        %770 = vmatpush2.bf16.msra.mxu0 0
        %771 = vmatprep.subr.bf16.mxu0 0
        %772 = vmatpush2.bf16.msra.mxu0 0
        %773 = vmatprep.subr.bf16.mxu0 0
        %774 = vmatpush2.bf16.msra.mxu0 0
        %775 = vmatprep.subr.bf16.mxu0 0
        %776 = vmatpush2.bf16.msra.mxu0 0
        %777 = vmatprep.subr.bf16.mxu0 0
        %778 = vmatpush2.bf16.msra.mxu0 0
        %779 = vmatprep.mubr.bf16.mxu0 0
        %780 = vmatmul.mubr.bf16.gmra.mxu0 %v683
        %v781 = vpop.f32.mrf.mxu0
        %v782 = vadd.f32 %v734, %v781
        %v783 = vpop.f32.mrf.mxu0
        %v784 = vpop.f32.mrf.mxu0
        %v785 = vadd.f32 %v734, %v784
        %v786 = vpop.f32.mrf.mxu0
        %787 = vdwg.mxu0
        %s788 = scalar_lea.vmem %s487, 128
        %v789 = vld [vmem:[%s788] sm:$0xf]
        %v790 = vld [vmem:[%s788 + $0x4] sm:$0xf]
        %v791 = vld [vmem:[%s788 + $0x8] sm:$0xf]
        %v792 = vld [vmem:[%s788 + $0xc] sm:$0xf]
        %v793 = vlaneseq
        %v794 = vshrl.u32 %v793, 7
        %v795 = vsub.s32 0, %v794
        %v796 = vrot.slane %v660, %v795
        %v801 = vunpack.c.l.b16 %v789
        %v802 = vunpack.c.l.b16 %v790
        %v803 = vunpack.c.l.b16 %v791
        %v804 = vunpack.c.l.b16 %v792
        %v805 = vpack.c.b16 %v802, %v801
        %v806 = vpack.c.b16 %v804, %v803
        %809 = vmatprep.subr.bf16.mxu0 0
        %810 = vmatpush1.bf16.msra.mxu0 0
        %811 = vmatprep.subr.bf16.mxu0 0
        %812 = vmatpush1.bf16.msra.mxu0 0
        %813 = vmatprep.subr.bf16.mxu0 0
        %814 = vmatpush1.bf16.msra.mxu0 0
        %815 = vmatprep.subr.bf16.mxu0 0
        %816 = vmatpush1.bf16.msra.mxu0 0
        %817 = vmatprep.subr.bf16.mxu0 0
        %818 = vmatpush1.bf16.msra.mxu0 0
        %819 = vmatprep.subr.bf16.mxu0 0
        %820 = vmatpush1.bf16.msra.mxu0 0
        %821 = vmatprep.subr.bf16.mxu0 0
        %822 = vmatpush1.bf16.msra.mxu0 %v806
        %823 = vmatprep.subr.bf16.mxu0 0
        %824 = vmatpush1.bf16.msra.mxu0 %v805
        %825 = vmatprep.subr.bf16.mxu0 0
        %826 = vmatpush2.bf16.msra.mxu0 0
        %827 = vmatprep.subr.bf16.mxu0 0
        %828 = vmatpush2.bf16.msra.mxu0 0
        %829 = vmatprep.subr.bf16.mxu0 0
        %830 = vmatpush2.bf16.msra.mxu0 0
        %831 = vmatprep.subr.bf16.mxu0 0
        %832 = vmatpush2.bf16.msra.mxu0 0
        %833 = vmatprep.subr.bf16.mxu0 0
        %834 = vmatpush2.bf16.msra.mxu0 0
        %835 = vmatprep.subr.bf16.mxu0 0
        %836 = vmatpush2.bf16.msra.mxu0 0
        %837 = vmatprep.subr.bf16.mxu0 0
        %838 = vmatpush2.bf16.msra.mxu0 0
        %839 = vmatprep.subr.bf16.mxu0 0
        %840 = vmatpush2.bf16.msra.mxu0 0
        %841 = vmatprep.mubr.bf16.mxu0 0
        %842 = vmatmul.mubr.bf16.gmra.mxu0 %v683
        %v843 = vpop.f32.mrf.mxu0
        %v844 = vadd.f32 %v796, %v843
        %v845 = vpop.f32.mrf.mxu0
        %v846 = vpop.f32.mrf.mxu0
        %v847 = vadd.f32 %v796, %v846
        %v848 = vpop.f32.mrf.mxu0
        %849 = vdwg.mxu0
        %v850 = vmul.f32 %v720, 0.35355338
        %v851 = vmul.f32 %v723, 0.35355338
        %v852 = vpack.c.bf16 %v851, %v850
        %v854 = vunpack.c.l.b16 %v852
        %v855 = vunpack.c.h.b16 %v852
        %v856 = vpack.c.b16 %v854, %v854
        %v857 = vpack.c.b16 %v855, %v855
        %v858 = vpack.c.bf16 %v785, %v782
        %v860 = vunpack.c.l.b16 %v858
        %v861 = vunpack.c.h.b16 %v858
        %v862 = vpack.c.b16 %v860, %v860
        %v863 = vpack.c.b16 %v861, %v861
        %v864 = vpack.c.bf16 %v847, %v844
        %v866 = vunpack.c.l.b16 %v864
        %v867 = vunpack.c.h.b16 %v864
        %v868 = vpack.c.b16 %v866, %v866
        %v869 = vpack.c.b16 %v867, %v867
        %vm870 = vcmask 64512
        %v872 = vsel %vm870, %v856, 0
        %v875 = vsel %vm870, %v862, 0
        %877 = vmatprep.subr.bf16.mxu0 0
        %878 = vmatpush1.bf16.xpose.msra.mxu0 0
        %879 = vmatprep.subr.bf16.mxu0 0
        %880 = vmatpush1.bf16.xpose.msra.mxu0 0
        %881 = vmatprep.subr.bf16.mxu0 0
        %882 = vmatpush1.bf16.xpose.msra.mxu0 0
        %883 = vmatprep.subr.bf16.mxu0 0
        %884 = vmatpush1.bf16.xpose.msra.mxu0 0
        %885 = vmatprep.subr.bf16.mxu0 0
        %886 = vmatpush1.bf16.xpose.msra.mxu0 0
        %887 = vmatprep.subr.bf16.mxu0 0
        %888 = vmatpush1.bf16.xpose.msra.mxu0 0
        %889 = vmatprep.subr.bf16.mxu0 0
        %890 = vmatpush1.bf16.xpose.msra.mxu0 0
        %891 = vmatprep.subr.bf16.mxu0 0
        %892 = vmatpush1.bf16.xpose.msra.mxu0 %v875
        %893 = vmatprep.subr.bf16.mxu0 0
        %894 = vmatpush2.bf16.xpose.msra.mxu0 0
        %895 = vmatprep.subr.bf16.mxu0 0
        %896 = vmatpush2.bf16.xpose.msra.mxu0 0
        %897 = vmatprep.subr.bf16.mxu0 0
        %898 = vmatpush2.bf16.xpose.msra.mxu0 0
        %899 = vmatprep.subr.bf16.mxu0 0
        %900 = vmatpush2.bf16.xpose.msra.mxu0 0
        %901 = vmatprep.subr.bf16.mxu0 0
        %902 = vmatpush2.bf16.xpose.msra.mxu0 0
        %903 = vmatprep.subr.bf16.mxu0 0
        %904 = vmatpush2.bf16.xpose.msra.mxu0 0
        %905 = vmatprep.subr.bf16.mxu0 0
        %906 = vmatpush2.bf16.xpose.msra.mxu0 0
        %907 = vmatprep.subr.bf16.mxu0 0
        %908 = vmatpush2.bf16.xpose.msra.mxu0 0
        %909 = vmatprep.mubr.bf16.mxu0 0
        %910 = vmatmul.mubr.bf16.gmra.mxu0 %v872
        %v911 = vpop.f32.mrf.mxu0
        %v912 = vadd.f32 0.0, %v911
        %v913 = vpop.f32.mrf.mxu0
        %v914 = vpop.f32.mrf.mxu0
        %v915 = vpop.f32.mrf.mxu0
        %916 = vdwg.mxu0
        %v918 = vsel %vm870, %v857, 0
        %v921 = vsel %vm870, %v863, 0
        %923 = vmatprep.subr.bf16.mxu0 0
        %924 = vmatpush1.bf16.xpose.msra.mxu0 0
        %925 = vmatprep.subr.bf16.mxu0 0
        %926 = vmatpush1.bf16.xpose.msra.mxu0 0
        %927 = vmatprep.subr.bf16.mxu0 0
        %928 = vmatpush1.bf16.xpose.msra.mxu0 0
        %929 = vmatprep.subr.bf16.mxu0 0
        %930 = vmatpush1.bf16.xpose.msra.mxu0 0
        %931 = vmatprep.subr.bf16.mxu0 0
        %932 = vmatpush1.bf16.xpose.msra.mxu0 0
        %933 = vmatprep.subr.bf16.mxu0 0
        %934 = vmatpush1.bf16.xpose.msra.mxu0 0
        %935 = vmatprep.subr.bf16.mxu0 0
        %936 = vmatpush1.bf16.xpose.msra.mxu0 0
        %937 = vmatprep.subr.bf16.mxu0 0
        %938 = vmatpush1.bf16.xpose.msra.mxu0 %v921
        %939 = vmatprep.subr.bf16.mxu0 0
        %940 = vmatpush2.bf16.xpose.msra.mxu0 0
        %941 = vmatprep.subr.bf16.mxu0 0
        %942 = vmatpush2.bf16.xpose.msra.mxu0 0
        %943 = vmatprep.subr.bf16.mxu0 0
        %944 = vmatpush2.bf16.xpose.msra.mxu0 0
        %945 = vmatprep.subr.bf16.mxu0 0
        %946 = vmatpush2.bf16.xpose.msra.mxu0 0
        %947 = vmatprep.subr.bf16.mxu0 0
        %948 = vmatpush2.bf16.xpose.msra.mxu0 0
        %949 = vmatprep.subr.bf16.mxu0 0
        %950 = vmatpush2.bf16.xpose.msra.mxu0 0
        %951 = vmatprep.subr.bf16.mxu0 0
        %952 = vmatpush2.bf16.xpose.msra.mxu0 0
        %953 = vmatprep.subr.bf16.mxu0 0
        %954 = vmatpush2.bf16.xpose.msra.mxu0 0
        %955 = vmatprep.mubr.bf16.mxu0 0
        %956 = vmatmul.mubr.bf16.gmra.mxu0 %v918
        %v957 = vpop.f32.mrf.mxu0
        %v958 = vadd.f32 0.0, %v957
        %v959 = vpop.f32.mrf.mxu0
        %v960 = vpop.f32.mrf.mxu0
        %v961 = vpop.f32.mrf.mxu0
        %962 = vdwg.mxu0
        %v963 = vsel %vm870, %v912, -inf
        %964 = vmax.xlane.f32.xlu0 %v963
        %v965 = vpop.xlane.xlu0 %964
        %v966 = vsel %vm870, %v958, -inf
        %967 = vmax.xlane.f32.xlu0 %v966
        %v968 = vpop.xlane.xlu0 %967
        %v969 = vsub.f32 %v912, %v965
        %v970 = vsub.f32 %v958, %v968
        %v971 = vmul.f32 %v969, 1.442695
        %v972 = vpow.pop %v971
        %v973 = vmul.f32 %v970, 1.442695
        %v974 = vpow.pop %v973
        %v975 = vsel %vm870, %v972, 0.0
        %976 = vadd.xlane.f32.xlu0 %v975
        %v977 = vpop.xlane.xlu0 %976
        %v978 = vsel %vm870, %v974, 0.0
        %979 = vadd.xlane.f32.xlu0 %v978
        %v980 = vpop.xlane.xlu0 %979
        %v981 = vrcp.pop %v977
        %v982 = vrcp.pop %v980
        %v983 = vmul.f32 %v972, %v981
        %v984 = vmul.f32 %v974, %v982
        %v985 = vpack.c.bf16 %v983, %v983
        %v986 = vpack.c.bf16 %v984, %v984
        %v988 = vsel %vm870, %v985, 0
        %vm990 = vcmask 1043456
        %v992 = vsel %vm990, %v868, 0
        %994 = vmatprep.subr.bf16.mxu0 0
        %995 = vmatpush1.bf16.msra.mxu0 0
        %996 = vmatprep.subr.bf16.mxu0 0
        %997 = vmatpush1.bf16.msra.mxu0 0
        %998 = vmatprep.subr.bf16.mxu0 0
        %999 = vmatpush1.bf16.msra.mxu0 0
        %1000 = vmatprep.subr.bf16.mxu0 0
        %1001 = vmatpush1.bf16.msra.mxu0 0
        %1002 = vmatprep.subr.bf16.mxu0 0
        %1003 = vmatpush1.bf16.msra.mxu0 0
        %1004 = vmatprep.subr.bf16.mxu0 0
        %1005 = vmatpush1.bf16.msra.mxu0 0
        %1006 = vmatprep.subr.bf16.mxu0 0
        %1007 = vmatpush1.bf16.msra.mxu0 0
        %1008 = vmatprep.subr.bf16.mxu0 0
        %1009 = vmatpush1.bf16.msra.mxu0 %v992
        %1010 = vmatprep.subr.bf16.mxu0 0
        %1011 = vmatpush2.bf16.msra.mxu0 0
        %1012 = vmatprep.subr.bf16.mxu0 0
        %1013 = vmatpush2.bf16.msra.mxu0 0
        %1014 = vmatprep.subr.bf16.mxu0 0
        %1015 = vmatpush2.bf16.msra.mxu0 0
        %1016 = vmatprep.subr.bf16.mxu0 0
        %1017 = vmatpush2.bf16.msra.mxu0 0
        %1018 = vmatprep.subr.bf16.mxu0 0
        %1019 = vmatpush2.bf16.msra.mxu0 0
        %1020 = vmatprep.subr.bf16.mxu0 0
        %1021 = vmatpush2.bf16.msra.mxu0 0
        %1022 = vmatprep.subr.bf16.mxu0 0
        %1023 = vmatpush2.bf16.msra.mxu0 0
        %1024 = vmatprep.subr.bf16.mxu0 0
        %1025 = vmatpush2.bf16.msra.mxu0 0
        %1026 = vmatprep.mubr.bf16.mxu0 0
        %1027 = vmatmul.mubr.bf16.gmra.mxu0 %v988
        %v1028 = vpop.f32.mrf.mxu0
        %v1029 = vadd.f32 0.0, %v1028
        %v1030 = vpop.f32.mrf.mxu0
        %v1031 = vpop.f32.mrf.mxu0
        %v1032 = vpop.f32.mrf.mxu0
        %1033 = vdwg.mxu0
        %v1035 = vsel %vm870, %v986, 0
        %v1038 = vsel %vm990, %v869, 0
        %1040 = vmatprep.subr.bf16.mxu0 0
        %1041 = vmatpush1.bf16.msra.mxu0 0
        %1042 = vmatprep.subr.bf16.mxu0 0
        %1043 = vmatpush1.bf16.msra.mxu0 0
        %1044 = vmatprep.subr.bf16.mxu0 0
        %1045 = vmatpush1.bf16.msra.mxu0 0
        %1046 = vmatprep.subr.bf16.mxu0 0
        %1047 = vmatpush1.bf16.msra.mxu0 0
        %1048 = vmatprep.subr.bf16.mxu0 0
        %1049 = vmatpush1.bf16.msra.mxu0 0
        %1050 = vmatprep.subr.bf16.mxu0 0
        %1051 = vmatpush1.bf16.msra.mxu0 0
        %1052 = vmatprep.subr.bf16.mxu0 0
        %1053 = vmatpush1.bf16.msra.mxu0 0
        %1054 = vmatprep.subr.bf16.mxu0 0
        %1055 = vmatpush1.bf16.msra.mxu0 %v1038
        %1056 = vmatprep.subr.bf16.mxu0 0
        %1057 = vmatpush2.bf16.msra.mxu0 0
        %1058 = vmatprep.subr.bf16.mxu0 0
        %1059 = vmatpush2.bf16.msra.mxu0 0
        %1060 = vmatprep.subr.bf16.mxu0 0
        %1061 = vmatpush2.bf16.msra.mxu0 0
        %1062 = vmatprep.subr.bf16.mxu0 0
        %1063 = vmatpush2.bf16.msra.mxu0 0
        %1064 = vmatprep.subr.bf16.mxu0 0
        %1065 = vmatpush2.bf16.msra.mxu0 0
        %1066 = vmatprep.subr.bf16.mxu0 0
        %1067 = vmatpush2.bf16.msra.mxu0 0
        %1068 = vmatprep.subr.bf16.mxu0 0
        %1069 = vmatpush2.bf16.msra.mxu0 0
        %1070 = vmatprep.subr.bf16.mxu0 0
        %1071 = vmatpush2.bf16.msra.mxu0 0
        %1072 = vmatprep.mubr.bf16.mxu0 0
        %1073 = vmatmul.mubr.bf16.gmra.mxu0 %v1035
        %v1074 = vpop.f32.mrf.mxu0
        %v1075 = vadd.f32 0.0, %v1074
        %v1076 = vpop.f32.mrf.mxu0
        %v1077 = vpop.f32.mrf.mxu0
        %v1078 = vpop.f32.mrf.mxu0
        %1079 = vdwg.mxu0
        %s1080 = scalar_lea.vmem %s487, 16
        %v1081 = vld [vmem:[%s1080] sm:$0xf]
        %v1082 = vld [vmem:[%s1080 + $0x4] sm:$0xf]
        %v1083 = vld [vmem:[%s1080 + $0x8] sm:$0xf]
        %v1084 = vld [vmem:[%s1080 + $0xc] sm:$0xf]
        %v1085 = vlaneseq
        %v1086 = vshrl.u32 %v1085, 7
        %v1087 = vsub.s32 1, %v1086
        %v1088 = vrot.slane %v659, %v1087
        %v1093 = vunpack.c.l.b16 %v1081
        %v1094 = vunpack.c.l.b16 %v1082
        %v1095 = vunpack.c.l.b16 %v1083
        %v1096 = vunpack.c.l.b16 %v1084
        %v1097 = vpack.c.b16 %v1094, %v1093
        %v1098 = vpack.c.b16 %v1096, %v1095
        %1101 = vmatprep.subr.bf16.mxu0 0
        %1102 = vmatpush1.bf16.msra.mxu0 0
        %1103 = vmatprep.subr.bf16.mxu0 0
        %1104 = vmatpush1.bf16.msra.mxu0 0
        %1105 = vmatprep.subr.bf16.mxu0 0
        %1106 = vmatpush1.bf16.msra.mxu0 0
        %1107 = vmatprep.subr.bf16.mxu0 0
        %1108 = vmatpush1.bf16.msra.mxu0 0
        %1109 = vmatprep.subr.bf16.mxu0 0
        %1110 = vmatpush1.bf16.msra.mxu0 0
        %1111 = vmatprep.subr.bf16.mxu0 0
        %1112 = vmatpush1.bf16.msra.mxu0 0
        %1113 = vmatprep.subr.bf16.mxu0 0
        %1114 = vmatpush1.bf16.msra.mxu0 %v1098
        %1115 = vmatprep.subr.bf16.mxu0 0
        %1116 = vmatpush1.bf16.msra.mxu0 %v1097
        %1117 = vmatprep.subr.bf16.mxu0 0
        %1118 = vmatpush2.bf16.msra.mxu0 0
        %1119 = vmatprep.subr.bf16.mxu0 0
        %1120 = vmatpush2.bf16.msra.mxu0 0
        %1121 = vmatprep.subr.bf16.mxu0 0
        %1122 = vmatpush2.bf16.msra.mxu0 0
        %1123 = vmatprep.subr.bf16.mxu0 0
        %1124 = vmatpush2.bf16.msra.mxu0 0
        %1125 = vmatprep.subr.bf16.mxu0 0
        %1126 = vmatpush2.bf16.msra.mxu0 0
        %1127 = vmatprep.subr.bf16.mxu0 0
        %1128 = vmatpush2.bf16.msra.mxu0 0
        %1129 = vmatprep.subr.bf16.mxu0 0
        %1130 = vmatpush2.bf16.msra.mxu0 0
        %1131 = vmatprep.subr.bf16.mxu0 0
        %1132 = vmatpush2.bf16.msra.mxu0 0
        %1133 = vmatprep.mubr.bf16.mxu0 0
        %1134 = vmatmul.mubr.bf16.gmra.mxu0 %v683
        %v1135 = vpop.f32.mrf.mxu0
        %v1136 = vadd.f32 %v1088, %v1135
        %v1137 = vpop.f32.mrf.mxu0
        %v1138 = vpop.f32.mrf.mxu0
        %v1139 = vadd.f32 %v1088, %v1138
        %v1140 = vpop.f32.mrf.mxu0
        %1141 = vdwg.mxu0
        %s1142 = scalar_lea.vmem %s487, 80
        %v1143 = vld [vmem:[%s1142] sm:$0xf]
        %v1144 = vld [vmem:[%s1142 + $0x4] sm:$0xf]
        %v1145 = vld [vmem:[%s1142 + $0x8] sm:$0xf]
        %v1146 = vld [vmem:[%s1142 + $0xc] sm:$0xf]
        %v1147 = vlaneseq
        %v1148 = vshrl.u32 %v1147, 7
        %v1149 = vsub.s32 5, %v1148
        %v1150 = vrot.slane %v659, %v1149
        %v1155 = vunpack.c.l.b16 %v1143
        %v1156 = vunpack.c.l.b16 %v1144
        %v1157 = vunpack.c.l.b16 %v1145
        %v1158 = vunpack.c.l.b16 %v1146
        %v1159 = vpack.c.b16 %v1156, %v1155
        %v1160 = vpack.c.b16 %v1158, %v1157
        %1163 = vmatprep.subr.bf16.mxu0 0
        %1164 = vmatpush1.bf16.msra.mxu0 0
        %1165 = vmatprep.subr.bf16.mxu0 0
        %1166 = vmatpush1.bf16.msra.mxu0 0
        %1167 = vmatprep.subr.bf16.mxu0 0
        %1168 = vmatpush1.bf16.msra.mxu0 0
        %1169 = vmatprep.subr.bf16.mxu0 0
        %1170 = vmatpush1.bf16.msra.mxu0 0
        %1171 = vmatprep.subr.bf16.mxu0 0
        %1172 = vmatpush1.bf16.msra.mxu0 0
        %1173 = vmatprep.subr.bf16.mxu0 0
        %1174 = vmatpush1.bf16.msra.mxu0 0
        %1175 = vmatprep.subr.bf16.mxu0 0
        %1176 = vmatpush1.bf16.msra.mxu0 %v1160
        %1177 = vmatprep.subr.bf16.mxu0 0
        %1178 = vmatpush1.bf16.msra.mxu0 %v1159
        %1179 = vmatprep.subr.bf16.mxu0 0
        %1180 = vmatpush2.bf16.msra.mxu0 0
        %1181 = vmatprep.subr.bf16.mxu0 0
        %1182 = vmatpush2.bf16.msra.mxu0 0
        %1183 = vmatprep.subr.bf16.mxu0 0
        %1184 = vmatpush2.bf16.msra.mxu0 0
        %1185 = vmatprep.subr.bf16.mxu0 0
        %1186 = vmatpush2.bf16.msra.mxu0 0
        %1187 = vmatprep.subr.bf16.mxu0 0
        %1188 = vmatpush2.bf16.msra.mxu0 0
        %1189 = vmatprep.subr.bf16.mxu0 0
        %1190 = vmatpush2.bf16.msra.mxu0 0
        %1191 = vmatprep.subr.bf16.mxu0 0
        %1192 = vmatpush2.bf16.msra.mxu0 0
        %1193 = vmatprep.subr.bf16.mxu0 0
        %1194 = vmatpush2.bf16.msra.mxu0 0
        %1195 = vmatprep.mubr.bf16.mxu0 0
        %1196 = vmatmul.mubr.bf16.gmra.mxu0 %v683
        %v1197 = vpop.f32.mrf.mxu0
        %v1198 = vadd.f32 %v1150, %v1197
        %v1199 = vpop.f32.mrf.mxu0
        %v1200 = vpop.f32.mrf.mxu0
        %v1201 = vadd.f32 %v1150, %v1200
        %v1202 = vpop.f32.mrf.mxu0
        %1203 = vdwg.mxu0
        %s1204 = scalar_lea.vmem %s487, 144
        %v1205 = vld [vmem:[%s1204] sm:$0xf]
        %v1206 = vld [vmem:[%s1204 + $0x4] sm:$0xf]
        %v1207 = vld [vmem:[%s1204 + $0x8] sm:$0xf]
        %v1208 = vld [vmem:[%s1204 + $0xc] sm:$0xf]
        %v1209 = vlaneseq
        %v1210 = vshrl.u32 %v1209, 7
        %v1211 = vsub.s32 1, %v1210
        %v1212 = vrot.slane %v660, %v1211
        %v1217 = vunpack.c.l.b16 %v1205
        %v1218 = vunpack.c.l.b16 %v1206
        %v1219 = vunpack.c.l.b16 %v1207
        %v1220 = vunpack.c.l.b16 %v1208
        %v1221 = vpack.c.b16 %v1218, %v1217
        %v1222 = vpack.c.b16 %v1220, %v1219
        %1225 = vmatprep.subr.bf16.mxu0 0
        %1226 = vmatpush1.bf16.msra.mxu0 0
        %1227 = vmatprep.subr.bf16.mxu0 0
        %1228 = vmatpush1.bf16.msra.mxu0 0
        %1229 = vmatprep.subr.bf16.mxu0 0
        %1230 = vmatpush1.bf16.msra.mxu0 0
        %1231 = vmatprep.subr.bf16.mxu0 0
        %1232 = vmatpush1.bf16.msra.mxu0 0
        %1233 = vmatprep.subr.bf16.mxu0 0
        %1234 = vmatpush1.bf16.msra.mxu0 0
        %1235 = vmatprep.subr.bf16.mxu0 0
        %1236 = vmatpush1.bf16.msra.mxu0 0
        %1237 = vmatprep.subr.bf16.mxu0 0
        %1238 = vmatpush1.bf16.msra.mxu0 %v1222
        %1239 = vmatprep.subr.bf16.mxu0 0
        %1240 = vmatpush1.bf16.msra.mxu0 %v1221
        %1241 = vmatprep.subr.bf16.mxu0 0
        %1242 = vmatpush2.bf16.msra.mxu0 0
        %1243 = vmatprep.subr.bf16.mxu0 0
        %1244 = vmatpush2.bf16.msra.mxu0 0
        %1245 = vmatprep.subr.bf16.mxu0 0
        %1246 = vmatpush2.bf16.msra.mxu0 0
        %1247 = vmatprep.subr.bf16.mxu0 0
        %1248 = vmatpush2.bf16.msra.mxu0 0
        %1249 = vmatprep.subr.bf16.mxu0 0
        %1250 = vmatpush2.bf16.msra.mxu0 0
        %1251 = vmatprep.subr.bf16.mxu0 0
        %1252 = vmatpush2.bf16.msra.mxu0 0
        %1253 = vmatprep.subr.bf16.mxu0 0
        %1254 = vmatpush2.bf16.msra.mxu0 0
        %1255 = vmatprep.subr.bf16.mxu0 0
        %1256 = vmatpush2.bf16.msra.mxu0 0
        %1257 = vmatprep.mubr.bf16.mxu0 0
        %1258 = vmatmul.mubr.bf16.gmra.mxu0 %v683
        %v1259 = vpop.f32.mrf.mxu0
        %v1260 = vadd.f32 %v1212, %v1259
        %v1261 = vpop.f32.mrf.mxu0
        %v1262 = vpop.f32.mrf.mxu0
        %v1263 = vadd.f32 %v1212, %v1262
        %v1264 = vpop.f32.mrf.mxu0
        %1265 = vdwg.mxu0
        %v1266 = vmul.f32 %v1136, 0.35355338
        %v1267 = vmul.f32 %v1139, 0.35355338
        %v1268 = vpack.c.bf16 %v1267, %v1266
        %v1270 = vunpack.c.l.b16 %v1268
        %v1271 = vunpack.c.h.b16 %v1268
        %v1272 = vpack.c.b16 %v1270, %v1270
        %v1273 = vpack.c.b16 %v1271, %v1271
        %v1274 = vpack.c.bf16 %v1201, %v1198
        %v1276 = vunpack.c.l.b16 %v1274
        %v1277 = vunpack.c.h.b16 %v1274
        %v1278 = vpack.c.b16 %v1276, %v1276
        %v1279 = vpack.c.b16 %v1277, %v1277
        %v1280 = vpack.c.bf16 %v1263, %v1260
        %v1282 = vunpack.c.l.b16 %v1280
        %v1283 = vunpack.c.h.b16 %v1280
        %v1284 = vpack.c.b16 %v1282, %v1282
        %v1285 = vpack.c.b16 %v1283, %v1283
        %v1287 = vsel %vm870, %v1272, 0
        %v1290 = vsel %vm870, %v1278, 0
        %1292 = vmatprep.subr.bf16.mxu0 0
        %1293 = vmatpush1.bf16.xpose.msra.mxu0 0
        %1294 = vmatprep.subr.bf16.mxu0 0
        %1295 = vmatpush1.bf16.xpose.msra.mxu0 0
        %1296 = vmatprep.subr.bf16.mxu0 0
        %1297 = vmatpush1.bf16.xpose.msra.mxu0 0
        %1298 = vmatprep.subr.bf16.mxu0 0
        %1299 = vmatpush1.bf16.xpose.msra.mxu0 0
        %1300 = vmatprep.subr.bf16.mxu0 0
        %1301 = vmatpush1.bf16.xpose.msra.mxu0 0
        %1302 = vmatprep.subr.bf16.mxu0 0
        %1303 = vmatpush1.bf16.xpose.msra.mxu0 0
        %1304 = vmatprep.subr.bf16.mxu0 0
        %1305 = vmatpush1.bf16.xpose.msra.mxu0 0
        %1306 = vmatprep.subr.bf16.mxu0 0
        %1307 = vmatpush1.bf16.xpose.msra.mxu0 %v1290
        %1308 = vmatprep.subr.bf16.mxu0 0
        %1309 = vmatpush2.bf16.xpose.msra.mxu0 0
        %1310 = vmatprep.subr.bf16.mxu0 0
        %1311 = vmatpush2.bf16.xpose.msra.mxu0 0
        %1312 = vmatprep.subr.bf16.mxu0 0
        %1313 = vmatpush2.bf16.xpose.msra.mxu0 0
        %1314 = vmatprep.subr.bf16.mxu0 0
        %1315 = vmatpush2.bf16.xpose.msra.mxu0 0
        %1316 = vmatprep.subr.bf16.mxu0 0
        %1317 = vmatpush2.bf16.xpose.msra.mxu0 0
        %1318 = vmatprep.subr.bf16.mxu0 0
        %1319 = vmatpush2.bf16.xpose.msra.mxu0 0
        %1320 = vmatprep.subr.bf16.mxu0 0
        %1321 = vmatpush2.bf16.xpose.msra.mxu0 0
        %1322 = vmatprep.subr.bf16.mxu0 0
        %1323 = vmatpush2.bf16.xpose.msra.mxu0 0
        %1324 = vmatprep.mubr.bf16.mxu0 0
        %1325 = vmatmul.mubr.bf16.gmra.mxu0 %v1287
        %v1326 = vpop.f32.mrf.mxu0
        %v1327 = vadd.f32 0.0, %v1326
        %v1328 = vpop.f32.mrf.mxu0
        %v1329 = vpop.f32.mrf.mxu0
        %v1330 = vpop.f32.mrf.mxu0
        %1331 = vdwg.mxu0
        %v1333 = vsel %vm870, %v1273, 0
        %v1336 = vsel %vm870, %v1279, 0
        %1338 = vmatprep.subr.bf16.mxu0 0
        %1339 = vmatpush1.bf16.xpose.msra.mxu0 0
        %1340 = vmatprep.subr.bf16.mxu0 0
        %1341 = vmatpush1.bf16.xpose.msra.mxu0 0
        %1342 = vmatprep.subr.bf16.mxu0 0
        %1343 = vmatpush1.bf16.xpose.msra.mxu0 0
        %1344 = vmatprep.subr.bf16.mxu0 0
        %1345 = vmatpush1.bf16.xpose.msra.mxu0 0
        %1346 = vmatprep.subr.bf16.mxu0 0
        %1347 = vmatpush1.bf16.xpose.msra.mxu0 0
        %1348 = vmatprep.subr.bf16.mxu0 0
        %1349 = vmatpush1.bf16.xpose.msra.mxu0 0
        %1350 = vmatprep.subr.bf16.mxu0 0
        %1351 = vmatpush1.bf16.xpose.msra.mxu0 0
        %1352 = vmatprep.subr.bf16.mxu0 0
        %1353 = vmatpush1.bf16.xpose.msra.mxu0 %v1336
        %1354 = vmatprep.subr.bf16.mxu0 0
        %1355 = vmatpush2.bf16.xpose.msra.mxu0 0
        %1356 = vmatprep.subr.bf16.mxu0 0
        %1357 = vmatpush2.bf16.xpose.msra.mxu0 0
        %1358 = vmatprep.subr.bf16.mxu0 0
        %1359 = vmatpush2.bf16.xpose.msra.mxu0 0
        %1360 = vmatprep.subr.bf16.mxu0 0
        %1361 = vmatpush2.bf16.xpose.msra.mxu0 0
        %1362 = vmatprep.subr.bf16.mxu0 0
        %1363 = vmatpush2.bf16.xpose.msra.mxu0 0
        %1364 = vmatprep.subr.bf16.mxu0 0
        %1365 = vmatpush2.bf16.xpose.msra.mxu0 0
        %1366 = vmatprep.subr.bf16.mxu0 0
        %1367 = vmatpush2.bf16.xpose.msra.mxu0 0
        %1368 = vmatprep.subr.bf16.mxu0 0
        %1369 = vmatpush2.bf16.xpose.msra.mxu0 0
        %1370 = vmatprep.mubr.bf16.mxu0 0
        %1371 = vmatmul.mubr.bf16.gmra.mxu0 %v1333
        %v1372 = vpop.f32.mrf.mxu0
        %v1373 = vadd.f32 0.0, %v1372
        %v1374 = vpop.f32.mrf.mxu0
        %v1375 = vpop.f32.mrf.mxu0
        %v1376 = vpop.f32.mrf.mxu0
        %1377 = vdwg.mxu0
        %v1378 = vsel %vm870, %v1327, -inf
        %1379 = vmax.xlane.f32.xlu0 %v1378
        %v1380 = vpop.xlane.xlu0 %1379
        %v1381 = vsel %vm870, %v1373, -inf
        %1382 = vmax.xlane.f32.xlu0 %v1381
        %v1383 = vpop.xlane.xlu0 %1382
        %v1384 = vsub.f32 %v1327, %v1380
        %v1385 = vsub.f32 %v1373, %v1383
        %v1386 = vmul.f32 %v1384, 1.442695
        %v1387 = vpow.pop %v1386
        %v1388 = vmul.f32 %v1385, 1.442695
        %v1389 = vpow.pop %v1388
        %v1390 = vsel %vm870, %v1387, 0.0
        %1391 = vadd.xlane.f32.xlu0 %v1390
        %v1392 = vpop.xlane.xlu0 %1391
        %v1393 = vsel %vm870, %v1389, 0.0
        %1394 = vadd.xlane.f32.xlu0 %v1393
        %v1395 = vpop.xlane.xlu0 %1394
        %v1396 = vrcp.pop %v1392
        %v1397 = vrcp.pop %v1395
        %v1398 = vmul.f32 %v1387, %v1396
        %v1399 = vmul.f32 %v1389, %v1397
        %v1400 = vpack.c.bf16 %v1398, %v1398
        %v1401 = vpack.c.bf16 %v1399, %v1399
        %v1403 = vsel %vm870, %v1400, 0
        %v1406 = vsel %vm990, %v1284, 0
        %1408 = vmatprep.subr.bf16.mxu0 0
        %1409 = vmatpush1.bf16.msra.mxu0 0
        %1410 = vmatprep.subr.bf16.mxu0 0
        %1411 = vmatpush1.bf16.msra.mxu0 0
        %1412 = vmatprep.subr.bf16.mxu0 0
        %1413 = vmatpush1.bf16.msra.mxu0 0
        %1414 = vmatprep.subr.bf16.mxu0 0
        %1415 = vmatpush1.bf16.msra.mxu0 0
        %1416 = vmatprep.subr.bf16.mxu0 0
        %1417 = vmatpush1.bf16.msra.mxu0 0
        %1418 = vmatprep.subr.bf16.mxu0 0
        %1419 = vmatpush1.bf16.msra.mxu0 0
        %1420 = vmatprep.subr.bf16.mxu0 0
        %1421 = vmatpush1.bf16.msra.mxu0 0
        %1422 = vmatprep.subr.bf16.mxu0 0
        %1423 = vmatpush1.bf16.msra.mxu0 %v1406
        %1424 = vmatprep.subr.bf16.mxu0 0
        %1425 = vmatpush2.bf16.msra.mxu0 0
        %1426 = vmatprep.subr.bf16.mxu0 0
        %1427 = vmatpush2.bf16.msra.mxu0 0
        %1428 = vmatprep.subr.bf16.mxu0 0
        %1429 = vmatpush2.bf16.msra.mxu0 0
        %1430 = vmatprep.subr.bf16.mxu0 0
        %1431 = vmatpush2.bf16.msra.mxu0 0
        %1432 = vmatprep.subr.bf16.mxu0 0
        %1433 = vmatpush2.bf16.msra.mxu0 0
        %1434 = vmatprep.subr.bf16.mxu0 0
        %1435 = vmatpush2.bf16.msra.mxu0 0
        %1436 = vmatprep.subr.bf16.mxu0 0
        %1437 = vmatpush2.bf16.msra.mxu0 0
        %1438 = vmatprep.subr.bf16.mxu0 0
        %1439 = vmatpush2.bf16.msra.mxu0 0
        %1440 = vmatprep.mubr.bf16.mxu0 0
        %1441 = vmatmul.mubr.bf16.gmra.mxu0 %v1403
        %v1442 = vpop.f32.mrf.mxu0
        %v1443 = vadd.f32 0.0, %v1442
        %v1444 = vpop.f32.mrf.mxu0
        %v1445 = vpop.f32.mrf.mxu0
        %v1446 = vpop.f32.mrf.mxu0
        %1447 = vdwg.mxu0
        %v1449 = vsel %vm870, %v1401, 0
        %v1452 = vsel %vm990, %v1285, 0
        %1454 = vmatprep.subr.bf16.mxu0 0
        %1455 = vmatpush1.bf16.msra.mxu0 0
        %1456 = vmatprep.subr.bf16.mxu0 0
        %1457 = vmatpush1.bf16.msra.mxu0 0
        %1458 = vmatprep.subr.bf16.mxu0 0
        %1459 = vmatpush1.bf16.msra.mxu0 0
        %1460 = vmatprep.subr.bf16.mxu0 0
        %1461 = vmatpush1.bf16.msra.mxu0 0
        %1462 = vmatprep.subr.bf16.mxu0 0
        %1463 = vmatpush1.bf16.msra.mxu0 0
        %1464 = vmatprep.subr.bf16.mxu0 0
        %1465 = vmatpush1.bf16.msra.mxu0 0
        %1466 = vmatprep.subr.bf16.mxu0 0
        %1467 = vmatpush1.bf16.msra.mxu0 0
        %1468 = vmatprep.subr.bf16.mxu0 0
        %1469 = vmatpush1.bf16.msra.mxu0 %v1452
        %1470 = vmatprep.subr.bf16.mxu0 0
        %1471 = vmatpush2.bf16.msra.mxu0 0
        %1472 = vmatprep.subr.bf16.mxu0 0
        %1473 = vmatpush2.bf16.msra.mxu0 0
        %1474 = vmatprep.subr.bf16.mxu0 0
        %1475 = vmatpush2.bf16.msra.mxu0 0
        %1476 = vmatprep.subr.bf16.mxu0 0
        %1477 = vmatpush2.bf16.msra.mxu0 0
        %1478 = vmatprep.subr.bf16.mxu0 0
        %1479 = vmatpush2.bf16.msra.mxu0 0
        %1480 = vmatprep.subr.bf16.mxu0 0
        %1481 = vmatpush2.bf16.msra.mxu0 0
        %1482 = vmatprep.subr.bf16.mxu0 0
        %1483 = vmatpush2.bf16.msra.mxu0 0
        %1484 = vmatprep.subr.bf16.mxu0 0
        %1485 = vmatpush2.bf16.msra.mxu0 0
        %1486 = vmatprep.mubr.bf16.mxu0 0
        %1487 = vmatmul.mubr.bf16.gmra.mxu0 %v1449
        %v1488 = vpop.f32.mrf.mxu0
        %v1489 = vadd.f32 0.0, %v1488
        %v1490 = vpop.f32.mrf.mxu0
        %v1491 = vpop.f32.mrf.mxu0
        %v1492 = vpop.f32.mrf.mxu0
        %1493 = vdwg.mxu0
        %s1494 = scalar_lea.vmem %s487, 32
        %v1495 = vld [vmem:[%s1494] sm:$0xf]
        %v1496 = vld [vmem:[%s1494 + $0x4] sm:$0xf]
        %v1497 = vld [vmem:[%s1494 + $0x8] sm:$0xf]
        %v1498 = vld [vmem:[%s1494 + $0xc] sm:$0xf]
        %v1499 = vlaneseq
        %v1500 = vshrl.u32 %v1499, 7
        %v1501 = vsub.s32 2, %v1500
        %v1502 = vrot.slane %v659, %v1501
        %v1507 = vunpack.c.l.b16 %v1495
        %v1508 = vunpack.c.l.b16 %v1496
        %v1509 = vunpack.c.l.b16 %v1497
        %v1510 = vunpack.c.l.b16 %v1498
        %v1511 = vpack.c.b16 %v1508, %v1507
        %v1512 = vpack.c.b16 %v1510, %v1509
        %1515 = vmatprep.subr.bf16.mxu0 0
        %1516 = vmatpush1.bf16.msra.mxu0 0
        %1517 = vmatprep.subr.bf16.mxu0 0
        %1518 = vmatpush1.bf16.msra.mxu0 0
        %1519 = vmatprep.subr.bf16.mxu0 0
        %1520 = vmatpush1.bf16.msra.mxu0 0
        %1521 = vmatprep.subr.bf16.mxu0 0
        %1522 = vmatpush1.bf16.msra.mxu0 0
        %1523 = vmatprep.subr.bf16.mxu0 0
        %1524 = vmatpush1.bf16.msra.mxu0 0
        %1525 = vmatprep.subr.bf16.mxu0 0
        %1526 = vmatpush1.bf16.msra.mxu0 0
        %1527 = vmatprep.subr.bf16.mxu0 0
        %1528 = vmatpush1.bf16.msra.mxu0 %v1512
        %1529 = vmatprep.subr.bf16.mxu0 0
        %1530 = vmatpush1.bf16.msra.mxu0 %v1511
        %1531 = vmatprep.subr.bf16.mxu0 0
        %1532 = vmatpush2.bf16.msra.mxu0 0
        %1533 = vmatprep.subr.bf16.mxu0 0
        %1534 = vmatpush2.bf16.msra.mxu0 0
        %1535 = vmatprep.subr.bf16.mxu0 0
        %1536 = vmatpush2.bf16.msra.mxu0 0
        %1537 = vmatprep.subr.bf16.mxu0 0
        %1538 = vmatpush2.bf16.msra.mxu0 0
        %1539 = vmatprep.subr.bf16.mxu0 0
        %1540 = vmatpush2.bf16.msra.mxu0 0
        %1541 = vmatprep.subr.bf16.mxu0 0
        %1542 = vmatpush2.bf16.msra.mxu0 0
        %1543 = vmatprep.subr.bf16.mxu0 0
        %1544 = vmatpush2.bf16.msra.mxu0 0
        %1545 = vmatprep.subr.bf16.mxu0 0
        %1546 = vmatpush2.bf16.msra.mxu0 0
        %1547 = vmatprep.mubr.bf16.mxu0 0
        %1548 = vmatmul.mubr.bf16.gmra.mxu0 %v683
        %v1549 = vpop.f32.mrf.mxu0
        %v1550 = vadd.f32 %v1502, %v1549
        %v1551 = vpop.f32.mrf.mxu0
        %v1552 = vpop.f32.mrf.mxu0
        %v1553 = vadd.f32 %v1502, %v1552
        %v1554 = vpop.f32.mrf.mxu0
        %1555 = vdwg.mxu0
        %s1556 = scalar_lea.vmem %s487, 96
        %v1557 = vld [vmem:[%s1556] sm:$0xf]
        %v1558 = vld [vmem:[%s1556 + $0x4] sm:$0xf]
        %v1559 = vld [vmem:[%s1556 + $0x8] sm:$0xf]
        %v1560 = vld [vmem:[%s1556 + $0xc] sm:$0xf]
        %v1561 = vlaneseq
        %v1562 = vshrl.u32 %v1561, 7
        %v1563 = vsub.s32 6, %v1562
        %v1564 = vrot.slane %v659, %v1563
        %v1569 = vunpack.c.l.b16 %v1557
        %v1570 = vunpack.c.l.b16 %v1558
        %v1571 = vunpack.c.l.b16 %v1559
        %v1572 = vunpack.c.l.b16 %v1560
        %v1573 = vpack.c.b16 %v1570, %v1569
        %v1574 = vpack.c.b16 %v1572, %v1571
        %1577 = vmatprep.subr.bf16.mxu0 0
        %1578 = vmatpush1.bf16.msra.mxu0 0
        %1579 = vmatprep.subr.bf16.mxu0 0
        %1580 = vmatpush1.bf16.msra.mxu0 0
        %1581 = vmatprep.subr.bf16.mxu0 0
        %1582 = vmatpush1.bf16.msra.mxu0 0
        %1583 = vmatprep.subr.bf16.mxu0 0
        %1584 = vmatpush1.bf16.msra.mxu0 0
        %1585 = vmatprep.subr.bf16.mxu0 0
        %1586 = vmatpush1.bf16.msra.mxu0 0
        %1587 = vmatprep.subr.bf16.mxu0 0
        %1588 = vmatpush1.bf16.msra.mxu0 0
        %1589 = vmatprep.subr.bf16.mxu0 0
        %1590 = vmatpush1.bf16.msra.mxu0 %v1574
        %1591 = vmatprep.subr.bf16.mxu0 0
        %1592 = vmatpush1.bf16.msra.mxu0 %v1573
        %1593 = vmatprep.subr.bf16.mxu0 0
        %1594 = vmatpush2.bf16.msra.mxu0 0
        %1595 = vmatprep.subr.bf16.mxu0 0
        %1596 = vmatpush2.bf16.msra.mxu0 0
        %1597 = vmatprep.subr.bf16.mxu0 0
        %1598 = vmatpush2.bf16.msra.mxu0 0
        %1599 = vmatprep.subr.bf16.mxu0 0
        %1600 = vmatpush2.bf16.msra.mxu0 0
        %1601 = vmatprep.subr.bf16.mxu0 0
        %1602 = vmatpush2.bf16.msra.mxu0 0
        %1603 = vmatprep.subr.bf16.mxu0 0
        %1604 = vmatpush2.bf16.msra.mxu0 0
        %1605 = vmatprep.subr.bf16.mxu0 0
        %1606 = vmatpush2.bf16.msra.mxu0 0
        %1607 = vmatprep.subr.bf16.mxu0 0
        %1608 = vmatpush2.bf16.msra.mxu0 0
        %1609 = vmatprep.mubr.bf16.mxu0 0
        %1610 = vmatmul.mubr.bf16.gmra.mxu0 %v683
        %v1611 = vpop.f32.mrf.mxu0
        %v1612 = vadd.f32 %v1564, %v1611
        %v1613 = vpop.f32.mrf.mxu0
        %v1614 = vpop.f32.mrf.mxu0
        %v1615 = vadd.f32 %v1564, %v1614
        %v1616 = vpop.f32.mrf.mxu0
        %1617 = vdwg.mxu0
        %s1618 = scalar_lea.vmem %s487, 160
        %v1619 = vld [vmem:[%s1618] sm:$0xf]
        %v1620 = vld [vmem:[%s1618 + $0x4] sm:$0xf]
        %v1621 = vld [vmem:[%s1618 + $0x8] sm:$0xf]
        %v1622 = vld [vmem:[%s1618 + $0xc] sm:$0xf]
        %v1623 = vlaneseq
        %v1624 = vshrl.u32 %v1623, 7
        %v1625 = vsub.s32 2, %v1624
        %v1626 = vrot.slane %v660, %v1625
        %v1631 = vunpack.c.l.b16 %v1619
        %v1632 = vunpack.c.l.b16 %v1620
        %v1633 = vunpack.c.l.b16 %v1621
        %v1634 = vunpack.c.l.b16 %v1622
        %v1635 = vpack.c.b16 %v1632, %v1631
        %v1636 = vpack.c.b16 %v1634, %v1633
        %1639 = vmatprep.subr.bf16.mxu0 0
        %1640 = vmatpush1.bf16.msra.mxu0 0
        %1641 = vmatprep.subr.bf16.mxu0 0
        %1642 = vmatpush1.bf16.msra.mxu0 0
        %1643 = vmatprep.subr.bf16.mxu0 0
        %1644 = vmatpush1.bf16.msra.mxu0 0
        %1645 = vmatprep.subr.bf16.mxu0 0
        %1646 = vmatpush1.bf16.msra.mxu0 0
        %1647 = vmatprep.subr.bf16.mxu0 0
        %1648 = vmatpush1.bf16.msra.mxu0 0
        %1649 = vmatprep.subr.bf16.mxu0 0
        %1650 = vmatpush1.bf16.msra.mxu0 0
        %1651 = vmatprep.subr.bf16.mxu0 0
        %1652 = vmatpush1.bf16.msra.mxu0 %v1636
        %1653 = vmatprep.subr.bf16.mxu0 0
        %1654 = vmatpush1.bf16.msra.mxu0 %v1635
        %1655 = vmatprep.subr.bf16.mxu0 0
        %1656 = vmatpush2.bf16.msra.mxu0 0
        %1657 = vmatprep.subr.bf16.mxu0 0
        %1658 = vmatpush2.bf16.msra.mxu0 0
        %1659 = vmatprep.subr.bf16.mxu0 0
        %1660 = vmatpush2.bf16.msra.mxu0 0
        %1661 = vmatprep.subr.bf16.mxu0 0
        %1662 = vmatpush2.bf16.msra.mxu0 0
        %1663 = vmatprep.subr.bf16.mxu0 0
        %1664 = vmatpush2.bf16.msra.mxu0 0
        %1665 = vmatprep.subr.bf16.mxu0 0
        %1666 = vmatpush2.bf16.msra.mxu0 0
        %1667 = vmatprep.subr.bf16.mxu0 0
        %1668 = vmatpush2.bf16.msra.mxu0 0
        %1669 = vmatprep.subr.bf16.mxu0 0
        %1670 = vmatpush2.bf16.msra.mxu0 0
        %1671 = vmatprep.mubr.bf16.mxu0 0
        %1672 = vmatmul.mubr.bf16.gmra.mxu0 %v683
        %v1673 = vpop.f32.mrf.mxu0
        %v1674 = vadd.f32 %v1626, %v1673
        %v1675 = vpop.f32.mrf.mxu0
        %v1676 = vpop.f32.mrf.mxu0
        %v1677 = vadd.f32 %v1626, %v1676
        %v1678 = vpop.f32.mrf.mxu0
        %1679 = vdwg.mxu0
        %v1680 = vmul.f32 %v1550, 0.35355338
        %v1681 = vmul.f32 %v1553, 0.35355338
        %v1682 = vpack.c.bf16 %v1681, %v1680
        %v1684 = vunpack.c.l.b16 %v1682
        %v1685 = vunpack.c.h.b16 %v1682
        %v1686 = vpack.c.b16 %v1684, %v1684
        %v1687 = vpack.c.b16 %v1685, %v1685
        %v1688 = vpack.c.bf16 %v1615, %v1612
        %v1690 = vunpack.c.l.b16 %v1688
        %v1691 = vunpack.c.h.b16 %v1688
        %v1692 = vpack.c.b16 %v1690, %v1690
        %v1693 = vpack.c.b16 %v1691, %v1691
        %v1694 = vpack.c.bf16 %v1677, %v1674
        %v1696 = vunpack.c.l.b16 %v1694
        %v1697 = vunpack.c.h.b16 %v1694
        %v1698 = vpack.c.b16 %v1696, %v1696
        %v1699 = vpack.c.b16 %v1697, %v1697
        %v1701 = vsel %vm870, %v1686, 0
        %v1704 = vsel %vm870, %v1692, 0
        %1706 = vmatprep.subr.bf16.mxu0 0
        %1707 = vmatpush1.bf16.xpose.msra.mxu0 0
        %1708 = vmatprep.subr.bf16.mxu0 0
        %1709 = vmatpush1.bf16.xpose.msra.mxu0 0
        %1710 = vmatprep.subr.bf16.mxu0 0
        %1711 = vmatpush1.bf16.xpose.msra.mxu0 0
        %1712 = vmatprep.subr.bf16.mxu0 0
        %1713 = vmatpush1.bf16.xpose.msra.mxu0 0
        %1714 = vmatprep.subr.bf16.mxu0 0
        %1715 = vmatpush1.bf16.xpose.msra.mxu0 0
        %1716 = vmatprep.subr.bf16.mxu0 0
        %1717 = vmatpush1.bf16.xpose.msra.mxu0 0
        %1718 = vmatprep.subr.bf16.mxu0 0
        %1719 = vmatpush1.bf16.xpose.msra.mxu0 0
        %1720 = vmatprep.subr.bf16.mxu0 0
        %1721 = vmatpush1.bf16.xpose.msra.mxu0 %v1704
        %1722 = vmatprep.subr.bf16.mxu0 0
        %1723 = vmatpush2.bf16.xpose.msra.mxu0 0
        %1724 = vmatprep.subr.bf16.mxu0 0
        %1725 = vmatpush2.bf16.xpose.msra.mxu0 0
        %1726 = vmatprep.subr.bf16.mxu0 0
        %1727 = vmatpush2.bf16.xpose.msra.mxu0 0
        %1728 = vmatprep.subr.bf16.mxu0 0
        %1729 = vmatpush2.bf16.xpose.msra.mxu0 0
        %1730 = vmatprep.subr.bf16.mxu0 0
        %1731 = vmatpush2.bf16.xpose.msra.mxu0 0
        %1732 = vmatprep.subr.bf16.mxu0 0
        %1733 = vmatpush2.bf16.xpose.msra.mxu0 0
        %1734 = vmatprep.subr.bf16.mxu0 0
        %1735 = vmatpush2.bf16.xpose.msra.mxu0 0
        %1736 = vmatprep.subr.bf16.mxu0 0
        %1737 = vmatpush2.bf16.xpose.msra.mxu0 0
        %1738 = vmatprep.mubr.bf16.mxu0 0
        %1739 = vmatmul.mubr.bf16.gmra.mxu0 %v1701
        %v1740 = vpop.f32.mrf.mxu0
        %v1741 = vadd.f32 0.0, %v1740
        %v1742 = vpop.f32.mrf.mxu0
        %v1743 = vpop.f32.mrf.mxu0
        %v1744 = vpop.f32.mrf.mxu0
        %1745 = vdwg.mxu0
        %v1747 = vsel %vm870, %v1687, 0
        %v1750 = vsel %vm870, %v1693, 0
        %1752 = vmatprep.subr.bf16.mxu0 0
        %1753 = vmatpush1.bf16.xpose.msra.mxu0 0
        %1754 = vmatprep.subr.bf16.mxu0 0
        %1755 = vmatpush1.bf16.xpose.msra.mxu0 0
        %1756 = vmatprep.subr.bf16.mxu0 0
        %1757 = vmatpush1.bf16.xpose.msra.mxu0 0
        %1758 = vmatprep.subr.bf16.mxu0 0
        %1759 = vmatpush1.bf16.xpose.msra.mxu0 0
        %1760 = vmatprep.subr.bf16.mxu0 0
        %1761 = vmatpush1.bf16.xpose.msra.mxu0 0
        %1762 = vmatprep.subr.bf16.mxu0 0
        %1763 = vmatpush1.bf16.xpose.msra.mxu0 0
        %1764 = vmatprep.subr.bf16.mxu0 0
        %1765 = vmatpush1.bf16.xpose.msra.mxu0 0
        %1766 = vmatprep.subr.bf16.mxu0 0
        %1767 = vmatpush1.bf16.xpose.msra.mxu0 %v1750
        %1768 = vmatprep.subr.bf16.mxu0 0
        %1769 = vmatpush2.bf16.xpose.msra.mxu0 0
        %1770 = vmatprep.subr.bf16.mxu0 0
        %1771 = vmatpush2.bf16.xpose.msra.mxu0 0
        %1772 = vmatprep.subr.bf16.mxu0 0
        %1773 = vmatpush2.bf16.xpose.msra.mxu0 0
        %1774 = vmatprep.subr.bf16.mxu0 0
        %1775 = vmatpush2.bf16.xpose.msra.mxu0 0
        %1776 = vmatprep.subr.bf16.mxu0 0
        %1777 = vmatpush2.bf16.xpose.msra.mxu0 0
        %1778 = vmatprep.subr.bf16.mxu0 0
        %1779 = vmatpush2.bf16.xpose.msra.mxu0 0
        %1780 = vmatprep.subr.bf16.mxu0 0
        %1781 = vmatpush2.bf16.xpose.msra.mxu0 0
        %1782 = vmatprep.subr.bf16.mxu0 0
        %1783 = vmatpush2.bf16.xpose.msra.mxu0 0
        %1784 = vmatprep.mubr.bf16.mxu0 0
        %1785 = vmatmul.mubr.bf16.gmra.mxu0 %v1747
        %v1786 = vpop.f32.mrf.mxu0
        %v1787 = vadd.f32 0.0, %v1786
        %v1788 = vpop.f32.mrf.mxu0
        %v1789 = vpop.f32.mrf.mxu0
        %v1790 = vpop.f32.mrf.mxu0
        %1791 = vdwg.mxu0
        %v1792 = vsel %vm870, %v1741, -inf
        %1793 = vmax.xlane.f32.xlu0 %v1792
        %v1794 = vpop.xlane.xlu0 %1793
        %v1795 = vsel %vm870, %v1787, -inf
        %1796 = vmax.xlane.f32.xlu0 %v1795
        %v1797 = vpop.xlane.xlu0 %1796
        %v1798 = vsub.f32 %v1741, %v1794
        %v1799 = vsub.f32 %v1787, %v1797
        %v1800 = vmul.f32 %v1798, 1.442695
        %v1801 = vpow.pop %v1800
        %v1802 = vmul.f32 %v1799, 1.442695
        %v1803 = vpow.pop %v1802
        %v1804 = vsel %vm870, %v1801, 0.0
        %1805 = vadd.xlane.f32.xlu0 %v1804
        %v1806 = vpop.xlane.xlu0 %1805
        %v1807 = vsel %vm870, %v1803, 0.0
        %1808 = vadd.xlane.f32.xlu0 %v1807
        %v1809 = vpop.xlane.xlu0 %1808
        %v1810 = vrcp.pop %v1806
        %v1811 = vrcp.pop %v1809
        %v1812 = vmul.f32 %v1801, %v1810
        %v1813 = vmul.f32 %v1803, %v1811
        %v1814 = vpack.c.bf16 %v1812, %v1812
        %v1815 = vpack.c.bf16 %v1813, %v1813
        %v1817 = vsel %vm870, %v1814, 0
        %v1820 = vsel %vm990, %v1698, 0
        %1822 = vmatprep.subr.bf16.mxu0 0
        %1823 = vmatpush1.bf16.msra.mxu0 0
        %1824 = vmatprep.subr.bf16.mxu0 0
        %1825 = vmatpush1.bf16.msra.mxu0 0
        %1826 = vmatprep.subr.bf16.mxu0 0
        %1827 = vmatpush1.bf16.msra.mxu0 0
        %1828 = vmatprep.subr.bf16.mxu0 0
        %1829 = vmatpush1.bf16.msra.mxu0 0
        %1830 = vmatprep.subr.bf16.mxu0 0
        %1831 = vmatpush1.bf16.msra.mxu0 0
        %1832 = vmatprep.subr.bf16.mxu0 0
        %1833 = vmatpush1.bf16.msra.mxu0 0
        %1834 = vmatprep.subr.bf16.mxu0 0
        %1835 = vmatpush1.bf16.msra.mxu0 0
        %1836 = vmatprep.subr.bf16.mxu0 0
        %1837 = vmatpush1.bf16.msra.mxu0 %v1820
        %1838 = vmatprep.subr.bf16.mxu0 0
        %1839 = vmatpush2.bf16.msra.mxu0 0
        %1840 = vmatprep.subr.bf16.mxu0 0
        %1841 = vmatpush2.bf16.msra.mxu0 0
        %1842 = vmatprep.subr.bf16.mxu0 0
        %1843 = vmatpush2.bf16.msra.mxu0 0
        %1844 = vmatprep.subr.bf16.mxu0 0
        %1845 = vmatpush2.bf16.msra.mxu0 0
        %1846 = vmatprep.subr.bf16.mxu0 0
        %1847 = vmatpush2.bf16.msra.mxu0 0
        %1848 = vmatprep.subr.bf16.mxu0 0
        %1849 = vmatpush2.bf16.msra.mxu0 0
        %1850 = vmatprep.subr.bf16.mxu0 0
        %1851 = vmatpush2.bf16.msra.mxu0 0
        %1852 = vmatprep.subr.bf16.mxu0 0
        %1853 = vmatpush2.bf16.msra.mxu0 0
        %1854 = vmatprep.mubr.bf16.mxu0 0
        %1855 = vmatmul.mubr.bf16.gmra.mxu0 %v1817
        %v1856 = vpop.f32.mrf.mxu0
        %v1857 = vadd.f32 0.0, %v1856
        %v1858 = vpop.f32.mrf.mxu0
        %v1859 = vpop.f32.mrf.mxu0
        %v1860 = vpop.f32.mrf.mxu0
        %1861 = vdwg.mxu0
        %v1863 = vsel %vm870, %v1815, 0
        %v1866 = vsel %vm990, %v1699, 0
        %1868 = vmatprep.subr.bf16.mxu0 0
        %1869 = vmatpush1.bf16.msra.mxu0 0
        %1870 = vmatprep.subr.bf16.mxu0 0
        %1871 = vmatpush1.bf16.msra.mxu0 0
        %1872 = vmatprep.subr.bf16.mxu0 0
        %1873 = vmatpush1.bf16.msra.mxu0 0
        %1874 = vmatprep.subr.bf16.mxu0 0
        %1875 = vmatpush1.bf16.msra.mxu0 0
        %1876 = vmatprep.subr.bf16.mxu0 0
        %1877 = vmatpush1.bf16.msra.mxu0 0
        %1878 = vmatprep.subr.bf16.mxu0 0
        %1879 = vmatpush1.bf16.msra.mxu0 0
        %1880 = vmatprep.subr.bf16.mxu0 0
        %1881 = vmatpush1.bf16.msra.mxu0 0
        %1882 = vmatprep.subr.bf16.mxu0 0
        %1883 = vmatpush1.bf16.msra.mxu0 %v1866
        %1884 = vmatprep.subr.bf16.mxu0 0
        %1885 = vmatpush2.bf16.msra.mxu0 0
        %1886 = vmatprep.subr.bf16.mxu0 0
        %1887 = vmatpush2.bf16.msra.mxu0 0
        %1888 = vmatprep.subr.bf16.mxu0 0
        %1889 = vmatpush2.bf16.msra.mxu0 0
        %1890 = vmatprep.subr.bf16.mxu0 0
        %1891 = vmatpush2.bf16.msra.mxu0 0
        %1892 = vmatprep.subr.bf16.mxu0 0
        %1893 = vmatpush2.bf16.msra.mxu0 0
        %1894 = vmatprep.subr.bf16.mxu0 0
        %1895 = vmatpush2.bf16.msra.mxu0 0
        %1896 = vmatprep.subr.bf16.mxu0 0
        %1897 = vmatpush2.bf16.msra.mxu0 0
        %1898 = vmatprep.subr.bf16.mxu0 0
        %1899 = vmatpush2.bf16.msra.mxu0 0
        %1900 = vmatprep.mubr.bf16.mxu0 0
        %1901 = vmatmul.mubr.bf16.gmra.mxu0 %v1863
        %v1902 = vpop.f32.mrf.mxu0
        %v1903 = vadd.f32 0.0, %v1902
        %v1904 = vpop.f32.mrf.mxu0
        %v1905 = vpop.f32.mrf.mxu0
        %v1906 = vpop.f32.mrf.mxu0
        %1907 = vdwg.mxu0
        %s1908 = scalar_lea.vmem %s487, 48
        %v1909 = vld [vmem:[%s1908] sm:$0xf]
        %v1910 = vld [vmem:[%s1908 + $0x4] sm:$0xf]
        %v1911 = vld [vmem:[%s1908 + $0x8] sm:$0xf]
        %v1912 = vld [vmem:[%s1908 + $0xc] sm:$0xf]
        %v1913 = vlaneseq
        %v1914 = vshrl.u32 %v1913, 7
        %v1915 = vsub.s32 3, %v1914
        %v1916 = vrot.slane %v659, %v1915
        %v1921 = vunpack.c.l.b16 %v1909
        %v1922 = vunpack.c.l.b16 %v1910
        %v1923 = vunpack.c.l.b16 %v1911
        %v1924 = vunpack.c.l.b16 %v1912
        %v1925 = vpack.c.b16 %v1922, %v1921
        %v1926 = vpack.c.b16 %v1924, %v1923
        %1929 = vmatprep.subr.bf16.mxu0 0
        %1930 = vmatpush1.bf16.msra.mxu0 0
        %1931 = vmatprep.subr.bf16.mxu0 0
        %1932 = vmatpush1.bf16.msra.mxu0 0
        %1933 = vmatprep.subr.bf16.mxu0 0
        %1934 = vmatpush1.bf16.msra.mxu0 0
        %1935 = vmatprep.subr.bf16.mxu0 0
        %1936 = vmatpush1.bf16.msra.mxu0 0
        %1937 = vmatprep.subr.bf16.mxu0 0
        %1938 = vmatpush1.bf16.msra.mxu0 0
        %1939 = vmatprep.subr.bf16.mxu0 0
        %1940 = vmatpush1.bf16.msra.mxu0 0
        %1941 = vmatprep.subr.bf16.mxu0 0
        %1942 = vmatpush1.bf16.msra.mxu0 %v1926
        %1943 = vmatprep.subr.bf16.mxu0 0
        %1944 = vmatpush1.bf16.msra.mxu0 %v1925
        %1945 = vmatprep.subr.bf16.mxu0 0
        %1946 = vmatpush2.bf16.msra.mxu0 0
        %1947 = vmatprep.subr.bf16.mxu0 0
        %1948 = vmatpush2.bf16.msra.mxu0 0
        %1949 = vmatprep.subr.bf16.mxu0 0
        %1950 = vmatpush2.bf16.msra.mxu0 0
        %1951 = vmatprep.subr.bf16.mxu0 0
        %1952 = vmatpush2.bf16.msra.mxu0 0
        %1953 = vmatprep.subr.bf16.mxu0 0
        %1954 = vmatpush2.bf16.msra.mxu0 0
        %1955 = vmatprep.subr.bf16.mxu0 0
        %1956 = vmatpush2.bf16.msra.mxu0 0
        %1957 = vmatprep.subr.bf16.mxu0 0
        %1958 = vmatpush2.bf16.msra.mxu0 0
        %1959 = vmatprep.subr.bf16.mxu0 0
        %1960 = vmatpush2.bf16.msra.mxu0 0
        %1961 = vmatprep.mubr.bf16.mxu0 0
        %1962 = vmatmul.mubr.bf16.gmra.mxu0 %v683
        %v1963 = vpop.f32.mrf.mxu0
        %v1964 = vadd.f32 %v1916, %v1963
        %v1965 = vpop.f32.mrf.mxu0
        %v1966 = vpop.f32.mrf.mxu0
        %v1967 = vadd.f32 %v1916, %v1966
        %v1968 = vpop.f32.mrf.mxu0
        %1969 = vdwg.mxu0
        %s1970 = scalar_lea.vmem %s487, 112
        %v1971 = vld [vmem:[%s1970] sm:$0xf]
        %v1972 = vld [vmem:[%s1970 + $0x4] sm:$0xf]
        %v1973 = vld [vmem:[%s1970 + $0x8] sm:$0xf]
        %v1974 = vld [vmem:[%s1970 + $0xc] sm:$0xf]
        %v1975 = vlaneseq
        %v1976 = vshrl.u32 %v1975, 7
        %v1977 = vsub.s32 7, %v1976
        %v1978 = vrot.slane %v659, %v1977
        %v1983 = vunpack.c.l.b16 %v1971
        %v1984 = vunpack.c.l.b16 %v1972
        %v1985 = vunpack.c.l.b16 %v1973
        %v1986 = vunpack.c.l.b16 %v1974
        %v1987 = vpack.c.b16 %v1984, %v1983
        %v1988 = vpack.c.b16 %v1986, %v1985
        %1991 = vmatprep.subr.bf16.mxu0 0
        %1992 = vmatpush1.bf16.msra.mxu0 0
        %1993 = vmatprep.subr.bf16.mxu0 0
        %1994 = vmatpush1.bf16.msra.mxu0 0
        %1995 = vmatprep.subr.bf16.mxu0 0
        %1996 = vmatpush1.bf16.msra.mxu0 0
        %1997 = vmatprep.subr.bf16.mxu0 0
        %1998 = vmatpush1.bf16.msra.mxu0 0
        %1999 = vmatprep.subr.bf16.mxu0 0
        %2000 = vmatpush1.bf16.msra.mxu0 0
        %2001 = vmatprep.subr.bf16.mxu0 0
        %2002 = vmatpush1.bf16.msra.mxu0 0
        %2003 = vmatprep.subr.bf16.mxu0 0
        %2004 = vmatpush1.bf16.msra.mxu0 %v1988
        %2005 = vmatprep.subr.bf16.mxu0 0
        %2006 = vmatpush1.bf16.msra.mxu0 %v1987
        %2007 = vmatprep.subr.bf16.mxu0 0
        %2008 = vmatpush2.bf16.msra.mxu0 0
        %2009 = vmatprep.subr.bf16.mxu0 0
        %2010 = vmatpush2.bf16.msra.mxu0 0
        %2011 = vmatprep.subr.bf16.mxu0 0
        %2012 = vmatpush2.bf16.msra.mxu0 0
        %2013 = vmatprep.subr.bf16.mxu0 0
        %2014 = vmatpush2.bf16.msra.mxu0 0
        %2015 = vmatprep.subr.bf16.mxu0 0
        %2016 = vmatpush2.bf16.msra.mxu0 0
        %2017 = vmatprep.subr.bf16.mxu0 0
        %2018 = vmatpush2.bf16.msra.mxu0 0
        %2019 = vmatprep.subr.bf16.mxu0 0
        %2020 = vmatpush2.bf16.msra.mxu0 0
        %2021 = vmatprep.subr.bf16.mxu0 0
        %2022 = vmatpush2.bf16.msra.mxu0 0
        %2023 = vmatprep.mubr.bf16.mxu0 0
        %2024 = vmatmul.mubr.bf16.gmra.mxu0 %v683
        %v2025 = vpop.f32.mrf.mxu0
        %v2026 = vadd.f32 %v1978, %v2025
        %v2027 = vpop.f32.mrf.mxu0
        %v2028 = vpop.f32.mrf.mxu0
        %v2029 = vadd.f32 %v1978, %v2028
        %v2030 = vpop.f32.mrf.mxu0
        %2031 = vdwg.mxu0
        %s2032 = scalar_lea.vmem %s487, 176
        %v2033 = vld [vmem:[%s2032] sm:$0xf]
        %v2034 = vld [vmem:[%s2032 + $0x4] sm:$0xf]
        %v2035 = vld [vmem:[%s2032 + $0x8] sm:$0xf]
        %v2036 = vld [vmem:[%s2032 + $0xc] sm:$0xf]
        %v2037 = vlaneseq
        %v2038 = vshrl.u32 %v2037, 7
        %v2039 = vsub.s32 3, %v2038
        %v2040 = vrot.slane %v660, %v2039
        %v2045 = vunpack.c.l.b16 %v2033
        %v2046 = vunpack.c.l.b16 %v2034
        %v2047 = vunpack.c.l.b16 %v2035
        %v2048 = vunpack.c.l.b16 %v2036
        %v2049 = vpack.c.b16 %v2046, %v2045
        %v2050 = vpack.c.b16 %v2048, %v2047
        %2053 = vmatprep.subr.bf16.mxu0 0
        %2054 = vmatpush1.bf16.msra.mxu0 0
        %2055 = vmatprep.subr.bf16.mxu0 0
        %2056 = vmatpush1.bf16.msra.mxu0 0
        %2057 = vmatprep.subr.bf16.mxu0 0
        %2058 = vmatpush1.bf16.msra.mxu0 0
        %2059 = vmatprep.subr.bf16.mxu0 0
        %2060 = vmatpush1.bf16.msra.mxu0 0
        %2061 = vmatprep.subr.bf16.mxu0 0
        %2062 = vmatpush1.bf16.msra.mxu0 0
        %2063 = vmatprep.subr.bf16.mxu0 0
        %2064 = vmatpush1.bf16.msra.mxu0 0
        %2065 = vmatprep.subr.bf16.mxu0 0
        %2066 = vmatpush1.bf16.msra.mxu0 %v2050
        %2067 = vmatprep.subr.bf16.mxu0 0
        %2068 = vmatpush1.bf16.msra.mxu0 %v2049
        %2069 = vmatprep.subr.bf16.mxu0 0
        %2070 = vmatpush2.bf16.msra.mxu0 0
        %2071 = vmatprep.subr.bf16.mxu0 0
        %2072 = vmatpush2.bf16.msra.mxu0 0
        %2073 = vmatprep.subr.bf16.mxu0 0
        %2074 = vmatpush2.bf16.msra.mxu0 0
        %2075 = vmatprep.subr.bf16.mxu0 0
        %2076 = vmatpush2.bf16.msra.mxu0 0
        %2077 = vmatprep.subr.bf16.mxu0 0
        %2078 = vmatpush2.bf16.msra.mxu0 0
        %2079 = vmatprep.subr.bf16.mxu0 0
        %2080 = vmatpush2.bf16.msra.mxu0 0
        %2081 = vmatprep.subr.bf16.mxu0 0
        %2082 = vmatpush2.bf16.msra.mxu0 0
        %2083 = vmatprep.subr.bf16.mxu0 0
        %2084 = vmatpush2.bf16.msra.mxu0 0
        %2085 = vmatprep.mubr.bf16.mxu0 0
        %2086 = vmatmul.mubr.bf16.gmra.mxu0 %v683
        %v2087 = vpop.f32.mrf.mxu0
        %v2088 = vadd.f32 %v2040, %v2087
        %v2089 = vpop.f32.mrf.mxu0
        %v2090 = vpop.f32.mrf.mxu0
        %v2091 = vadd.f32 %v2040, %v2090
        %v2092 = vpop.f32.mrf.mxu0
        %2093 = vdwg.mxu0
        %v2094 = vmul.f32 %v1964, 0.35355338
        %v2095 = vmul.f32 %v1967, 0.35355338
        %v2096 = vpack.c.bf16 %v2095, %v2094
        %v2098 = vunpack.c.l.b16 %v2096
        %v2099 = vunpack.c.h.b16 %v2096
        %v2100 = vpack.c.b16 %v2098, %v2098
        %v2101 = vpack.c.b16 %v2099, %v2099
        %v2102 = vpack.c.bf16 %v2029, %v2026
        %v2104 = vunpack.c.l.b16 %v2102
        %v2105 = vunpack.c.h.b16 %v2102
        %v2106 = vpack.c.b16 %v2104, %v2104
        %v2107 = vpack.c.b16 %v2105, %v2105
        %v2108 = vpack.c.bf16 %v2091, %v2088
        %v2110 = vunpack.c.l.b16 %v2108
        %v2111 = vunpack.c.h.b16 %v2108
        %v2112 = vpack.c.b16 %v2110, %v2110
        %v2113 = vpack.c.b16 %v2111, %v2111
        %v2115 = vsel %vm870, %v2100, 0
        %v2118 = vsel %vm870, %v2106, 0
        %2120 = vmatprep.subr.bf16.mxu0 0
        %2121 = vmatpush1.bf16.xpose.msra.mxu0 0
        %2122 = vmatprep.subr.bf16.mxu0 0
        %2123 = vmatpush1.bf16.xpose.msra.mxu0 0
        %2124 = vmatprep.subr.bf16.mxu0 0
        %2125 = vmatpush1.bf16.xpose.msra.mxu0 0
        %2126 = vmatprep.subr.bf16.mxu0 0
        %2127 = vmatpush1.bf16.xpose.msra.mxu0 0
        %2128 = vmatprep.subr.bf16.mxu0 0
        %2129 = vmatpush1.bf16.xpose.msra.mxu0 0
        %2130 = vmatprep.subr.bf16.mxu0 0
        %2131 = vmatpush1.bf16.xpose.msra.mxu0 0
        %2132 = vmatprep.subr.bf16.mxu0 0
        %2133 = vmatpush1.bf16.xpose.msra.mxu0 0
        %2134 = vmatprep.subr.bf16.mxu0 0
        %2135 = vmatpush1.bf16.xpose.msra.mxu0 %v2118
        %2136 = vmatprep.subr.bf16.mxu0 0
        %2137 = vmatpush2.bf16.xpose.msra.mxu0 0
        %2138 = vmatprep.subr.bf16.mxu0 0
        %2139 = vmatpush2.bf16.xpose.msra.mxu0 0
        %2140 = vmatprep.subr.bf16.mxu0 0
        %2141 = vmatpush2.bf16.xpose.msra.mxu0 0
        %2142 = vmatprep.subr.bf16.mxu0 0
        %2143 = vmatpush2.bf16.xpose.msra.mxu0 0
        %2144 = vmatprep.subr.bf16.mxu0 0
        %2145 = vmatpush2.bf16.xpose.msra.mxu0 0
        %2146 = vmatprep.subr.bf16.mxu0 0
        %2147 = vmatpush2.bf16.xpose.msra.mxu0 0
        %2148 = vmatprep.subr.bf16.mxu0 0
        %2149 = vmatpush2.bf16.xpose.msra.mxu0 0
        %2150 = vmatprep.subr.bf16.mxu0 0
        %2151 = vmatpush2.bf16.xpose.msra.mxu0 0
        %2152 = vmatprep.mubr.bf16.mxu0 0
        %2153 = vmatmul.mubr.bf16.gmra.mxu0 %v2115
        %v2154 = vpop.f32.mrf.mxu0
        %v2155 = vadd.f32 0.0, %v2154
        %v2156 = vpop.f32.mrf.mxu0
        %v2157 = vpop.f32.mrf.mxu0
        %v2158 = vpop.f32.mrf.mxu0
        %2159 = vdwg.mxu0
        %v2161 = vsel %vm870, %v2101, 0
        %v2164 = vsel %vm870, %v2107, 0
        %2166 = vmatprep.subr.bf16.mxu0 0
        %2167 = vmatpush1.bf16.xpose.msra.mxu0 0
        %2168 = vmatprep.subr.bf16.mxu0 0
        %2169 = vmatpush1.bf16.xpose.msra.mxu0 0
        %2170 = vmatprep.subr.bf16.mxu0 0
        %2171 = vmatpush1.bf16.xpose.msra.mxu0 0
        %2172 = vmatprep.subr.bf16.mxu0 0
        %2173 = vmatpush1.bf16.xpose.msra.mxu0 0
        %2174 = vmatprep.subr.bf16.mxu0 0
        %2175 = vmatpush1.bf16.xpose.msra.mxu0 0
        %2176 = vmatprep.subr.bf16.mxu0 0
        %2177 = vmatpush1.bf16.xpose.msra.mxu0 0
        %2178 = vmatprep.subr.bf16.mxu0 0
        %2179 = vmatpush1.bf16.xpose.msra.mxu0 0
        %2180 = vmatprep.subr.bf16.mxu0 0
        %2181 = vmatpush1.bf16.xpose.msra.mxu0 %v2164
        %2182 = vmatprep.subr.bf16.mxu0 0
        %2183 = vmatpush2.bf16.xpose.msra.mxu0 0
        %2184 = vmatprep.subr.bf16.mxu0 0
        %2185 = vmatpush2.bf16.xpose.msra.mxu0 0
        %2186 = vmatprep.subr.bf16.mxu0 0
        %2187 = vmatpush2.bf16.xpose.msra.mxu0 0
        %2188 = vmatprep.subr.bf16.mxu0 0
        %2189 = vmatpush2.bf16.xpose.msra.mxu0 0
        %2190 = vmatprep.subr.bf16.mxu0 0
        %2191 = vmatpush2.bf16.xpose.msra.mxu0 0
        %2192 = vmatprep.subr.bf16.mxu0 0
        %2193 = vmatpush2.bf16.xpose.msra.mxu0 0
        %2194 = vmatprep.subr.bf16.mxu0 0
        %2195 = vmatpush2.bf16.xpose.msra.mxu0 0
        %2196 = vmatprep.subr.bf16.mxu0 0
        %2197 = vmatpush2.bf16.xpose.msra.mxu0 0
        %2198 = vmatprep.mubr.bf16.mxu0 0
        %2199 = vmatmul.mubr.bf16.gmra.mxu0 %v2161
        %v2200 = vpop.f32.mrf.mxu0
        %v2201 = vadd.f32 0.0, %v2200
        %v2202 = vpop.f32.mrf.mxu0
        %v2203 = vpop.f32.mrf.mxu0
        %v2204 = vpop.f32.mrf.mxu0
        %2205 = vdwg.mxu0
        %v2206 = vsel %vm870, %v2155, -inf
        %2207 = vmax.xlane.f32.xlu0 %v2206
        %v2208 = vpop.xlane.xlu0 %2207
        %v2209 = vsel %vm870, %v2201, -inf
        %2210 = vmax.xlane.f32.xlu0 %v2209
        %v2211 = vpop.xlane.xlu0 %2210
        %v2212 = vsub.f32 %v2155, %v2208
        %v2213 = vsub.f32 %v2201, %v2211
        %v2214 = vmul.f32 %v2212, 1.442695
        %v2215 = vpow.pop %v2214
        %v2216 = vmul.f32 %v2213, 1.442695
        %v2217 = vpow.pop %v2216
        %v2218 = vsel %vm870, %v2215, 0.0
        %2219 = vadd.xlane.f32.xlu0 %v2218
        %v2220 = vpop.xlane.xlu0 %2219
        %v2221 = vsel %vm870, %v2217, 0.0
        %2222 = vadd.xlane.f32.xlu0 %v2221
        %v2223 = vpop.xlane.xlu0 %2222
        %v2224 = vrcp.pop %v2220
        %v2225 = vrcp.pop %v2223
        %v2226 = vmul.f32 %v2215, %v2224
        %v2227 = vmul.f32 %v2217, %v2225
        %v2228 = vpack.c.bf16 %v2226, %v2226
        %v2229 = vpack.c.bf16 %v2227, %v2227
        %v2231 = vsel %vm870, %v2228, 0
        %v2234 = vsel %vm990, %v2112, 0
        %2236 = vmatprep.subr.bf16.mxu0 0
        %2237 = vmatpush1.bf16.msra.mxu0 0
        %2238 = vmatprep.subr.bf16.mxu0 0
        %2239 = vmatpush1.bf16.msra.mxu0 0
        %2240 = vmatprep.subr.bf16.mxu0 0
        %2241 = vmatpush1.bf16.msra.mxu0 0
        %2242 = vmatprep.subr.bf16.mxu0 0
        %2243 = vmatpush1.bf16.msra.mxu0 0
        %2244 = vmatprep.subr.bf16.mxu0 0
        %2245 = vmatpush1.bf16.msra.mxu0 0
        %2246 = vmatprep.subr.bf16.mxu0 0
        %2247 = vmatpush1.bf16.msra.mxu0 0
        %2248 = vmatprep.subr.bf16.mxu0 0
        %2249 = vmatpush1.bf16.msra.mxu0 0
        %2250 = vmatprep.subr.bf16.mxu0 0
        %2251 = vmatpush1.bf16.msra.mxu0 %v2234
        %2252 = vmatprep.subr.bf16.mxu0 0
        %2253 = vmatpush2.bf16.msra.mxu0 0
        %2254 = vmatprep.subr.bf16.mxu0 0
        %2255 = vmatpush2.bf16.msra.mxu0 0
        %2256 = vmatprep.subr.bf16.mxu0 0
        %2257 = vmatpush2.bf16.msra.mxu0 0
        %2258 = vmatprep.subr.bf16.mxu0 0
        %2259 = vmatpush2.bf16.msra.mxu0 0
        %2260 = vmatprep.subr.bf16.mxu0 0
        %2261 = vmatpush2.bf16.msra.mxu0 0
        %2262 = vmatprep.subr.bf16.mxu0 0
        %2263 = vmatpush2.bf16.msra.mxu0 0
        %2264 = vmatprep.subr.bf16.mxu0 0
        %2265 = vmatpush2.bf16.msra.mxu0 0
        %2266 = vmatprep.subr.bf16.mxu0 0
        %2267 = vmatpush2.bf16.msra.mxu0 0
        %2268 = vmatprep.mubr.bf16.mxu0 0
        %2269 = vmatmul.mubr.bf16.gmra.mxu0 %v2231
        %v2270 = vpop.f32.mrf.mxu0
        %v2271 = vadd.f32 0.0, %v2270
        %v2272 = vpop.f32.mrf.mxu0
        %v2273 = vpop.f32.mrf.mxu0
        %v2274 = vpop.f32.mrf.mxu0
        %2275 = vdwg.mxu0
        %v2277 = vsel %vm870, %v2229, 0
        %v2280 = vsel %vm990, %v2113, 0
        %2282 = vmatprep.subr.bf16.mxu0 0
        %2283 = vmatpush1.bf16.msra.mxu0 0
        %2284 = vmatprep.subr.bf16.mxu0 0
        %2285 = vmatpush1.bf16.msra.mxu0 0
        %2286 = vmatprep.subr.bf16.mxu0 0
        %2287 = vmatpush1.bf16.msra.mxu0 0
        %2288 = vmatprep.subr.bf16.mxu0 0
        %2289 = vmatpush1.bf16.msra.mxu0 0
        %2290 = vmatprep.subr.bf16.mxu0 0
        %2291 = vmatpush1.bf16.msra.mxu0 0
        %2292 = vmatprep.subr.bf16.mxu0 0
        %2293 = vmatpush1.bf16.msra.mxu0 0
        %2294 = vmatprep.subr.bf16.mxu0 0
        %2295 = vmatpush1.bf16.msra.mxu0 0
        %2296 = vmatprep.subr.bf16.mxu0 0
        %2297 = vmatpush1.bf16.msra.mxu0 %v2280
        %2298 = vmatprep.subr.bf16.mxu0 0
        %2299 = vmatpush2.bf16.msra.mxu0 0
        %2300 = vmatprep.subr.bf16.mxu0 0
        %2301 = vmatpush2.bf16.msra.mxu0 0
        %2302 = vmatprep.subr.bf16.mxu0 0
        %2303 = vmatpush2.bf16.msra.mxu0 0
        %2304 = vmatprep.subr.bf16.mxu0 0
        %2305 = vmatpush2.bf16.msra.mxu0 0
        %2306 = vmatprep.subr.bf16.mxu0 0
        %2307 = vmatpush2.bf16.msra.mxu0 0
        %2308 = vmatprep.subr.bf16.mxu0 0
        %2309 = vmatpush2.bf16.msra.mxu0 0
        %2310 = vmatprep.subr.bf16.mxu0 0
        %2311 = vmatpush2.bf16.msra.mxu0 0
        %2312 = vmatprep.subr.bf16.mxu0 0
        %2313 = vmatpush2.bf16.msra.mxu0 0
        %2314 = vmatprep.mubr.bf16.mxu0 0
        %2315 = vmatmul.mubr.bf16.gmra.mxu0 %v2277
        %v2316 = vpop.f32.mrf.mxu0
        %v2317 = vadd.f32 0.0, %v2316
        %v2318 = vpop.f32.mrf.mxu0
        %v2319 = vpop.f32.mrf.mxu0
        %v2320 = vpop.f32.mrf.mxu0
        %2321 = vdwg.mxu0
        %2324 = vrot.lane.b32.xlu0 %v1443, 8
        %v2325 = vpop.permute.xlu0 %2324
        %2326 = vrot.lane.b32.xlu0 %v1489, 8
        %v2327 = vpop.permute.xlu0 %2326
        %2332 = vrot.lane.b32.xlu0 %v1857, 16
        %v2333 = vpop.permute.xlu0 %2332
        %2334 = vrot.lane.b32.xlu0 %v1903, 16
        %v2335 = vpop.permute.xlu0 %2334
        %2340 = vrot.lane.b32.xlu0 %v2271, 24
        %v2341 = vpop.permute.xlu0 %2340
        %2342 = vrot.lane.b32.xlu0 %v2317, 24
        %v2343 = vpop.permute.xlu0 %2342
        %v2346 = vsel %vm870, %v1029, %v2325
        %v2347 = vsel %vm870, %v1075, %v2327
        %vm2348 = vcmask 130048
        %v2349 = vsel %vm2348, %v2346, %v2333
        %v2350 = vsel %vm2348, %v2347, %v2335
        %vm2351 = vcmask 195584
        %v2352 = vsel %vm2351, %v2349, %v2341
        %v2353 = vsel %vm2351, %v2350, %v2343
        %v2354 = vpack.c.bf16 %v2353, %v2352
        %v2355 = vld [vmem:[%s511] sm:$0x7f]
        %v2356 = vld [vmem:[%s497] sm:$0xf]
        %v2357 = vld [vmem:[%s497 + $0x4] sm:$0xf]
        %v2358 = vld [vmem:[%s497 + $0x8] sm:$0xf]
        %v2359 = vld [vmem:[%s497 + $0xc] sm:$0xf]
        %v2360 = vlaneseq
        %v2361 = vshrl.u32 %v2360, 7
        %v2362 = vsub.s32 1, %v2361
        %v2363 = vrot.slane %v2355, %v2362
        %v2368 = vunpack.c.l.b16 %v2356
        %v2369 = vunpack.c.l.b16 %v2357
        %v2370 = vunpack.c.l.b16 %v2358
        %v2371 = vunpack.c.l.b16 %v2359
        %v2372 = vpack.c.b16 %v2369, %v2368
        %v2373 = vpack.c.b16 %v2371, %v2370
        %v2377 = vsel %vm681, %v2354, 0
        %2379 = vmatprep.subr.bf16.mxu0 0
        %2380 = vmatpush1.bf16.msra.mxu0 0
        %2381 = vmatprep.subr.bf16.mxu0 0
        %2382 = vmatpush1.bf16.msra.mxu0 0
        %2383 = vmatprep.subr.bf16.mxu0 0
        %2384 = vmatpush1.bf16.msra.mxu0 0
        %2385 = vmatprep.subr.bf16.mxu0 0
        %2386 = vmatpush1.bf16.msra.mxu0 0
        %2387 = vmatprep.subr.bf16.mxu0 0
        %2388 = vmatpush1.bf16.msra.mxu0 0
        %2389 = vmatprep.subr.bf16.mxu0 0
        %2390 = vmatpush1.bf16.msra.mxu0 0
        %2391 = vmatprep.subr.bf16.mxu0 0
        %2392 = vmatpush1.bf16.msra.mxu0 %v2373
        %2393 = vmatprep.subr.bf16.mxu0 0
        %2394 = vmatpush1.bf16.msra.mxu0 %v2372
        %2395 = vmatprep.subr.bf16.mxu0 0
        %2396 = vmatpush2.bf16.msra.mxu0 0
        %2397 = vmatprep.subr.bf16.mxu0 0
        %2398 = vmatpush2.bf16.msra.mxu0 0
        %2399 = vmatprep.subr.bf16.mxu0 0
        %2400 = vmatpush2.bf16.msra.mxu0 0
        %2401 = vmatprep.subr.bf16.mxu0 0
        %2402 = vmatpush2.bf16.msra.mxu0 0
        %2403 = vmatprep.subr.bf16.mxu0 0
        %2404 = vmatpush2.bf16.msra.mxu0 0
        %2405 = vmatprep.subr.bf16.mxu0 0
        %2406 = vmatpush2.bf16.msra.mxu0 0
        %2407 = vmatprep.subr.bf16.mxu0 0
        %2408 = vmatpush2.bf16.msra.mxu0 0
        %2409 = vmatprep.subr.bf16.mxu0 0
        %2410 = vmatpush2.bf16.msra.mxu0 0
        %2411 = vmatprep.mubr.bf16.mxu0 0
        %2412 = vmatmul.mubr.bf16.gmra.mxu0 %v2377
        %v2413 = vpop.f32.mrf.mxu0
        %v2414 = vadd.f32 %v2363, %v2413
        %v2415 = vpop.f32.mrf.mxu0
        %v2416 = vpop.f32.mrf.mxu0
        %v2417 = vadd.f32 %v2363, %v2416
        %v2418 = vpop.f32.mrf.mxu0
        %2419 = vdwg.mxu0
        %v2420 = vadd.f32 %v656, %v2414
        %v2421 = vadd.f32 %v657, %v2417
        %v2422 = vsel %vm681, %v2420, 0.0
        %2423 = vadd.xlane.f32.xlu0 %v2422
        %v2424 = vpop.xlane.xlu0 %2423
        %v2425 = vsel %vm681, %v2421, 0.0
        %2426 = vadd.xlane.f32.xlu0 %v2425
        %v2427 = vpop.xlane.xlu0 %2426
        %v2428 = vrcp.pop 32.0
        %v2429 = vmul.f32 %v2424, %v2428
        %v2430 = vmul.f32 %v2427, %v2428
        %v2431 = vsub.f32 %v2420, %v2429
        %v2432 = vsub.f32 %v2421, %v2430
        %v2433 = vmul.f32 %v2431, %v2431
        %v2434 = vmul.f32 %v2432, %v2432
        %v2435 = vsel %vm681, %v2433, 0.0
        %2436 = vadd.xlane.f32.xlu0 %v2435
        %v2437 = vpop.xlane.xlu0 %2436
        %v2438 = vsel %vm681, %v2434, 0.0
        %2439 = vadd.xlane.f32.xlu0 %v2438
        %v2440 = vpop.xlane.xlu0 %2439
        %v2441 = vmul.f32 %v2437, %v2428
        %v2442 = vmul.f32 %v2440, %v2428
        %v2443 = vadd.f32 %v2441, 1e-05
        %v2444 = vadd.f32 %v2442, 1e-05
        %v2445 = vrsqrt.pop %v2443
        %v2446 = vrsqrt.pop %v2444
        %v2447 = vmul.f32 %v2431, %v2445
        %v2448 = vmul.f32 %v2432, %v2446
        %v2449 = vlaneseq
        %v2450 = vshrl.u32 %v2449, 7
        %v2451 = vsub.s32 2, %v2450
        %v2452 = vrot.slane %v2355, %v2451
        %v2453 = vmul.f32 %v2447, %v2452
        %v2454 = vmul.f32 %v2448, %v2452
        %v2455 = vlaneseq
        %v2456 = vshrl.u32 %v2455, 7
        %v2457 = vsub.s32 3, %v2456
        %v2458 = vrot.slane %v2355, %v2457
        %v2459 = vadd.f32 %v2453, %v2458
        %v2460 = vadd.f32 %v2454, %v2458
        %v2461 = vpack.c.bf16 %v2460, %v2459
        %v2462 = vld [vmem:[%s502] sm:$0xf]
        %v2463 = vld [vmem:[%s502 + $0x4] sm:$0xf]
        %v2464 = vld [vmem:[%s502 + $0x8] sm:$0xf]
        %v2465 = vld [vmem:[%s502 + $0xc] sm:$0xf]
        %v2466 = vlaneseq
        %v2467 = vshrl.u32 %v2466, 7
        %v2468 = vsub.s32 0, %v2467
        %v2469 = vrot.slane %v2355, %v2468
        %v2474 = vunpack.c.l.b16 %v2462
        %v2475 = vunpack.c.l.b16 %v2463
        %v2476 = vunpack.c.l.b16 %v2464
        %v2477 = vunpack.c.l.b16 %v2465
        %v2478 = vpack.c.b16 %v2475, %v2474
        %v2479 = vpack.c.b16 %v2477, %v2476
        %v2483 = vsel %vm681, %v2461, 0
        %2485 = vmatprep.subr.bf16.mxu0 0
        %2486 = vmatpush1.bf16.msra.mxu0 0
        %2487 = vmatprep.subr.bf16.mxu0 0
        %2488 = vmatpush1.bf16.msra.mxu0 0
        %2489 = vmatprep.subr.bf16.mxu0 0
        %2490 = vmatpush1.bf16.msra.mxu0 0
        %2491 = vmatprep.subr.bf16.mxu0 0
        %2492 = vmatpush1.bf16.msra.mxu0 0
        %2493 = vmatprep.subr.bf16.mxu0 0
        %2494 = vmatpush1.bf16.msra.mxu0 0
        %2495 = vmatprep.subr.bf16.mxu0 0
        %2496 = vmatpush1.bf16.msra.mxu0 0
        %2497 = vmatprep.subr.bf16.mxu0 0
        %2498 = vmatpush1.bf16.msra.mxu0 %v2479
        %2499 = vmatprep.subr.bf16.mxu0 0
        %2500 = vmatpush1.bf16.msra.mxu0 %v2478
        %2501 = vmatprep.subr.bf16.mxu0 0
        %2502 = vmatpush2.bf16.msra.mxu0 0
        %2503 = vmatprep.subr.bf16.mxu0 0
        %2504 = vmatpush2.bf16.msra.mxu0 0
        %2505 = vmatprep.subr.bf16.mxu0 0
        %2506 = vmatpush2.bf16.msra.mxu0 0
        %2507 = vmatprep.subr.bf16.mxu0 0
        %2508 = vmatpush2.bf16.msra.mxu0 0
        %2509 = vmatprep.subr.bf16.mxu0 0
        %2510 = vmatpush2.bf16.msra.mxu0 0
        %2511 = vmatprep.subr.bf16.mxu0 0
        %2512 = vmatpush2.bf16.msra.mxu0 0
        %2513 = vmatprep.subr.bf16.mxu0 0
        %2514 = vmatpush2.bf16.msra.mxu0 0
        %2515 = vmatprep.subr.bf16.mxu0 0
        %2516 = vmatpush2.bf16.msra.mxu0 0
        %2517 = vmatprep.mubr.bf16.mxu0 0
        %2518 = vmatmul.mubr.bf16.gmra.mxu0 %v2483
        %v2519 = vpop.f32.mrf.mxu0
        %v2520 = vadd.f32 %v2469, %v2519
        %v2521 = vpop.f32.mrf.mxu0
        %v2522 = vpop.f32.mrf.mxu0
        %v2523 = vadd.f32 %v2469, %v2522
        %v2524 = vpop.f32.mrf.mxu0
        %2525 = vdwg.mxu0
        %v2526 = vmul.f32 %v2520, 0.5
        %v2527 = vmul.f32 %v2523, 0.5
        %v2528 = vmul.f32 %v2520, 0.70710677
        %v2529 = vmul.f32 %v2523, 0.70710677
        %v2530 = verf.f32.pop %v2528
        %v2531 = verf.f32.pop %v2529
        %v2532 = vadd.f32 %v2530, 1.0
        %v2533 = vadd.f32 %v2531, 1.0
        %v2534 = vmul.f32 %v2526, %v2532
        %v2535 = vmul.f32 %v2527, %v2533
        %v2536 = vpack.c.bf16 %v2535, %v2534
        %v2537 = vld [vmem:[%s507] sm:$0xf]
        %v2538 = vld [vmem:[%s507 + $0x4] sm:$0xf]
        %v2539 = vld [vmem:[%s507 + $0x8] sm:$0xf]
        %v2540 = vld [vmem:[%s507 + $0xc] sm:$0xf]
        %v2541 = vld [vmem:[%s507 + $0x10] sm:$0xf]
        %v2542 = vld [vmem:[%s507 + $0x14] sm:$0xf]
        %v2543 = vld [vmem:[%s507 + $0x18] sm:$0xf]
        %v2544 = vld [vmem:[%s507 + $0x1c] sm:$0xf]
        %v2545 = vld [vmem:[%s507 + $0x20] sm:$0xf]
        %v2546 = vld [vmem:[%s507 + $0x24] sm:$0xf]
        %v2547 = vld [vmem:[%s507 + $0x28] sm:$0xf]
        %v2548 = vld [vmem:[%s507 + $0x2c] sm:$0xf]
        %v2549 = vld [vmem:[%s507 + $0x30] sm:$0xf]
        %v2550 = vld [vmem:[%s507 + $0x34] sm:$0xf]
        %v2551 = vld [vmem:[%s507 + $0x38] sm:$0xf]
        %v2552 = vld [vmem:[%s507 + $0x3c] sm:$0xf]
        %v2553 = vlaneseq
        %v2554 = vshrl.u32 %v2553, 7
        %v2555 = vsub.s32 4, %v2554
        %v2556 = vrot.slane %v2355, %v2555
        %v2573 = vunpack.c.l.b16 %v2537
        %v2574 = vunpack.c.l.b16 %v2538
        %v2575 = vunpack.c.l.b16 %v2539
        %v2576 = vunpack.c.l.b16 %v2540
        %v2577 = vunpack.c.l.b16 %v2541
        %v2578 = vunpack.c.l.b16 %v2542
        %v2579 = vunpack.c.l.b16 %v2543
        %v2580 = vunpack.c.l.b16 %v2544
        %v2581 = vunpack.c.l.b16 %v2545
        %v2582 = vunpack.c.l.b16 %v2546
        %v2583 = vunpack.c.l.b16 %v2547
        %v2584 = vunpack.c.l.b16 %v2548
        %v2585 = vunpack.c.l.b16 %v2549
        %v2586 = vunpack.c.l.b16 %v2550
        %v2587 = vunpack.c.l.b16 %v2551
        %v2588 = vunpack.c.l.b16 %v2552
        %v2589 = vpack.c.b16 %v2574, %v2573
        %v2590 = vpack.c.b16 %v2576, %v2575
        %v2591 = vpack.c.b16 %v2578, %v2577
        %v2592 = vpack.c.b16 %v2580, %v2579
        %v2593 = vpack.c.b16 %v2582, %v2581
        %v2594 = vpack.c.b16 %v2584, %v2583
        %v2595 = vpack.c.b16 %v2586, %v2585
        %v2596 = vpack.c.b16 %v2588, %v2587
        %2605 = vmatprep.subr.bf16.mxu0 0
        %2606 = vmatpush1.bf16.msra.mxu0 %v2596
        %2607 = vmatprep.subr.bf16.mxu0 0
        %2608 = vmatpush1.bf16.msra.mxu0 %v2595
        %2609 = vmatprep.subr.bf16.mxu0 0
        %2610 = vmatpush1.bf16.msra.mxu0 %v2594
        %2611 = vmatprep.subr.bf16.mxu0 0
        %2612 = vmatpush1.bf16.msra.mxu0 %v2593
        %2613 = vmatprep.subr.bf16.mxu0 0
        %2614 = vmatpush1.bf16.msra.mxu0 %v2592
        %2615 = vmatprep.subr.bf16.mxu0 0
        %2616 = vmatpush1.bf16.msra.mxu0 %v2591
        %2617 = vmatprep.subr.bf16.mxu0 0
        %2618 = vmatpush1.bf16.msra.mxu0 %v2590
        %2619 = vmatprep.subr.bf16.mxu0 0
        %2620 = vmatpush1.bf16.msra.mxu0 %v2589
        %2621 = vmatprep.subr.bf16.mxu0 0
        %2622 = vmatpush2.bf16.msra.mxu0 0
        %2623 = vmatprep.subr.bf16.mxu0 0
        %2624 = vmatpush2.bf16.msra.mxu0 0
        %2625 = vmatprep.subr.bf16.mxu0 0
        %2626 = vmatpush2.bf16.msra.mxu0 0
        %2627 = vmatprep.subr.bf16.mxu0 0
        %2628 = vmatpush2.bf16.msra.mxu0 0
        %2629 = vmatprep.subr.bf16.mxu0 0
        %2630 = vmatpush2.bf16.msra.mxu0 0
        %2631 = vmatprep.subr.bf16.mxu0 0
        %2632 = vmatpush2.bf16.msra.mxu0 0
        %2633 = vmatprep.subr.bf16.mxu0 0
        %2634 = vmatpush2.bf16.msra.mxu0 0
        %2635 = vmatprep.subr.bf16.mxu0 0
        %2636 = vmatpush2.bf16.msra.mxu0 0
        %2637 = vmatprep.mubr.bf16.mxu0 0
        %2638 = vmatmul.mubr.bf16.gmra.mxu0 %v2536
        %v2639 = vpop.f32.mrf.mxu0
        %v2640 = vadd.f32 %v2556, %v2639
        %v2641 = vpop.f32.mrf.mxu0
        %v2642 = vpop.f32.mrf.mxu0
        %v2643 = vadd.f32 %v2556, %v2642
        %v2644 = vpop.f32.mrf.mxu0
        %2645 = vdwg.mxu0
        %v2646 = vadd.f32 %v2459, %v2640
        %v2647 = vadd.f32 %v2460, %v2643
        %v2648 = vsel %vm681, %v2646, 0.0
        %2649 = vadd.xlane.f32.xlu0 %v2648
        %v2650 = vpop.xlane.xlu0 %2649
        %v2651 = vsel %vm681, %v2647, 0.0
        %2652 = vadd.xlane.f32.xlu0 %v2651
        %v2653 = vpop.xlane.xlu0 %2652
        %v2654 = vmul.f32 %v2650, %v2428
        %v2655 = vmul.f32 %v2653, %v2428
        %v2656 = vsub.f32 %v2646, %v2654
        %v2657 = vsub.f32 %v2647, %v2655
        %v2658 = vmul.f32 %v2656, %v2656
        %v2659 = vmul.f32 %v2657, %v2657
        %v2660 = vsel %vm681, %v2658, 0.0
        %2661 = vadd.xlane.f32.xlu0 %v2660
        %v2662 = vpop.xlane.xlu0 %2661
        %v2663 = vsel %vm681, %v2659, 0.0
        %2664 = vadd.xlane.f32.xlu0 %v2663
        %v2665 = vpop.xlane.xlu0 %2664
        %v2666 = vmul.f32 %v2662, %v2428
        %v2667 = vmul.f32 %v2665, %v2428
        %v2668 = vadd.f32 %v2666, 1e-05
        %v2669 = vadd.f32 %v2667, 1e-05
        %v2670 = vrsqrt.pop %v2668
        %v2671 = vrsqrt.pop %v2669
        %v2672 = vmul.f32 %v2656, %v2670
        %v2673 = vmul.f32 %v2657, %v2671
        %v2674 = vlaneseq
        %v2675 = vshrl.u32 %v2674, 7
        %v2676 = vsub.s32 5, %v2675
        %v2677 = vrot.slane %v2355, %v2676
        %v2678 = vmul.f32 %v2672, %v2677
        %v2679 = vmul.f32 %v2673, %v2677
        %v2680 = vlaneseq
        %v2681 = vshrl.u32 %v2680, 7
        %v2682 = vsub.s32 6, %v2681
        %v2683 = vrot.slane %v2355, %v2682
        %v2684 = vadd.f32 %v2678, %v2683
        %v2685 = vadd.f32 %v2679, %v2683
        %2686 = vst.msk [vmem:[#allocation2] sm:$0xff] %vm681, %v2684
        %2687 = vst.msk [vmem:[#allocation2 + $0x8] sm:$0xff] %vm681, %v2685
        %p2688 = scmp.eq.s32.totalorder %s28, 1
        // Predicated region
        $region69: #{tpu_custom_call.1} parent=63 // pred_check
          %p2689 = pneg %p2688
        $region70: #{tpu_custom_call.1} parent=63 // pred_check_branch
          %2691 = sbr.rel (%p2689) target = $region72
        $region71: #{tpu_custom_call.1} parent=63 // pred_region
          %v2692 = vld [vmem:[%s10] sm:$0xf]
          %v2693 = vpack.c.bf16 %v2685, %v2684
          %v2694 = vld [vmem:[%s9] sm:$0xf]
          %v2695 = vld [vmem:[%s9 + $0x4] sm:$0xf]
          %v2696 = vld [vmem:[%s9 + $0x8] sm:$0xf]
          %v2697 = vld [vmem:[%s9 + $0xc] sm:$0xf]
          %v2698 = vlaneseq
          %v2699 = vshrl.u32 %v2698, 7
          %v2700 = vsub.s32 0, %v2699
          %v2701 = vrot.slane %v2692, %v2700
          %v2706 = vunpack.c.l.b16 %v2694
          %v2707 = vunpack.c.l.b16 %v2695
          %v2708 = vunpack.c.l.b16 %v2696
          %v2709 = vunpack.c.l.b16 %v2697
          %v2710 = vpack.c.b16 %v2707, %v2706
          %v2711 = vpack.c.b16 %v2709, %v2708
          %v2715 = vsel %vm681, %v2693, 0
          %2717 = vmatprep.subr.bf16.mxu0 0
          %2718 = vmatpush1.bf16.msra.mxu0 0
          %2719 = vmatprep.subr.bf16.mxu0 0
          %2720 = vmatpush1.bf16.msra.mxu0 0
          %2721 = vmatprep.subr.bf16.mxu0 0
          %2722 = vmatpush1.bf16.msra.mxu0 0
          %2723 = vmatprep.subr.bf16.mxu0 0
          %2724 = vmatpush1.bf16.msra.mxu0 0
          %2725 = vmatprep.subr.bf16.mxu0 0
          %2726 = vmatpush1.bf16.msra.mxu0 0
          %2727 = vmatprep.subr.bf16.mxu0 0
          %2728 = vmatpush1.bf16.msra.mxu0 0
          %2729 = vmatprep.subr.bf16.mxu0 0
          %2730 = vmatpush1.bf16.msra.mxu0 %v2711
          %2731 = vmatprep.subr.bf16.mxu0 0
          %2732 = vmatpush1.bf16.msra.mxu0 %v2710
          %2733 = vmatprep.subr.bf16.mxu0 0
          %2734 = vmatpush2.bf16.msra.mxu0 0
          %2735 = vmatprep.subr.bf16.mxu0 0
          %2736 = vmatpush2.bf16.msra.mxu0 0
          %2737 = vmatprep.subr.bf16.mxu0 0
          %2738 = vmatpush2.bf16.msra.mxu0 0
          %2739 = vmatprep.subr.bf16.mxu0 0
          %2740 = vmatpush2.bf16.msra.mxu0 0
          %2741 = vmatprep.subr.bf16.mxu0 0
          %2742 = vmatpush2.bf16.msra.mxu0 0
          %2743 = vmatprep.subr.bf16.mxu0 0
          %2744 = vmatpush2.bf16.msra.mxu0 0
          %2745 = vmatprep.subr.bf16.mxu0 0
          %2746 = vmatpush2.bf16.msra.mxu0 0
          %2747 = vmatprep.subr.bf16.mxu0 0
          %2748 = vmatpush2.bf16.msra.mxu0 0
          %2749 = vmatprep.mubr.bf16.mxu0 0
          %2750 = vmatmul.mubr.bf16.gmra.mxu0 %v2715
          %v2751 = vpop.f32.mrf.mxu0
          %v2752 = vadd.f32 %v2701, %v2751
          %v2753 = vpop.f32.mrf.mxu0
          %v2754 = vpop.f32.mrf.mxu0
          %v2755 = vadd.f32 %v2701, %v2754
          %v2756 = vpop.f32.mrf.mxu0
          %2757 = vdwg.mxu0
          %2758 = vadd.xlane.f32.xlu0 %v2752
          %v2759 = vpop.xlane.xlu0 %2758
          %2760 = vadd.xlane.f32.xlu0 %v2755
          %v2761 = vpop.xlane.xlu0 %2760
          %v2762 = vmul.f32 %v2759, 0.041666668
          %v2763 = vmul.f32 %v2761, 0.041666668
          %v2764 = vsub.f32 %v2752, %v2762
          %v2765 = vsub.f32 %v2755, %v2763
          %v2766 = vlaneseq
          %v2767 = vshrl.u32 %v2766, 7
          %v2768 = vsub.s32 3, %v2767
          %v2769 = vrot.slane %v2692, %v2768
          %v2770 = vmul.f32 %v2764, %v2769
          %v2771 = vmul.f32 %v2765, %v2769
          %v2772 = vmul.f32 %v2770, %v2770
          %v2773 = vmul.f32 %v2771, %v2771
          %2774 = vadd.xlane.f32.xlu0 %v2772
          %v2775 = vpop.xlane.xlu0 %2774
          %2776 = vadd.xlane.f32.xlu0 %v2773
          %v2777 = vpop.xlane.xlu0 %2776
          %v2778 = vmul.f32 %v2775, 0.041666668
          %v2779 = vmul.f32 %v2777, 0.041666668
          %v2780 = vadd.f32 %v2778, 1e-05
          %v2781 = vadd.f32 %v2779, 1e-05
          %v2782 = vrsqrt.pop %v2780
          %v2783 = vrsqrt.pop %v2781
          %v2784 = vmul.f32 %v2770, %v2782
          %v2785 = vmul.f32 %v2771, %v2783
          %v2786 = vlaneseq
          %v2787 = vshrl.u32 %v2786, 7
          %v2788 = vsub.s32 1, %v2787
          %v2789 = vrot.slane %v2692, %v2788
          %v2790 = vmul.f32 %v2784, %v2789
          %v2791 = vmul.f32 %v2785, %v2789
          %v2792 = vlaneseq
          %v2793 = vshrl.u32 %v2792, 7
          %v2794 = vsub.s32 2, %v2793
          %v2795 = vrot.slane %v2692, %v2794
          %v2796 = vadd.f32 %v2790, %v2795
          %v2797 = vadd.f32 %v2791, %v2795
          %2798 = vst [vmem:[#allocation3] sm:$0xff] %v2796
          %2799 = vst [vmem:[#allocation3 + $0x8] sm:$0xff] %v2797
        $region72: #{tpu_custom_call.1} parent=63 // pred_fallthru
          _
        // Predicated region
        $region73: #{tpu_custom_call.1} parent=63 // pred_check
          %p2800 = pneg %p319
        $region74: #{tpu_custom_call.1} parent=63 // pred_check_branch
          %2802 = sbr.rel (%p2800) target = $region76
        $region75: #{tpu_custom_call.1} parent=63 // pred_region
          %s2803 = smul.u32 2, %s27
          %s2805 = ssub.s32 256, 256
          %2806 = vsyncadd [#allocation4], %s2805
          %s2807 = smul.addr %s2803, 128
          %s2808 = scalar_lea.hbm %s11, %s2807
          %s2809 = sshll.u32 [#allocation3], 4
          %s2810 = int_to_ptr.vmem [resolvable:$true] %s2809
          %2815 = dma.vmem_to_hbm [thread:$0]  %s2810, 256, %s2808, [#allocation4], 128, 128, 8
        $region76: #{tpu_custom_call.1} parent=63 // pred_fallthru
          _
        // Predicated region
        $region77: #{tpu_custom_call.1} parent=63 // pred_check
          %p2816 = pneg %p319
        $region78: #{tpu_custom_call.1} parent=63 // pred_check_branch
          %2818 = sbr.rel (%p2816) target = $region80
        $region79: #{tpu_custom_call.1} parent=63 // pred_region
          %2819 = dma.done [#allocation4], 256
        $region80: #{tpu_custom_call.1} parent=63 // pred_fallthru
          _
      $region64: #{tpu_custom_call.1} parent=5 // pred_fallthru
        _
      %p2820 = scmp.le.s32.totalorder 2, %s18
      // Predicated region
      $region81: #{tpu_custom_call.1} parent=5 // pred_check
        %p2821 = pneg %p2820
      $region82: #{tpu_custom_call.1} parent=5 // pred_check_branch
        %2823 = sbr.rel (%p2821) target = $region84
      $region83: #{tpu_custom_call.1} parent=5 // pred_region
        %s2824 = ssub.s32 %s18, 2
      $region84: #{tpu_custom_call.1} parent=5 // pred_fallthru
        _
    $region6: #{tpu_custom_call.1} parent=1 // loop_footer
      %s22 = sadd.s32 1, %s18
    $region7: #{tpu_custom_call.1} parent=1 // loop_footer_branch
      %17 = sbr.rel target = $region3
    $region8: #{tpu_custom_call.1} parent=1 // loop_exit
      _
    %2825 = vsyncpa [#allocation4], 1
    %s2826 = scalar_lea.sflag [#allocation4], 1
    %2827 = vsyncpa %s2826, 1

</llo_original>
